<compile_context>
chip_gen: v6e
topology: v6e:2x2x1
jax: 0.10.0
libtpu: 0.0.40
codegen_flags: <defaults>
</compile_context>

<pallas_src>
import jax
import jax.numpy as jnp
from jax.experimental import pallas as pl
from jax.experimental.pallas import tpu as pltpu

VMEM_LIMIT = 32 * 1024 * 1024  # fits v5e/v6e/v7x scoped VMEM


def _round_up(x, m):
    return ((x + m - 1) // m) * m


def _choose_rows(m, cap=1024):
    """(rows_per_block, padded_rows).  Single block at small m; otherwise an
    even number of blocks (v7x megacore split), sublane-aligned, low padding."""
    if m <= 512:
        mp = _round_up(m, 8)
        return mp, mp
    nb = max(2, 2 * (-(-m // (2 * cap))))      # even block count
    tm = _round_up(-(-m // nb), 16)
    return tm, tm * nb


# ----------------------------- Pallas kernels -----------------------------

def _conv_pool_kernel(x_ref, w_ref, b_ref, o_ref):
    """x_ref: (4, TM, Kp) bf16 patch slabs (one per 2x2 pool-window offset),
    w_ref: (Kp, N) bf16, b_ref: (1, N) f32.  Computes max_q(x_q @ W) + b,
    ReLU, stores bf16 -> conv + bias + ReLU + MaxPool2d(2) fused."""
    w = w_ref[...]
    acc = None
    for q in range(4):                        # 4 MXU pushes; pool = VPU max
        a = jnp.dot(x_ref[q], w, preferred_element_type=jnp.float32)
        acc = a if acc is None else jnp.maximum(acc, a)
    acc = jnp.maximum(acc + b_ref[...], 0.0)  # bias/ReLU commute with the max
    o_ref[...] = acc.astype(o_ref.dtype)


def _fc_fused_kernel(x_ref, w1_ref, b1_ref, w2_ref, b2_ref, o_ref):
    h = jnp.dot(x_ref[...], w1_ref[...], preferred_element_type=jnp.float32)
    h = jnp.maximum(h + b1_ref[...], 0.0)
    o = jnp.dot(h.astype(jnp.bfloat16), w2_ref[...],
                preferred_element_type=jnp.float32)
    o_ref[...] = (o + b2_ref[...]).astype(o_ref.dtype)


# ------------------------------ kernel wrappers ----------------------------

def _im2col_pool4(x):
    """x:(B,H,W,C) -> (4, B*(H//2)*(W//2), 9*C).  Slab q = 2*dh+dw holds the
    3x3 'same' patch of conv-output position (2i+dh, 2j+dw); column order is
    (kh, kw, c), matching the (3,3,Cin,Cout)-reshaped conv weights."""
    B, H, W, C = x.shape
    xp = jnp.pad(x, ((0, 0), (1, 1), (1, 1), (0, 0)))
    cols = [xp[:, kh:kh + H, kw:kw + W, :] for kh in range(3) for kw in range(3)]
    pat = jnp.concatenate(cols, axis=-1)                  # (B, H, W, 9C)
    Hh, Wh = H // 2, W // 2
    pat = pat.reshape(B, Hh, 2, Wh, 2, 9 * C)
    pat = jnp.transpose(pat, (2, 4, 0, 1, 3, 5))          # (2,2,B,Hh,Wh,9C)
    return pat.reshape(4, B * Hh * Wh, 9 * C)


def conv_pool(x_nhwc, wm, b):
    """3x3 'same' conv + bias + ReLU + MaxPool2d(2) on NHWC input.
    wm: pre-padded (Kp, Cout) bf16, b: (1, Cout) f32.
    Returns (B, H//2, W//2, Cout) bfloat16."""
    B, H, W, C = x_nhwc.shape
    Kp, N = wm.shape
    K = 9 * C
    M = B * (H // 2) * (W // 2)
    TM, Mp = _choose_rows(M)

    patches = _im2col_pool4(x_nhwc.astype(jnp.bfloat16))   # bf16 glue traffic
    patches = jnp.pad(patches, ((0, 0), (0, Mp - M), (0, Kp - K)))

    out = pl.pallas_call(
        _conv_pool_kernel,
        out_shape=jax.ShapeDtypeStruct((Mp, N), jnp.bfloat16),
        grid=(Mp // TM,),
        in_specs=[
            pl.BlockSpec((4, TM, Kp), lambda i: (0, i, 0)),
            pl.BlockSpec((Kp, N), lambda i: (0, 0)),        # weight resident
            pl.BlockSpec((1, N), lambda i: (0, 0)),
        ],
        out_specs=pl.BlockSpec((TM, N), lambda i: (i, 0)),
        compiler_params=pltpu.CompilerParams(
            dimension_semantics=("parallel",),
            vmem_limit_bytes=VMEM_LIMIT),
    )(patches, wm, b)
    return out[:M].reshape(B, H // 2, W // 2, N)


def fc_fused(x, w1, b1, w2, b2, num_classes):
    """ReLU(x @ w1 + b1) @ w2 + b2 in a single Pallas kernel.
    w1/w2 are pre-padded bf16; b1/b2 are (1, N) f32."""
    M, K1 = x.shape
    assert K1 == w1.shape[0]
    N1 = w1.shape[1]
    N2p = w2.shape[1]
    TM, Mp = _choose_rows(M)
    xb = jnp.pad(x.astype(jnp.bfloat16), ((0, Mp - M), (0, 0)))

    out = pl.pallas_call(
        _fc_fused_kernel,
        out_shape=jax.ShapeDtypeStruct((Mp, N2p), jnp.float32),
        grid=(Mp // TM,),
        in_specs=[
            pl.BlockSpec((TM, K1), lambda i: (i, 0)),
            pl.BlockSpec((K1, N1), lambda i: (0, 0)),
            pl.BlockSpec((1, N1), lambda i: (0, 0)),
            pl.BlockSpec((N1, N2p), lambda i: (0, 0)),
            pl.BlockSpec((1, N2p), lambda i: (0, 0)),
        ],
        out_specs=pl.BlockSpec((TM, N2p), lambda i: (i, 0)),
        compiler_params=pltpu.CompilerParams(
            dimension_semantics=("parallel",),
            vmem_limit_bytes=VMEM_LIMIT),
    )(xb, w1, b1, w2, b2)
    return out[:M, :num_classes]


# ------------------------- one-time weight re-layout ------------------------

def prepare_params(params):
    """Hoisted out of the per-forward path: pad + bf16-cast all weights into
    matmul-ready form, biases into f32 row vectors."""
    c1, c2 = params["conv1_w"], params["conv2_w"]
    f1, f2 = params["fc1_w"], params["fc2_w"]
    co1, co2 = c1.shape[0], c2.shape[0]
    n_hidden = f1.shape[0]
    n_classes = f2.shape[0]

    def conv_mat(w):                      # (Co,Ci,3,3) -> (round_up(9Ci,16), Co) bf16
        co, ci = w.shape[0], w.shape[1]
        wm = jnp.transpose(w, (2, 3, 1, 0)).reshape(9 * ci, co)
        kp = _round_up(9 * ci, 16)
        return jnp.pad(wm, ((0, kp - 9 * ci), (0, 0))).astype(jnp.bfloat16)

    # fc1 columns permuted from NCHW flatten order (c,h,w) to NHWC (h,w,c).
    fc1_wm = (f1.reshape(n_hidden, co2, 7, 7)
                .transpose(0, 2, 3, 1)
                .reshape(n_hidden, 7 * 7 * co2)).T                  # (3136, 256)
    n2p = _round_up(n_classes, 128)
    return {
        "conv1_wm": conv_mat(c1),
        "conv1_b": params["conv1_b"].reshape(1, co1).astype(jnp.float32),
        "conv2_wm": conv_mat(c2),
        "conv2_b": params["conv2_b"].reshape(1, co2).astype(jnp.float32),
        "fc1_wm": fc1_wm.astype(jnp.bfloat16),
        "fc1_b": params["fc1_b"].reshape(1, n_hidden).astype(jnp.float32),
        "fc2_wm": jnp.pad(f2.T, ((0, 0), (0, n2p - n_classes))).astype(jnp.bfloat16),
        "fc2_b": jnp.pad(params["fc2_b"],
                         (0, n2p - n_classes)).reshape(1, n2p).astype(jnp.float32),
    }


# --------------------------------- forward ---------------------------------

def car_model_forward(x_nchw, mp, num_classes):
    """Equivalent of CarModel.forward.  x_nchw: (B, 1, 28, 28) float32."""
    B = x_nchw.shape[0]
    x = jnp.transpose(x_nchw, (0, 2, 3, 1))                   # (B,28,28,1) NHWC

    a1 = conv_pool(x, mp["conv1_wm"], mp["conv1_b"])          # (B,14,14,32) bf16
    a2 = conv_pool(a1, mp["conv2_wm"], mp["conv2_b"])         # (B, 7, 7,64) bf16

    feat = a2.reshape(B, -1)          # NHWC flatten; fc1_wm rows permuted to match
    return fc_fused(feat, mp["fc1_wm"], mp["fc1_b"],
                    mp["fc2_wm"], mp["fc2_b"], num_classes)   # (B, num_classes)


def init_params(key, num_classes):
    ks = jax.random.split(key, 8)
    scale = 0.05
    return {
        "conv1_w": scale * jax.random.normal(ks[0], (32, 1, 3, 3), jnp.float32),
        "conv1_b": scale * jax.random.normal(ks[1], (32,), jnp.float32),
        "conv2_w": scale * jax.random.normal(ks[2], (64, 32, 3, 3), jnp.float32),
        "conv2_b": scale * jax.random.normal(ks[3], (64,), jnp.float32),
        "fc1_w": scale * jax.random.normal(ks[4], (256, 64 * 7 * 7), jnp.float32),
        "fc1_b": scale * jax.random.normal(ks[5], (256,), jnp.float32),
        "fc2_w": scale * jax.random.normal(ks[6], (num_classes, 256), jnp.float32),
        "fc2_b": scale * jax.random.normal(ks[7], (num_classes,), jnp.float32),
    }


# ------------------------- pure-JAX reference check ------------------------

def reference_forward(x_nchw, params):
    dn = jax.lax.conv_dimension_numbers(x_nchw.shape, params["conv1_w"].shape,
                                        ("NCHW", "OIHW", "NCHW"))
    x = jax.lax.conv_general_dilated(x_nchw, params["conv1_w"], (1, 1),
                                     "SAME", dimension_numbers=dn)
    x = jnp.maximum(x + params["conv1_b"][None, :, None, None], 0.0)
    x = jax.lax.reduce_window(x, -jnp.inf, jax.lax.max,
                              (1, 1, 2, 2), (1, 1, 2, 2), "VALID")
    dn2 = jax.lax.conv_dimension_numbers(x.shape, params["conv2_w"].shape,
                                         ("NCHW", "OIHW", "NCHW"))
    x = jax.lax.conv_general_dilated(x, params["conv2_w"], (1, 1),
                                     "SAME", dimension_numbers=dn2)
    x = jnp.maximum(x + params["conv2_b"][None, :, None, None], 0.0)
    x = jax.lax.reduce_window(x, -jnp.inf, jax.lax.max,
                              (1, 1, 2, 2), (1, 1, 2, 2), "VALID")
    x = x.reshape(x.shape[0], -1)
    x = jnp.maximum(x @ params["fc1_w"].T + params["fc1_b"], 0.0)
    return x @ params["fc2_w"].T + params["fc2_b"]


if __name__ == "__main__":
    B, num_classes = 2, 10
    key = jax.random.PRNGKey(0)
    k_x, k_p = jax.random.split(key)
    x = jax.random.normal(k_x, (B, 1, 28, 28), jnp.float32)
    params = init_params(k_p, num_classes)
    mm_params = prepare_params(params)      # one-time weight pad + bf16 cast

    fwd = jax.jit(car_model_forward, static_argnames="num_classes")
    out = jax.block_until_ready(fwd(x, mm_params, num_classes=num_classes))
    assert out.shape == (B, num_classes), out.shape

    ref = jax.block_until_ready(reference_forward(x, params))
    max_err = float(jnp.max(jnp.abs(out - ref)))
    assert jnp.allclose(out, ref, rtol=3e-2, atol=3e-2), max_err

    print("KERNEL_OK")
</pallas_src>

<mosaic_0001>
module attributes {stable_mosaic.version = 11 : i64} {
  func.func @_conv_pool_kernel(%arg0: i32, %arg1: memref<4x392x16xbf16, #tpu.memory_space<vmem>>, %arg2: memref<16x32xbf16, #tpu.memory_space<vmem>>, %arg3: memref<1x32xf32, #tpu.memory_space<vmem>>, %arg4: memref<392x32xbf16, #tpu.memory_space<vmem>>) attributes {dimension_semantics = [#tpu.dimension_semantics<parallel>], iteration_bounds = array<i64: 1>, scalar_prefetch = 0 : i64, scratch_operands = 0 : i64, tpu.core_type = #tpu.core_type<tc>, window_params = [{transform_indices = @transform_0, window_bounds = array<i64: 4, 392, 16>}, {pipeline_mode = #tpu.pipeline_mode<synchronous>, transform_indices = @transform_1, window_bounds = array<i64: 16, 32>}, {pipeline_mode = #tpu.pipeline_mode<synchronous>, transform_indices = @transform_2, window_bounds = array<i64: 1, 32>}, {transform_indices = @transform_3, window_bounds = array<i64: 392, 32>}]} {
    %c0 = arith.constant 0 : index
    %c0_0 = arith.constant 0 : index
    %0 = vector.load %arg2[%c0, %c0_0] : memref<16x32xbf16, #tpu.memory_space<vmem>>, vector<16x32xbf16>
    %c0_1 = arith.constant 0 : index
    %c0_2 = arith.constant 0 : index
    %c0_3 = arith.constant 0 : index
    %1 = vector.load %arg1[%c0_1, %c0_2, %c0_3] : memref<4x392x16xbf16, #tpu.memory_space<vmem>>, vector<1x392x16xbf16>
    %2 = vector.shape_cast %1 : vector<1x392x16xbf16> to vector<392x16xbf16>
    %cst = arith.constant dense<0.000000e+00> : vector<392x32xf32>
    %3 = tpu.matmul %2, %0, %cst {dimension_numbers = #tpu.dot_dimension_numbers<[1], [0], [0], [1], [0, 0, 1, 1], [], []>} : vector<392x16xbf16>, vector<16x32xbf16>, vector<392x32xf32> -> vector<392x32xf32>
    %c1 = arith.constant 1 : index
    %c0_4 = arith.constant 0 : index
    %c0_5 = arith.constant 0 : index
    %4 = vector.load %arg1[%c1, %c0_4, %c0_5] : memref<4x392x16xbf16, #tpu.memory_space<vmem>>, vector<1x392x16xbf16>
    %5 = vector.shape_cast %4 : vector<1x392x16xbf16> to vector<392x16xbf16>
    %cst_6 = arith.constant dense<0.000000e+00> : vector<392x32xf32>
    %6 = tpu.matmul %5, %0, %cst_6 {dimension_numbers = #tpu.dot_dimension_numbers<[1], [0], [0], [1], [0, 0, 1, 1], [], []>} : vector<392x16xbf16>, vector<16x32xbf16>, vector<392x32xf32> -> vector<392x32xf32>
    %7 = arith.maximumf %3, %6 : vector<392x32xf32>
    %c2 = arith.constant 2 : index
    %c0_7 = arith.constant 0 : index
    %c0_8 = arith.constant 0 : index
    %8 = vector.load %arg1[%c2, %c0_7, %c0_8] : memref<4x392x16xbf16, #tpu.memory_space<vmem>>, vector<1x392x16xbf16>
    %9 = vector.shape_cast %8 : vector<1x392x16xbf16> to vector<392x16xbf16>
    %cst_9 = arith.constant dense<0.000000e+00> : vector<392x32xf32>
    %10 = tpu.matmul %9, %0, %cst_9 {dimension_numbers = #tpu.dot_dimension_numbers<[1], [0], [0], [1], [0, 0, 1, 1], [], []>} : vector<392x16xbf16>, vector<16x32xbf16>, vector<392x32xf32> -> vector<392x32xf32>
    %11 = arith.maximumf %7, %10 : vector<392x32xf32>
    %c3 = arith.constant 3 : index
    %c0_10 = arith.constant 0 : index
    %c0_11 = arith.constant 0 : index
    %12 = vector.load %arg1[%c3, %c0_10, %c0_11] : memref<4x392x16xbf16, #tpu.memory_space<vmem>>, vector<1x392x16xbf16>
    %13 = vector.shape_cast %12 : vector<1x392x16xbf16> to vector<392x16xbf16>
    %cst_12 = arith.constant dense<0.000000e+00> : vector<392x32xf32>
    %14 = tpu.matmul %13, %0, %cst_12 {dimension_numbers = #tpu.dot_dimension_numbers<[1], [0], [0], [1], [0, 0, 1, 1], [], []>} : vector<392x16xbf16>, vector<16x32xbf16>, vector<392x32xf32> -> vector<392x32xf32>
    %15 = arith.maximumf %11, %14 : vector<392x32xf32>
    %c0_13 = arith.constant 0 : index
    %c0_14 = arith.constant 0 : index
    %16 = vector.load %arg3[%c0_13, %c0_14] : memref<1x32xf32, #tpu.memory_space<vmem>>, vector<1x32xf32>
    %17 = vector.broadcast %16 : vector<1x32xf32> to vector<392x32xf32>
    %18 = arith.addf %15, %17 : vector<392x32xf32>
    %cst_15 = arith.constant 0.000000e+00 : f32
    %19 = vector.broadcast %cst_15 : f32 to vector<392x32xf32>
    %20 = arith.maximumf %18, %19 : vector<392x32xf32>
    %21 = arith.truncf %20 : vector<392x32xf32> to vector<392x32xbf16>
    %c0_16 = arith.constant 0 : index
    %c0_17 = arith.constant 0 : index
    %22 = vector.load %arg4[%c0_16, %c0_17] : memref<392x32xbf16, #tpu.memory_space<vmem>>, vector<392x32xbf16>
    tpu.vector_store %arg4[%c0_16, %c0_17], %21 {strides = array<i32>} : memref<392x32xbf16, #tpu.memory_space<vmem>>, vector<392x32xbf16>,
    return
  }
  func.func @transform_0(%arg0: i32) -> (i32, i32, i32) {
    %c0_i32 = arith.constant 0 : i32
    %c0_i32_0 = arith.constant 0 : i32
    %c0_i32_1 = arith.constant 0 : i32
    return %c0_i32, %arg0, %c0_i32_0 : i32, i32, i32
  }
  func.func @transform_1(%arg0: i32) -> (i32, i32) {
    %c0_i32 = arith.constant 0 : i32
    %c0_i32_0 = arith.constant 0 : i32
    %c0_i32_1 = arith.constant 0 : i32
    return %c0_i32, %c0_i32_0 : i32, i32
  }
  func.func @transform_2(%arg0: i32) -> (i32, i32) {
    %c0_i32 = arith.constant 0 : i32
    %c0_i32_0 = arith.constant 0 : i32
    %c0_i32_1 = arith.constant 0 : i32
    return %c0_i32, %c0_i32_0 : i32, i32
  }
  func.func @transform_3(%arg0: i32) -> (i32, i32) {
    %c0_i32 = arith.constant 0 : i32
    %c0_i32_0 = arith.constant 0 : i32
    return %arg0, %c0_i32 : i32, i32
  }
}

module attributes {stable_mosaic.version = 11 : i64} {
  func.func @_conv_pool_kernel(%arg0: i32, %arg1: memref<4x104x288xbf16, #tpu.memory_space<vmem>>, %arg2: memref<288x64xbf16, #tpu.memory_space<vmem>>, %arg3: memref<1x64xf32, #tpu.memory_space<vmem>>, %arg4: memref<104x64xbf16, #tpu.memory_space<vmem>>) attributes {dimension_semantics = [#tpu.dimension_semantics<parallel>], iteration_bounds = array<i64: 1>, scalar_prefetch = 0 : i64, scratch_operands = 0 : i64, tpu.core_type = #tpu.core_type<tc>, window_params = [{transform_indices = @transform_0, window_bounds = array<i64: 4, 104, 288>}, {pipeline_mode = #tpu.pipeline_mode<synchronous>, transform_indices = @transform_1, window_bounds = array<i64: 288, 64>}, {pipeline_mode = #tpu.pipeline_mode<synchronous>, transform_indices = @transform_2, window_bounds = array<i64: 1, 64>}, {transform_indices = @transform_3, window_bounds = array<i64: 104, 64>}]} {
    %c0 = arith.constant 0 : index
    %c0_0 = arith.constant 0 : index
    %0 = vector.load %arg2[%c0, %c0_0] : memref<288x64xbf16, #tpu.memory_space<vmem>>, vector<288x64xbf16>
    %c0_1 = arith.constant 0 : index
    %c0_2 = arith.constant 0 : index
    %c0_3 = arith.constant 0 : index
    %1 = vector.load %arg1[%c0_1, %c0_2, %c0_3] : memref<4x104x288xbf16, #tpu.memory_space<vmem>>, vector<1x104x288xbf16>
    %2 = vector.shape_cast %1 : vector<1x104x288xbf16> to vector<104x288xbf16>
    %cst = arith.constant dense<0.000000e+00> : vector<104x64xf32>
    %3 = tpu.matmul %2, %0, %cst {dimension_numbers = #tpu.dot_dimension_numbers<[1], [0], [0], [1], [0, 0, 1, 1], [], []>} : vector<104x288xbf16>, vector<288x64xbf16>, vector<104x64xf32> -> vector<104x64xf32>
    %c1 = arith.constant 1 : index
    %c0_4 = arith.constant 0 : index
    %c0_5 = arith.constant 0 : index
    %4 = vector.load %arg1[%c1, %c0_4, %c0_5] : memref<4x104x288xbf16, #tpu.memory_space<vmem>>, vector<1x104x288xbf16>
    %5 = vector.shape_cast %4 : vector<1x104x288xbf16> to vector<104x288xbf16>
    %cst_6 = arith.constant dense<0.000000e+00> : vector<104x64xf32>
    %6 = tpu.matmul %5, %0, %cst_6 {dimension_numbers = #tpu.dot_dimension_numbers<[1], [0], [0], [1], [0, 0, 1, 1], [], []>} : vector<104x288xbf16>, vector<288x64xbf16>, vector<104x64xf32> -> vector<104x64xf32>
    %7 = arith.maximumf %3, %6 : vector<104x64xf32>
    %c2 = arith.constant 2 : index
    %c0_7 = arith.constant 0 : index
    %c0_8 = arith.constant 0 : index
    %8 = vector.load %arg1[%c2, %c0_7, %c0_8] : memref<4x104x288xbf16, #tpu.memory_space<vmem>>, vector<1x104x288xbf16>
    %9 = vector.shape_cast %8 : vector<1x104x288xbf16> to vector<104x288xbf16>
    %cst_9 = arith.constant dense<0.000000e+00> : vector<104x64xf32>
    %10 = tpu.matmul %9, %0, %cst_9 {dimension_numbers = #tpu.dot_dimension_numbers<[1], [0], [0], [1], [0, 0, 1, 1], [], []>} : vector<104x288xbf16>, vector<288x64xbf16>, vector<104x64xf32> -> vector<104x64xf32>
    %11 = arith.maximumf %7, %10 : vector<104x64xf32>
    %c3 = arith.constant 3 : index
    %c0_10 = arith.constant 0 : index
    %c0_11 = arith.constant 0 : index
    %12 = vector.load %arg1[%c3, %c0_10, %c0_11] : memref<4x104x288xbf16, #tpu.memory_space<vmem>>, vector<1x104x288xbf16>
    %13 = vector.shape_cast %12 : vector<1x104x288xbf16> to vector<104x288xbf16>
    %cst_12 = arith.constant dense<0.000000e+00> : vector<104x64xf32>
    %14 = tpu.matmul %13, %0, %cst_12 {dimension_numbers = #tpu.dot_dimension_numbers<[1], [0], [0], [1], [0, 0, 1, 1], [], []>} : vector<104x288xbf16>, vector<288x64xbf16>, vector<104x64xf32> -> vector<104x64xf32>
    %15 = arith.maximumf %11, %14 : vector<104x64xf32>
    %c0_13 = arith.constant 0 : index
    %c0_14 = arith.constant 0 : index
    %16 = vector.load %arg3[%c0_13, %c0_14] : memref<1x64xf32, #tpu.memory_space<vmem>>, vector<1x64xf32>
    %17 = vector.broadcast %16 : vector<1x64xf32> to vector<104x64xf32>
    %18 = arith.addf %15, %17 : vector<104x64xf32>
    %cst_15 = arith.constant 0.000000e+00 : f32
    %19 = vector.broadcast %cst_15 : f32 to vector<104x64xf32>
    %20 = arith.maximumf %18, %19 : vector<104x64xf32>
    %21 = arith.truncf %20 : vector<104x64xf32> to vector<104x64xbf16>
    %c0_16 = arith.constant 0 : index
    %c0_17 = arith.constant 0 : index
    %22 = vector.load %arg4[%c0_16, %c0_17] : memref<104x64xbf16, #tpu.memory_space<vmem>>, vector<104x64xbf16>
    tpu.vector_store %arg4[%c0_16, %c0_17], %21 {strides = array<i32>} : memref<104x64xbf16, #tpu.memory_space<vmem>>, vector<104x64xbf16>,
    return
  }
  func.func @transform_0(%arg0: i32) -> (i32, i32, i32) {
    %c0_i32 = arith.constant 0 : i32
    %c0_i32_0 = arith.constant 0 : i32
    %c0_i32_1 = arith.constant 0 : i32
    return %c0_i32, %arg0, %c0_i32_0 : i32, i32, i32
  }
  func.func @transform_1(%arg0: i32) -> (i32, i32) {
    %c0_i32 = arith.constant 0 : i32
    %c0_i32_0 = arith.constant 0 : i32
    %c0_i32_1 = arith.constant 0 : i32
    return %c0_i32, %c0_i32_0 : i32, i32
  }
  func.func @transform_2(%arg0: i32) -> (i32, i32) {
    %c0_i32 = arith.constant 0 : i32
    %c0_i32_0 = arith.constant 0 : i32
    %c0_i32_1 = arith.constant 0 : i32
    return %c0_i32, %c0_i32_0 : i32, i32
  }
  func.func @transform_3(%arg0: i32) -> (i32, i32) {
    %c0_i32 = arith.constant 0 : i32
    %c0_i32_0 = arith.constant 0 : i32
    return %arg0, %c0_i32 : i32, i32
  }
}

module attributes {stable_mosaic.version = 11 : i64} {
  func.func @_fc_fused_kernel(%arg0: i32, %arg1: memref<8x3136xbf16, #tpu.memory_space<vmem>>, %arg2: memref<3136x256xbf16, #tpu.memory_space<vmem>>, %arg3: memref<1x256xf32, #tpu.memory_space<vmem>>, %arg4: memref<256x128xbf16, #tpu.memory_space<vmem>>, %arg5: memref<1x128xf32, #tpu.memory_space<vmem>>, %arg6: memref<8x128xf32, #tpu.memory_space<vmem>>) attributes {dimension_semantics = [#tpu.dimension_semantics<parallel>], iteration_bounds = array<i64: 1>, scalar_prefetch = 0 : i64, scratch_operands = 0 : i64, tpu.core_type = #tpu.core_type<tc>, window_params = [{transform_indices = @transform_0, window_bounds = array<i64: 8, 3136>}, {pipeline_mode = #tpu.pipeline_mode<synchronous>, transform_indices = @transform_1, window_bounds = array<i64: 3136, 256>}, {pipeline_mode = #tpu.pipeline_mode<synchronous>, transform_indices = @transform_2, window_bounds = array<i64: 1, 256>}, {pipeline_mode = #tpu.pipeline_mode<synchronous>, transform_indices = @transform_3, window_bounds = array<i64: 256, 128>}, {pipeline_mode = #tpu.pipeline_mode<synchronous>, transform_indices = @transform_4, window_bounds = array<i64: 1, 128>}, {transform_indices = @transform_5, window_bounds = array<i64: 8, 128>}]} {
    %c0 = arith.constant 0 : index
    %c0_0 = arith.constant 0 : index
    %0 = vector.load %arg1[%c0, %c0_0] : memref<8x3136xbf16, #tpu.memory_space<vmem>>, vector<8x3136xbf16>
    %c0_1 = arith.constant 0 : index
    %c0_2 = arith.constant 0 : index
    %1 = vector.load %arg2[%c0_1, %c0_2] : memref<3136x256xbf16, #tpu.memory_space<vmem>>, vector<3136x256xbf16>
    %cst = arith.constant dense<0.000000e+00> : vector<8x256xf32>
    %2 = tpu.matmul %0, %1, %cst {dimension_numbers = #tpu.dot_dimension_numbers<[1], [0], [0], [1], [0, 0, 1, 1], [], []>} : vector<8x3136xbf16>, vector<3136x256xbf16>, vector<8x256xf32> -> vector<8x256xf32>
    %c0_3 = arith.constant 0 : index
    %c0_4 = arith.constant 0 : index
    %3 = vector.load %arg3[%c0_3, %c0_4] : memref<1x256xf32, #tpu.memory_space<vmem>>, vector<1x256xf32>
    %4 = vector.broadcast %3 : vector<1x256xf32> to vector<8x256xf32>
    %5 = arith.addf %2, %4 : vector<8x256xf32>
    %cst_5 = arith.constant 0.000000e+00 : f32
    %6 = vector.broadcast %cst_5 : f32 to vector<8x256xf32>
    %7 = arith.maximumf %5, %6 : vector<8x256xf32>
    %8 = arith.truncf %7 : vector<8x256xf32> to vector<8x256xbf16>
    %c0_6 = arith.constant 0 : index
    %c0_7 = arith.constant 0 : index
    %9 = vector.load %arg4[%c0_6, %c0_7] : memref<256x128xbf16, #tpu.memory_space<vmem>>, vector<256x128xbf16>
    %cst_8 = arith.constant dense<0.000000e+00> : vector<8x128xf32>
    %10 = tpu.matmul %8, %9, %cst_8 {dimension_numbers = #tpu.dot_dimension_numbers<[1], [0], [0], [1], [0, 0, 1, 1], [], []>} : vector<8x256xbf16>, vector<256x128xbf16>, vector<8x128xf32> -> vector<8x128xf32>
    %c0_9 = arith.constant 0 : index
    %c0_10 = arith.constant 0 : index
    %11 = vector.load %arg5[%c0_9, %c0_10] : memref<1x128xf32, #tpu.memory_space<vmem>>, vector<1x128xf32>
    %12 = vector.broadcast %11 : vector<1x128xf32> to vector<8x128xf32>
    %13 = arith.addf %10, %12 : vector<8x128xf32>
    %c0_11 = arith.constant 0 : index
    %c0_12 = arith.constant 0 : index
    %14 = vector.load %arg6[%c0_11, %c0_12] : memref<8x128xf32, #tpu.memory_space<vmem>>, vector<8x128xf32>
    tpu.vector_store %arg6[%c0_11, %c0_12], %13 {strides = array<i32>} : memref<8x128xf32, #tpu.memory_space<vmem>>, vector<8x128xf32>,
    return
  }
  func.func @transform_0(%arg0: i32) -> (i32, i32) {
    %c0_i32 = arith.constant 0 : i32
    %c0_i32_0 = arith.constant 0 : i32
    return %arg0, %c0_i32 : i32, i32
  }
  func.func @transform_1(%arg0: i32) -> (i32, i32) {
    %c0_i32 = arith.constant 0 : i32
    %c0_i32_0 = arith.constant 0 : i32
    %c0_i32_1 = arith.constant 0 : i32
    return %c0_i32, %c0_i32_0 : i32, i32
  }
  func.func @transform_2(%arg0: i32) -> (i32, i32) {
    %c0_i32 = arith.constant 0 : i32
    %c0_i32_0 = arith.constant 0 : i32
    %c0_i32_1 = arith.constant 0 : i32
    return %c0_i32, %c0_i32_0 : i32, i32
  }
  func.func @transform_3(%arg0: i32) -> (i32, i32) {
    %c0_i32 = arith.constant 0 : i32
    %c0_i32_0 = arith.constant 0 : i32
    %c0_i32_1 = arith.constant 0 : i32
    return %c0_i32, %c0_i32_0 : i32, i32
  }
  func.func @transform_4(%arg0: i32) -> (i32, i32) {
    %c0_i32 = arith.constant 0 : i32
    %c0_i32_0 = arith.constant 0 : i32
    %c0_i32_1 = arith.constant 0 : i32
    return %c0_i32, %c0_i32_0 : i32, i32
  }
  func.func @transform_5(%arg0: i32) -> (i32, i32) {
    %c0_i32 = arith.constant 0 : i32
    %c0_i32_0 = arith.constant 0 : i32
    return %arg0, %c0_i32 : i32, i32
  }
}

</mosaic_0001>

<llo_original>
// kernel: car_model_forward.3
$region0: #{car_model_forward.3}
  #allocation0 [shape = 'u32[]', space=smem, size = 0x4, offset = 0x4, fixed_abs, tag = 'smem constant byte address 0x4 - core index']
  #allocation1 [shape = 'u32[144,128]{1,0:T(1,128)}', space=vmem, size = 0x12000, scoped, tag = 'internal scratch']
  %s0 = inlined_call_operand.vmem [shape: bf16[4,392,16], index: 0, kind: input, shape index: {}]
  %s1 = inlined_call_operand.vmem [shape: bf16[16,32], index: 1, kind: input, shape index: {}]
  %s2 = inlined_call_operand.vmem [shape: f32[1,32], index: 2, kind: input, shape index: {}]
  %s3 = inlined_call_operand.vmem [shape: bf16[392,32], index: 3, kind: output, shape index: {}]
  %s4 = sld [smem:[#allocation0]]
  $region22: #{car_model_forward.3} parent=0
    _
  %s6 = ssub.s32 1, %s4
  %s7 = scalar_select 0, %s6, %s4
  // Predicated region
  $region2: #{car_model_forward.3} parent=0 // pred_check
    _
  $region3: #{car_model_forward.3} parent=0 // pred_check_branch
    %9 = sbr.rel (0) target = $region5
  $region4: #{car_model_forward.3} parent=0 // pred_region
    _
  $region5: #{car_model_forward.3} parent=0 // pred_fallthru
    _
  // Predicated region
  $region6: #{car_model_forward.3} parent=0 // pred_check
    _
  $region7: #{car_model_forward.3} parent=0 // pred_check_branch
    %11 = sbr.rel (0) target = $region9
  $region8: #{car_model_forward.3} parent=0 // pred_region
    _
  $region9: #{car_model_forward.3} parent=0 // pred_fallthru
    _
  // Predicated region
  $region10: #{car_model_forward.3} parent=0 // pred_check
    _
  $region11: #{car_model_forward.3} parent=0 // pred_check_branch
    %13 = sbr.rel (0) target = $region13
  $region12: #{car_model_forward.3} parent=0 // pred_region
    _
  $region13: #{car_model_forward.3} parent=0 // pred_fallthru
    _
  %v15 = vld [vmem:[%s1] sm:$0xf]
  %v16 = vld [vmem:[%s1 + $0x4] sm:$0xf]
  %v17 = vld [vmem:[%s0] sm:$0xf]
  %v18 = vld [vmem:[%s0 + $0x4] sm:$0xf]
  %v19 = vld [vmem:[%s0 + $0x8] sm:$0xf]
  %v20 = vld [vmem:[%s0 + $0xc] sm:$0xf]
  %v21 = vld [vmem:[%s0 + $0x10] sm:$0xf]
  %v22 = vld [vmem:[%s0 + $0x14] sm:$0xf]
  %v23 = vld [vmem:[%s0 + $0x18] sm:$0xf]
  %v24 = vld [vmem:[%s0 + $0x1c] sm:$0xf]
  %v25 = vld [vmem:[%s0 + $0x20] sm:$0xf]
  %v26 = vld [vmem:[%s0 + $0x24] sm:$0xf]
  %v27 = vld [vmem:[%s0 + $0x28] sm:$0xf]
  %v28 = vld [vmem:[%s0 + $0x2c] sm:$0xf]
  %v29 = vld [vmem:[%s0 + $0x30] sm:$0xf]
  %v30 = vld [vmem:[%s0 + $0x34] sm:$0xf]
  %v31 = vld [vmem:[%s0 + $0x38] sm:$0xf]
  %v32 = vld [vmem:[%s0 + $0x3c] sm:$0xf]
  %v33 = vld [vmem:[%s0 + $0x40] sm:$0xf]
  %v34 = vld [vmem:[%s0 + $0x44] sm:$0xf]
  %v35 = vld [vmem:[%s0 + $0x48] sm:$0xf]
  %v36 = vld [vmem:[%s0 + $0x4c] sm:$0xf]
  %v37 = vld [vmem:[%s0 + $0x50] sm:$0xf]
  %v38 = vld [vmem:[%s0 + $0x54] sm:$0xf]
  %v39 = vld [vmem:[%s0 + $0x58] sm:$0xf]
  %v40 = vld [vmem:[%s0 + $0x5c] sm:$0xf]
  %v41 = vld [vmem:[%s0 + $0x60] sm:$0xf]
  %v42 = vld [vmem:[%s0 + $0x64] sm:$0xf]
  %v43 = vld [vmem:[%s0 + $0x68] sm:$0xf]
  %v44 = vld [vmem:[%s0 + $0x6c] sm:$0xf]
  %v45 = vld [vmem:[%s0 + $0x70] sm:$0xf]
  %v46 = vld [vmem:[%s0 + $0x74] sm:$0xf]
  %v47 = vld [vmem:[%s0 + $0x78] sm:$0xf]
  %v48 = vld [vmem:[%s0 + $0x7c] sm:$0xf]
  %v49 = vld [vmem:[%s0 + $0x80] sm:$0xf]
  %v50 = vld [vmem:[%s0 + $0x84] sm:$0xf]
  %v51 = vld [vmem:[%s0 + $0x88] sm:$0xf]
  %v52 = vld [vmem:[%s0 + $0x8c] sm:$0xf]
  %v53 = vld [vmem:[%s0 + $0x90] sm:$0xf]
  %v54 = vld [vmem:[%s0 + $0x94] sm:$0xf]
  %v55 = vld [vmem:[%s0 + $0x98] sm:$0xf]
  %v56 = vld [vmem:[%s0 + $0x9c] sm:$0xf]
  %v57 = vld [vmem:[%s0 + $0xa0] sm:$0xf]
  %v58 = vld [vmem:[%s0 + $0xa4] sm:$0xf]
  %v59 = vld [vmem:[%s0 + $0xa8] sm:$0xf]
  %v60 = vld [vmem:[%s0 + $0xac] sm:$0xf]
  %v61 = vld [vmem:[%s0 + $0xb0] sm:$0xf]
  %v62 = vld [vmem:[%s0 + $0xb4] sm:$0xf]
  %v63 = vld [vmem:[%s0 + $0xb8] sm:$0xf]
  %v64 = vld [vmem:[%s0 + $0xbc] sm:$0xf]
  %v65 = vld [vmem:[%s0 + $0xc0] sm:$0xf]
  %v115 = vunpack.c.l.b16 %v17
  %v116 = vunpack.c.l.b16 %v18
  %v117 = vunpack.c.l.b16 %v19
  %v118 = vunpack.c.l.b16 %v20
  %v119 = vunpack.c.l.b16 %v21
  %v120 = vunpack.c.l.b16 %v22
  %v121 = vunpack.c.l.b16 %v23
  %v122 = vunpack.c.l.b16 %v24
  %v123 = vunpack.c.l.b16 %v25
  %v124 = vunpack.c.l.b16 %v26
  %v125 = vunpack.c.l.b16 %v27
  %v126 = vunpack.c.l.b16 %v28
  %v127 = vunpack.c.l.b16 %v29
  %v128 = vunpack.c.l.b16 %v30
  %v129 = vunpack.c.l.b16 %v31
  %v130 = vunpack.c.l.b16 %v32
  %v131 = vunpack.c.l.b16 %v33
  %v132 = vunpack.c.l.b16 %v34
  %v133 = vunpack.c.l.b16 %v35
  %v134 = vunpack.c.l.b16 %v36
  %v135 = vunpack.c.l.b16 %v37
  %v136 = vunpack.c.l.b16 %v38
  %v137 = vunpack.c.l.b16 %v39
  %v138 = vunpack.c.l.b16 %v40
  %v139 = vunpack.c.l.b16 %v41
  %v140 = vunpack.c.l.b16 %v42
  %v141 = vunpack.c.l.b16 %v43
  %v142 = vunpack.c.l.b16 %v44
  %v143 = vunpack.c.l.b16 %v45
  %v144 = vunpack.c.l.b16 %v46
  %v145 = vunpack.c.l.b16 %v47
  %v146 = vunpack.c.l.b16 %v48
  %v147 = vunpack.c.l.b16 %v49
  %v148 = vunpack.c.l.b16 %v50
  %v149 = vunpack.c.l.b16 %v51
  %v150 = vunpack.c.l.b16 %v52
  %v151 = vunpack.c.l.b16 %v53
  %v152 = vunpack.c.l.b16 %v54
  %v153 = vunpack.c.l.b16 %v55
  %v154 = vunpack.c.l.b16 %v56
  %v155 = vunpack.c.l.b16 %v57
  %v156 = vunpack.c.l.b16 %v58
  %v157 = vunpack.c.l.b16 %v59
  %v158 = vunpack.c.l.b16 %v60
  %v159 = vunpack.c.l.b16 %v61
  %v160 = vunpack.c.l.b16 %v62
  %v161 = vunpack.c.l.b16 %v63
  %v162 = vunpack.c.l.b16 %v64
  %v163 = vunpack.c.l.b16 %v65
  %v164 = vpack.c.b16 %v116, %v115
  %v165 = vpack.c.b16 %v118, %v117
  %v166 = vpack.c.b16 %v120, %v119
  %v167 = vpack.c.b16 %v122, %v121
  %v168 = vpack.c.b16 %v124, %v123
  %v169 = vpack.c.b16 %v126, %v125
  %v170 = vpack.c.b16 %v128, %v127
  %v171 = vpack.c.b16 %v130, %v129
  %v172 = vpack.c.b16 %v132, %v131
  %v173 = vpack.c.b16 %v134, %v133
  %v174 = vpack.c.b16 %v136, %v135
  %v175 = vpack.c.b16 %v138, %v137
  %v176 = vpack.c.b16 %v140, %v139
  %v177 = vpack.c.b16 %v142, %v141
  %v178 = vpack.c.b16 %v144, %v143
  %v179 = vpack.c.b16 %v146, %v145
  %v180 = vpack.c.b16 %v148, %v147
  %v181 = vpack.c.b16 %v150, %v149
  %v182 = vpack.c.b16 %v152, %v151
  %v183 = vpack.c.b16 %v154, %v153
  %v184 = vpack.c.b16 %v156, %v155
  %v185 = vpack.c.b16 %v158, %v157
  %v186 = vpack.c.b16 %v160, %v159
  %v187 = vpack.c.b16 %v162, %v161
  %v188 = vpack.c.b16 %v163, %v163
  %v191 = vunpack.c.l.b16 %v15
  %v192 = vunpack.c.l.b16 %v16
  %v193 = vpack.c.b16 %v192, %v191
  %vm195 = vcmask 130048
  %v197 = vsel %vm195, %v164, 0
  %v200 = vsel %vm195, %v165, 0
  %v203 = vsel %vm195, %v166, 0
  %v206 = vsel %vm195, %v167, 0
  %v209 = vsel %vm195, %v168, 0
  %v212 = vsel %vm195, %v169, 0
  %v215 = vsel %vm195, %v170, 0
  %v218 = vsel %vm195, %v171, 0
  %v221 = vsel %vm195, %v172, 0
  %v224 = vsel %vm195, %v173, 0
  %v227 = vsel %vm195, %v174, 0
  %v230 = vsel %vm195, %v175, 0
  %v233 = vsel %vm195, %v176, 0
  %v236 = vsel %vm195, %v177, 0
  %v239 = vsel %vm195, %v178, 0
  %v242 = vsel %vm195, %v179, 0
  %v245 = vsel %vm195, %v180, 0
  %v248 = vsel %vm195, %v181, 0
  %v251 = vsel %vm195, %v182, 0
  %v254 = vsel %vm195, %v183, 0
  %v257 = vsel %vm195, %v184, 0
  %v260 = vsel %vm195, %v185, 0
  %v263 = vsel %vm195, %v186, 0
  %v266 = vsel %vm195, %v187, 0
  %v269 = vsel %vm195, %v188, 0
  %271 = vmatprep.subr.bf16.mxu0 0
  %272 = vmatpush1.bf16.msra.mxu0 0
  %273 = vmatprep.subr.bf16.mxu0 0
  %274 = vmatpush1.bf16.msra.mxu0 0
  %275 = vmatprep.subr.bf16.mxu0 0
  %276 = vmatpush1.bf16.msra.mxu0 0
  %277 = vmatprep.subr.bf16.mxu0 0
  %278 = vmatpush1.bf16.msra.mxu0 0
  %279 = vmatprep.subr.bf16.mxu0 0
  %280 = vmatpush1.bf16.msra.mxu0 0
  %281 = vmatprep.subr.bf16.mxu0 0
  %282 = vmatpush1.bf16.msra.mxu0 0
  %283 = vmatprep.subr.bf16.mxu0 0
  %284 = vmatpush1.bf16.msra.mxu0 0
  %285 = vmatprep.subr.bf16.mxu0 0
  %286 = vmatpush1.bf16.msra.mxu0 %v193
  %287 = vmatprep.subr.bf16.mxu0 0
  %288 = vmatpush2.bf16.msra.mxu0 0
  %289 = vmatprep.subr.bf16.mxu0 0
  %290 = vmatpush2.bf16.msra.mxu0 0
  %291 = vmatprep.subr.bf16.mxu0 0
  %292 = vmatpush2.bf16.msra.mxu0 0
  %293 = vmatprep.subr.bf16.mxu0 0
  %294 = vmatpush2.bf16.msra.mxu0 0
  %295 = vmatprep.subr.bf16.mxu0 0
  %296 = vmatpush2.bf16.msra.mxu0 0
  %297 = vmatprep.subr.bf16.mxu0 0
  %298 = vmatpush2.bf16.msra.mxu0 0
  %299 = vmatprep.subr.bf16.mxu0 0
  %300 = vmatpush2.bf16.msra.mxu0 0
  %301 = vmatprep.subr.bf16.mxu0 0
  %302 = vmatpush2.bf16.msra.mxu0 0
  %303 = vmatprep.mubr.bf16.mxu0 0
  %304 = vmatmul.mubr.bf16.gmra.mxu0 %v197
  %v305 = vpop.f32.mrf.mxu0
  %v306 = vadd.f32 0.0, %v305
  %v307 = vpop.f32.mrf.mxu0
  %v308 = vpop.f32.mrf.mxu0
  %v309 = vadd.f32 0.0, %v308
  %v310 = vpop.f32.mrf.mxu0
  %311 = vmatprep.mubr.bf16.mxu0 0
  %312 = vmatmul.mubr.bf16.gmra.mxu0 %v200
  %v313 = vpop.f32.mrf.mxu0
  %v314 = vadd.f32 0.0, %v313
  %v315 = vpop.f32.mrf.mxu0
  %v316 = vpop.f32.mrf.mxu0
  %v317 = vadd.f32 0.0, %v316
  %v318 = vpop.f32.mrf.mxu0
  %319 = vmatprep.mubr.bf16.mxu0 0
  %320 = vmatmul.mubr.bf16.gmra.mxu0 %v203
  %v321 = vpop.f32.mrf.mxu0
  %v322 = vadd.f32 0.0, %v321
  %v323 = vpop.f32.mrf.mxu0
  %v324 = vpop.f32.mrf.mxu0
  %v325 = vadd.f32 0.0, %v324
  %v326 = vpop.f32.mrf.mxu0
  %327 = vmatprep.mubr.bf16.mxu0 0
  %328 = vmatmul.mubr.bf16.gmra.mxu0 %v206
  %v329 = vpop.f32.mrf.mxu0
  %v330 = vadd.f32 0.0, %v329
  %v331 = vpop.f32.mrf.mxu0
  %v332 = vpop.f32.mrf.mxu0
  %v333 = vadd.f32 0.0, %v332
  %v334 = vpop.f32.mrf.mxu0
  %335 = vmatprep.mubr.bf16.mxu0 0
  %336 = vmatmul.mubr.bf16.gmra.mxu0 %v209
  %v337 = vpop.f32.mrf.mxu0
  %v338 = vadd.f32 0.0, %v337
  %v339 = vpop.f32.mrf.mxu0
  %v340 = vpop.f32.mrf.mxu0
  %v341 = vadd.f32 0.0, %v340
  %v342 = vpop.f32.mrf.mxu0
  %343 = vmatprep.mubr.bf16.mxu0 0
  %344 = vmatmul.mubr.bf16.gmra.mxu0 %v212
  %v345 = vpop.f32.mrf.mxu0
  %v346 = vadd.f32 0.0, %v345
  %v347 = vpop.f32.mrf.mxu0
  %v348 = vpop.f32.mrf.mxu0
  %v349 = vadd.f32 0.0, %v348
  %v350 = vpop.f32.mrf.mxu0
  %351 = vmatprep.mubr.bf16.mxu0 0
  %352 = vmatmul.mubr.bf16.gmra.mxu0 %v215
  %v353 = vpop.f32.mrf.mxu0
  %v354 = vadd.f32 0.0, %v353
  %v355 = vpop.f32.mrf.mxu0
  %v356 = vpop.f32.mrf.mxu0
  %v357 = vadd.f32 0.0, %v356
  %v358 = vpop.f32.mrf.mxu0
  %359 = vmatprep.mubr.bf16.mxu0 0
  %360 = vmatmul.mubr.bf16.gmra.mxu0 %v218
  %v361 = vpop.f32.mrf.mxu0
  %v362 = vadd.f32 0.0, %v361
  %v363 = vpop.f32.mrf.mxu0
  %v364 = vpop.f32.mrf.mxu0
  %v365 = vadd.f32 0.0, %v364
  %v366 = vpop.f32.mrf.mxu0
  %367 = vmatprep.mubr.bf16.mxu0 0
  %368 = vmatmul.mubr.bf16.gmra.mxu0 %v221
  %v369 = vpop.f32.mrf.mxu0
  %v370 = vadd.f32 0.0, %v369
  %v371 = vpop.f32.mrf.mxu0
  %v372 = vpop.f32.mrf.mxu0
  %v373 = vadd.f32 0.0, %v372
  %v374 = vpop.f32.mrf.mxu0
  %375 = vmatprep.mubr.bf16.mxu0 0
  %376 = vmatmul.mubr.bf16.gmra.mxu0 %v224
  %v377 = vpop.f32.mrf.mxu0
  %v378 = vadd.f32 0.0, %v377
  %v379 = vpop.f32.mrf.mxu0
  %v380 = vpop.f32.mrf.mxu0
  %v381 = vadd.f32 0.0, %v380
  %v382 = vpop.f32.mrf.mxu0
  %383 = vmatprep.mubr.bf16.mxu0 0
  %384 = vmatmul.mubr.bf16.gmra.mxu0 %v227
  %v385 = vpop.f32.mrf.mxu0
  %v386 = vadd.f32 0.0, %v385
  %v387 = vpop.f32.mrf.mxu0
  %v388 = vpop.f32.mrf.mxu0
  %v389 = vadd.f32 0.0, %v388
  %v390 = vpop.f32.mrf.mxu0
  %391 = vmatprep.mubr.bf16.mxu0 0
  %392 = vmatmul.mubr.bf16.gmra.mxu0 %v230
  %v393 = vpop.f32.mrf.mxu0
  %v394 = vadd.f32 0.0, %v393
  %v395 = vpop.f32.mrf.mxu0
  %v396 = vpop.f32.mrf.mxu0
  %v397 = vadd.f32 0.0, %v396
  %v398 = vpop.f32.mrf.mxu0
  %399 = vmatprep.mubr.bf16.mxu0 0
  %400 = vmatmul.mubr.bf16.gmra.mxu0 %v233
  %v401 = vpop.f32.mrf.mxu0
  %v402 = vadd.f32 0.0, %v401
  %v403 = vpop.f32.mrf.mxu0
  %v404 = vpop.f32.mrf.mxu0
  %v405 = vadd.f32 0.0, %v404
  %v406 = vpop.f32.mrf.mxu0
  %407 = vmatprep.mubr.bf16.mxu0 0
  %408 = vmatmul.mubr.bf16.gmra.mxu0 %v236
  %v409 = vpop.f32.mrf.mxu0
  %v410 = vadd.f32 0.0, %v409
  %v411 = vpop.f32.mrf.mxu0
  %v412 = vpop.f32.mrf.mxu0
  %v413 = vadd.f32 0.0, %v412
  %v414 = vpop.f32.mrf.mxu0
  %415 = vmatprep.mubr.bf16.mxu0 0
  %416 = vmatmul.mubr.bf16.gmra.mxu0 %v239
  %v417 = vpop.f32.mrf.mxu0
  %v418 = vadd.f32 0.0, %v417
  %v419 = vpop.f32.mrf.mxu0
  %v420 = vpop.f32.mrf.mxu0
  %v421 = vadd.f32 0.0, %v420
  %v422 = vpop.f32.mrf.mxu0
  %423 = vmatprep.mubr.bf16.mxu0 0
  %424 = vmatmul.mubr.bf16.gmra.mxu0 %v242
  %v425 = vpop.f32.mrf.mxu0
  %v426 = vadd.f32 0.0, %v425
  %v427 = vpop.f32.mrf.mxu0
  %v428 = vpop.f32.mrf.mxu0
  %v429 = vadd.f32 0.0, %v428
  %v430 = vpop.f32.mrf.mxu0
  %431 = vmatprep.mubr.bf16.mxu0 0
  %432 = vmatmul.mubr.bf16.gmra.mxu0 %v245
  %v433 = vpop.f32.mrf.mxu0
  %v434 = vadd.f32 0.0, %v433
  %v435 = vpop.f32.mrf.mxu0
  %v436 = vpop.f32.mrf.mxu0
  %v437 = vadd.f32 0.0, %v436
  %v438 = vpop.f32.mrf.mxu0
  %439 = vmatprep.mubr.bf16.mxu0 0
  %440 = vmatmul.mubr.bf16.gmra.mxu0 %v248
  %v441 = vpop.f32.mrf.mxu0
  %v442 = vadd.f32 0.0, %v441
  %v443 = vpop.f32.mrf.mxu0
  %v444 = vpop.f32.mrf.mxu0
  %v445 = vadd.f32 0.0, %v444
  %v446 = vpop.f32.mrf.mxu0
  %447 = vmatprep.mubr.bf16.mxu0 0
  %448 = vmatmul.mubr.bf16.gmra.mxu0 %v251
  %v449 = vpop.f32.mrf.mxu0
  %v450 = vadd.f32 0.0, %v449
  %v451 = vpop.f32.mrf.mxu0
  %v452 = vpop.f32.mrf.mxu0
  %v453 = vadd.f32 0.0, %v452
  %v454 = vpop.f32.mrf.mxu0
  %455 = vmatprep.mubr.bf16.mxu0 0
  %456 = vmatmul.mubr.bf16.gmra.mxu0 %v254
  %v457 = vpop.f32.mrf.mxu0
  %v458 = vadd.f32 0.0, %v457
  %v459 = vpop.f32.mrf.mxu0
  %v460 = vpop.f32.mrf.mxu0
  %v461 = vadd.f32 0.0, %v460
  %v462 = vpop.f32.mrf.mxu0
  %463 = vmatprep.mubr.bf16.mxu0 0
  %464 = vmatmul.mubr.bf16.gmra.mxu0 %v257
  %v465 = vpop.f32.mrf.mxu0
  %v466 = vadd.f32 0.0, %v465
  %v467 = vpop.f32.mrf.mxu0
  %v468 = vpop.f32.mrf.mxu0
  %v469 = vadd.f32 0.0, %v468
  %v470 = vpop.f32.mrf.mxu0
  %471 = vmatprep.mubr.bf16.mxu0 0
  %472 = vmatmul.mubr.bf16.gmra.mxu0 %v260
  %v473 = vpop.f32.mrf.mxu0
  %v474 = vadd.f32 0.0, %v473
  %v475 = vpop.f32.mrf.mxu0
  %v476 = vpop.f32.mrf.mxu0
  %v477 = vadd.f32 0.0, %v476
  %v478 = vpop.f32.mrf.mxu0
  %479 = vmatprep.mubr.bf16.mxu0 0
  %480 = vmatmul.mubr.bf16.gmra.mxu0 %v263
  %v481 = vpop.f32.mrf.mxu0
  %v482 = vadd.f32 0.0, %v481
  %v483 = vpop.f32.mrf.mxu0
  %v484 = vpop.f32.mrf.mxu0
  %v485 = vadd.f32 0.0, %v484
  %v486 = vpop.f32.mrf.mxu0
  %487 = vmatprep.mubr.bf16.mxu0 0
  %488 = vmatmul.mubr.bf16.gmra.mxu0 %v266
  %v489 = vpop.f32.mrf.mxu0
  %v490 = vadd.f32 0.0, %v489
  %v491 = vpop.f32.mrf.mxu0
  %v492 = vpop.f32.mrf.mxu0
  %v493 = vadd.f32 0.0, %v492
  %v494 = vpop.f32.mrf.mxu0
  %495 = vmatprep.mubr.bf16.mxu0 0
  %496 = vmatmul.mubr.bf16.gmra.mxu0 %v269
  %v497 = vpop.f32.mrf.mxu0
  %v498 = vadd.f32 0.0, %v497
  %v499 = vpop.f32.mrf.mxu0
  %v500 = vpop.f32.mrf.mxu0
  %v501 = vpop.f32.mrf.mxu0
  %502 = vdwg.mxu0
  %s503 = scalar_lea.vmem %s0, 196
  %v504 = vld [vmem:[%s503] sm:$0xf]
  %v505 = vld [vmem:[%s503 + $0x4] sm:$0xf]
  %v506 = vld [vmem:[%s503 + $0x8] sm:$0xf]
  %v507 = vld [vmem:[%s503 + $0xc] sm:$0xf]
  %v508 = vld [vmem:[%s503 + $0x10] sm:$0xf]
  %v509 = vld [vmem:[%s503 + $0x14] sm:$0xf]
  %v510 = vld [vmem:[%s503 + $0x18] sm:$0xf]
  %v511 = vld [vmem:[%s503 + $0x1c] sm:$0xf]
  %v512 = vld [vmem:[%s503 + $0x20] sm:$0xf]
  %v513 = vld [vmem:[%s503 + $0x24] sm:$0xf]
  %v514 = vld [vmem:[%s503 + $0x28] sm:$0xf]
  %v515 = vld [vmem:[%s503 + $0x2c] sm:$0xf]
  %v516 = vld [vmem:[%s503 + $0x30] sm:$0xf]
  %v517 = vld [vmem:[%s503 + $0x34] sm:$0xf]
  %v518 = vld [vmem:[%s503 + $0x38] sm:$0xf]
  %v519 = vld [vmem:[%s503 + $0x3c] sm:$0xf]
  %v520 = vld [vmem:[%s503 + $0x40] sm:$0xf]
  %v521 = vld [vmem:[%s503 + $0x44] sm:$0xf]
  %v522 = vld [vmem:[%s503 + $0x48] sm:$0xf]
  %v523 = vld [vmem:[%s503 + $0x4c] sm:$0xf]
  %v524 = vld [vmem:[%s503 + $0x50] sm:$0xf]
  %v525 = vld [vmem:[%s503 + $0x54] sm:$0xf]
  %v526 = vld [vmem:[%s503 + $0x58] sm:$0xf]
  %v527 = vld [vmem:[%s503 + $0x5c] sm:$0xf]
  %v528 = vld [vmem:[%s503 + $0x60] sm:$0xf]
  %v529 = vld [vmem:[%s503 + $0x64] sm:$0xf]
  %v530 = vld [vmem:[%s503 + $0x68] sm:$0xf]
  %v531 = vld [vmem:[%s503 + $0x6c] sm:$0xf]
  %v532 = vld [vmem:[%s503 + $0x70] sm:$0xf]
  %v533 = vld [vmem:[%s503 + $0x74] sm:$0xf]
  %v534 = vld [vmem:[%s503 + $0x78] sm:$0xf]
  %v535 = vld [vmem:[%s503 + $0x7c] sm:$0xf]
  %v536 = vld [vmem:[%s503 + $0x80] sm:$0xf]
  %v537 = vld [vmem:[%s503 + $0x84] sm:$0xf]
  %v538 = vld [vmem:[%s503 + $0x88] sm:$0xf]
  %v539 = vld [vmem:[%s503 + $0x8c] sm:$0xf]
  %v540 = vld [vmem:[%s503 + $0x90] sm:$0xf]
  %v541 = vld [vmem:[%s503 + $0x94] sm:$0xf]
  %v542 = vld [vmem:[%s503 + $0x98] sm:$0xf]
  %v543 = vld [vmem:[%s503 + $0x9c] sm:$0xf]
  %v544 = vld [vmem:[%s503 + $0xa0] sm:$0xf]
  %v545 = vld [vmem:[%s503 + $0xa4] sm:$0xf]
  %v546 = vld [vmem:[%s503 + $0xa8] sm:$0xf]
  %v547 = vld [vmem:[%s503 + $0xac] sm:$0xf]
  %v548 = vld [vmem:[%s503 + $0xb0] sm:$0xf]
  %v549 = vld [vmem:[%s503 + $0xb4] sm:$0xf]
  %v550 = vld [vmem:[%s503 + $0xb8] sm:$0xf]
  %v551 = vld [vmem:[%s503 + $0xbc] sm:$0xf]
  %v552 = vld [vmem:[%s503 + $0xc0] sm:$0xf]
  %v602 = vunpack.c.l.b16 %v504
  %v603 = vunpack.c.l.b16 %v505
  %v604 = vunpack.c.l.b16 %v506
  %v605 = vunpack.c.l.b16 %v507
  %v606 = vunpack.c.l.b16 %v508
  %v607 = vunpack.c.l.b16 %v509
  %v608 = vunpack.c.l.b16 %v510
  %v609 = vunpack.c.l.b16 %v511
  %v610 = vunpack.c.l.b16 %v512
  %v611 = vunpack.c.l.b16 %v513
  %v612 = vunpack.c.l.b16 %v514
  %v613 = vunpack.c.l.b16 %v515
  %v614 = vunpack.c.l.b16 %v516
  %v615 = vunpack.c.l.b16 %v517
  %v616 = vunpack.c.l.b16 %v518
  %v617 = vunpack.c.l.b16 %v519
  %v618 = vunpack.c.l.b16 %v520
  %v619 = vunpack.c.l.b16 %v521
  %v620 = vunpack.c.l.b16 %v522
  %v621 = vunpack.c.l.b16 %v523
  %v622 = vunpack.c.l.b16 %v524
  %v623 = vunpack.c.l.b16 %v525
  %v624 = vunpack.c.l.b16 %v526
  %v625 = vunpack.c.l.b16 %v527
  %v626 = vunpack.c.l.b16 %v528
  %v627 = vunpack.c.l.b16 %v529
  %v628 = vunpack.c.l.b16 %v530
  %v629 = vunpack.c.l.b16 %v531
  %v630 = vunpack.c.l.b16 %v532
  %v631 = vunpack.c.l.b16 %v533
  %v632 = vunpack.c.l.b16 %v534
  %v633 = vunpack.c.l.b16 %v535
  %v634 = vunpack.c.l.b16 %v536
  %v635 = vunpack.c.l.b16 %v537
  %v636 = vunpack.c.l.b16 %v538
  %v637 = vunpack.c.l.b16 %v539
  %v638 = vunpack.c.l.b16 %v540
  %v639 = vunpack.c.l.b16 %v541
  %v640 = vunpack.c.l.b16 %v542
  %v641 = vunpack.c.l.b16 %v543
  %v642 = vunpack.c.l.b16 %v544
  %v643 = vunpack.c.l.b16 %v545
  %v644 = vunpack.c.l.b16 %v546
  %v645 = vunpack.c.l.b16 %v547
  %v646 = vunpack.c.l.b16 %v548
  %v647 = vunpack.c.l.b16 %v549
  %v648 = vunpack.c.l.b16 %v550
  %v649 = vunpack.c.l.b16 %v551
  %v650 = vunpack.c.l.b16 %v552
  %v651 = vpack.c.b16 %v603, %v602
  %v652 = vpack.c.b16 %v605, %v604
  %v653 = vpack.c.b16 %v607, %v606
  %v654 = vpack.c.b16 %v609, %v608
  %v655 = vpack.c.b16 %v611, %v610
  %v656 = vpack.c.b16 %v613, %v612
  %v657 = vpack.c.b16 %v615, %v614
  %v658 = vpack.c.b16 %v617, %v616
  %v659 = vpack.c.b16 %v619, %v618
  %v660 = vpack.c.b16 %v621, %v620
  %v661 = vpack.c.b16 %v623, %v622
  %v662 = vpack.c.b16 %v625, %v624
  %v663 = vpack.c.b16 %v627, %v626
  %v664 = vpack.c.b16 %v629, %v628
  %v665 = vpack.c.b16 %v631, %v630
  %v666 = vpack.c.b16 %v633, %v632
  %v667 = vpack.c.b16 %v635, %v634
  %v668 = vpack.c.b16 %v637, %v636
  %v669 = vpack.c.b16 %v639, %v638
  %v670 = vpack.c.b16 %v641, %v640
  %v671 = vpack.c.b16 %v643, %v642
  %v672 = vpack.c.b16 %v645, %v644
  %v673 = vpack.c.b16 %v647, %v646
  %v674 = vpack.c.b16 %v649, %v648
  %v675 = vpack.c.b16 %v650, %v650
  %v677 = vsel %vm195, %v651, 0
  %v680 = vsel %vm195, %v652, 0
  %v683 = vsel %vm195, %v653, 0
  %v686 = vsel %vm195, %v654, 0
  %v689 = vsel %vm195, %v655, 0
  %v692 = vsel %vm195, %v656, 0
  %v695 = vsel %vm195, %v657, 0
  %v698 = vsel %vm195, %v658, 0
  %v701 = vsel %vm195, %v659, 0
  %v704 = vsel %vm195, %v660, 0
  %v707 = vsel %vm195, %v661, 0
  %v710 = vsel %vm195, %v662, 0
  %v713 = vsel %vm195, %v663, 0
  %v716 = vsel %vm195, %v664, 0
  %v719 = vsel %vm195, %v665, 0
  %v722 = vsel %vm195, %v666, 0
  %v725 = vsel %vm195, %v667, 0
  %v728 = vsel %vm195, %v668, 0
  %v731 = vsel %vm195, %v669, 0
  %v734 = vsel %vm195, %v670, 0
  %v737 = vsel %vm195, %v671, 0
  %v740 = vsel %vm195, %v672, 0
  %v743 = vsel %vm195, %v673, 0
  %v746 = vsel %vm195, %v674, 0
  %v749 = vsel %vm195, %v675, 0
  %751 = vmatprep.subr.bf16.mxu0 0
  %752 = vmatpush1.bf16.msra.mxu0 0
  %753 = vmatprep.subr.bf16.mxu0 0
  %754 = vmatpush1.bf16.msra.mxu0 0
  %755 = vmatprep.subr.bf16.mxu0 0
  %756 = vmatpush1.bf16.msra.mxu0 0
  %757 = vmatprep.subr.bf16.mxu0 0
  %758 = vmatpush1.bf16.msra.mxu0 0
  %759 = vmatprep.subr.bf16.mxu0 0
  %760 = vmatpush1.bf16.msra.mxu0 0
  %761 = vmatprep.subr.bf16.mxu0 0
  %762 = vmatpush1.bf16.msra.mxu0 0
  %763 = vmatprep.subr.bf16.mxu0 0
  %764 = vmatpush1.bf16.msra.mxu0 0
  %765 = vmatprep.subr.bf16.mxu0 0
  %766 = vmatpush1.bf16.msra.mxu0 %v193
  %767 = vmatprep.subr.bf16.mxu0 0
  %768 = vmatpush2.bf16.msra.mxu0 0
  %769 = vmatprep.subr.bf16.mxu0 0
  %770 = vmatpush2.bf16.msra.mxu0 0
  %771 = vmatprep.subr.bf16.mxu0 0
  %772 = vmatpush2.bf16.msra.mxu0 0
  %773 = vmatprep.subr.bf16.mxu0 0
  %774 = vmatpush2.bf16.msra.mxu0 0
  %775 = vmatprep.subr.bf16.mxu0 0
  %776 = vmatpush2.bf16.msra.mxu0 0
  %777 = vmatprep.subr.bf16.mxu0 0
  %778 = vmatpush2.bf16.msra.mxu0 0
  %779 = vmatprep.subr.bf16.mxu0 0
  %780 = vmatpush2.bf16.msra.mxu0 0
  %781 = vmatprep.subr.bf16.mxu0 0
  %782 = vmatpush2.bf16.msra.mxu0 0
  %783 = vmatprep.mubr.bf16.mxu0 0
  %784 = vmatmul.mubr.bf16.gmra.mxu0 %v677
  %v785 = vpop.f32.mrf.mxu0
  %v786 = vadd.f32 0.0, %v785
  %v787 = vpop.f32.mrf.mxu0
  %v788 = vpop.f32.mrf.mxu0
  %v789 = vadd.f32 0.0, %v788
  %v790 = vpop.f32.mrf.mxu0
  %791 = vmatprep.mubr.bf16.mxu0 0
  %792 = vmatmul.mubr.bf16.gmra.mxu0 %v680
  %v793 = vpop.f32.mrf.mxu0
  %v794 = vadd.f32 0.0, %v793
  %v795 = vpop.f32.mrf.mxu0
  %v796 = vpop.f32.mrf.mxu0
  %v797 = vadd.f32 0.0, %v796
  %v798 = vpop.f32.mrf.mxu0
  %799 = vmatprep.mubr.bf16.mxu0 0
  %800 = vmatmul.mubr.bf16.gmra.mxu0 %v683
  %v801 = vpop.f32.mrf.mxu0
  %v802 = vadd.f32 0.0, %v801
  %v803 = vpop.f32.mrf.mxu0
  %v804 = vpop.f32.mrf.mxu0
  %v805 = vadd.f32 0.0, %v804
  %v806 = vpop.f32.mrf.mxu0
  %807 = vmatprep.mubr.bf16.mxu0 0
  %808 = vmatmul.mubr.bf16.gmra.mxu0 %v686
  %v809 = vpop.f32.mrf.mxu0
  %v810 = vadd.f32 0.0, %v809
  %v811 = vpop.f32.mrf.mxu0
  %v812 = vpop.f32.mrf.mxu0
  %v813 = vadd.f32 0.0, %v812
  %v814 = vpop.f32.mrf.mxu0
  %815 = vmatprep.mubr.bf16.mxu0 0
  %816 = vmatmul.mubr.bf16.gmra.mxu0 %v689
  %v817 = vpop.f32.mrf.mxu0
  %v818 = vadd.f32 0.0, %v817
  %v819 = vpop.f32.mrf.mxu0
  %v820 = vpop.f32.mrf.mxu0
  %v821 = vadd.f32 0.0, %v820
  %v822 = vpop.f32.mrf.mxu0
  %823 = vmatprep.mubr.bf16.mxu0 0
  %824 = vmatmul.mubr.bf16.gmra.mxu0 %v692
  %v825 = vpop.f32.mrf.mxu0
  %v826 = vadd.f32 0.0, %v825
  %v827 = vpop.f32.mrf.mxu0
  %v828 = vpop.f32.mrf.mxu0
  %v829 = vadd.f32 0.0, %v828
  %v830 = vpop.f32.mrf.mxu0
  %831 = vmatprep.mubr.bf16.mxu0 0
  %832 = vmatmul.mubr.bf16.gmra.mxu0 %v695
  %v833 = vpop.f32.mrf.mxu0
  %v834 = vadd.f32 0.0, %v833
  %v835 = vpop.f32.mrf.mxu0
  %v836 = vpop.f32.mrf.mxu0
  %v837 = vadd.f32 0.0, %v836
  %v838 = vpop.f32.mrf.mxu0
  %839 = vmatprep.mubr.bf16.mxu0 0
  %840 = vmatmul.mubr.bf16.gmra.mxu0 %v698
  %v841 = vpop.f32.mrf.mxu0
  %v842 = vadd.f32 0.0, %v841
  %v843 = vpop.f32.mrf.mxu0
  %v844 = vpop.f32.mrf.mxu0
  %v845 = vadd.f32 0.0, %v844
  %v846 = vpop.f32.mrf.mxu0
  %847 = vmatprep.mubr.bf16.mxu0 0
  %848 = vmatmul.mubr.bf16.gmra.mxu0 %v701
  %v849 = vpop.f32.mrf.mxu0
  %v850 = vadd.f32 0.0, %v849
  %v851 = vpop.f32.mrf.mxu0
  %v852 = vpop.f32.mrf.mxu0
  %v853 = vadd.f32 0.0, %v852
  %v854 = vpop.f32.mrf.mxu0
  %855 = vmatprep.mubr.bf16.mxu0 0
  %856 = vmatmul.mubr.bf16.gmra.mxu0 %v704
  %v857 = vpop.f32.mrf.mxu0
  %v858 = vadd.f32 0.0, %v857
  %v859 = vpop.f32.mrf.mxu0
  %v860 = vpop.f32.mrf.mxu0
  %v861 = vadd.f32 0.0, %v860
  %v862 = vpop.f32.mrf.mxu0
  %863 = vmatprep.mubr.bf16.mxu0 0
  %864 = vmatmul.mubr.bf16.gmra.mxu0 %v707
  %v865 = vpop.f32.mrf.mxu0
  %v866 = vadd.f32 0.0, %v865
  %v867 = vpop.f32.mrf.mxu0
  %v868 = vpop.f32.mrf.mxu0
  %v869 = vadd.f32 0.0, %v868
  %v870 = vpop.f32.mrf.mxu0
  %871 = vmatprep.mubr.bf16.mxu0 0
  %872 = vmatmul.mubr.bf16.gmra.mxu0 %v710
  %v873 = vpop.f32.mrf.mxu0
  %v874 = vadd.f32 0.0, %v873
  %v875 = vpop.f32.mrf.mxu0
  %v876 = vpop.f32.mrf.mxu0
  %v877 = vadd.f32 0.0, %v876
  %v878 = vpop.f32.mrf.mxu0
  %879 = vmatprep.mubr.bf16.mxu0 0
  %880 = vmatmul.mubr.bf16.gmra.mxu0 %v713
  %v881 = vpop.f32.mrf.mxu0
  %v882 = vadd.f32 0.0, %v881
  %v883 = vpop.f32.mrf.mxu0
  %v884 = vpop.f32.mrf.mxu0
  %v885 = vadd.f32 0.0, %v884
  %v886 = vpop.f32.mrf.mxu0
  %887 = vmatprep.mubr.bf16.mxu0 0
  %888 = vmatmul.mubr.bf16.gmra.mxu0 %v716
  %v889 = vpop.f32.mrf.mxu0
  %v890 = vadd.f32 0.0, %v889
  %v891 = vpop.f32.mrf.mxu0
  %v892 = vpop.f32.mrf.mxu0
  %v893 = vadd.f32 0.0, %v892
  %v894 = vpop.f32.mrf.mxu0
  %895 = vmatprep.mubr.bf16.mxu0 0
  %896 = vmatmul.mubr.bf16.gmra.mxu0 %v719
  %v897 = vpop.f32.mrf.mxu0
  %v898 = vadd.f32 0.0, %v897
  %v899 = vpop.f32.mrf.mxu0
  %v900 = vpop.f32.mrf.mxu0
  %v901 = vadd.f32 0.0, %v900
  %v902 = vpop.f32.mrf.mxu0
  %903 = vmatprep.mubr.bf16.mxu0 0
  %904 = vmatmul.mubr.bf16.gmra.mxu0 %v722
  %v905 = vpop.f32.mrf.mxu0
  %v906 = vadd.f32 0.0, %v905
  %v907 = vpop.f32.mrf.mxu0
  %v908 = vpop.f32.mrf.mxu0
  %v909 = vadd.f32 0.0, %v908
  %v910 = vpop.f32.mrf.mxu0
  %911 = vmatprep.mubr.bf16.mxu0 0
  %912 = vmatmul.mubr.bf16.gmra.mxu0 %v725
  %v913 = vpop.f32.mrf.mxu0
  %v914 = vadd.f32 0.0, %v913
  %v915 = vpop.f32.mrf.mxu0
  %v916 = vpop.f32.mrf.mxu0
  %v917 = vadd.f32 0.0, %v916
  %v918 = vpop.f32.mrf.mxu0
  %919 = vmatprep.mubr.bf16.mxu0 0
  %920 = vmatmul.mubr.bf16.gmra.mxu0 %v728
  %v921 = vpop.f32.mrf.mxu0
  %v922 = vadd.f32 0.0, %v921
  %v923 = vpop.f32.mrf.mxu0
  %v924 = vpop.f32.mrf.mxu0
  %v925 = vadd.f32 0.0, %v924
  %v926 = vpop.f32.mrf.mxu0
  %927 = vmatprep.mubr.bf16.mxu0 0
  %928 = vmatmul.mubr.bf16.gmra.mxu0 %v731
  %v929 = vpop.f32.mrf.mxu0
  %v930 = vadd.f32 0.0, %v929
  %v931 = vpop.f32.mrf.mxu0
  %v932 = vpop.f32.mrf.mxu0
  %v933 = vadd.f32 0.0, %v932
  %v934 = vpop.f32.mrf.mxu0
  %935 = vmatprep.mubr.bf16.mxu0 0
  %936 = vmatmul.mubr.bf16.gmra.mxu0 %v734
  %v937 = vpop.f32.mrf.mxu0
  %v938 = vadd.f32 0.0, %v937
  %v939 = vpop.f32.mrf.mxu0
  %v940 = vpop.f32.mrf.mxu0
  %v941 = vadd.f32 0.0, %v940
  %v942 = vpop.f32.mrf.mxu0
  %943 = vmatprep.mubr.bf16.mxu0 0
  %944 = vmatmul.mubr.bf16.gmra.mxu0 %v737
  %v945 = vpop.f32.mrf.mxu0
  %v946 = vadd.f32 0.0, %v945
  %v947 = vpop.f32.mrf.mxu0
  %v948 = vpop.f32.mrf.mxu0
  %v949 = vadd.f32 0.0, %v948
  %v950 = vpop.f32.mrf.mxu0
  %951 = vmatprep.mubr.bf16.mxu0 0
  %952 = vmatmul.mubr.bf16.gmra.mxu0 %v740
  %v953 = vpop.f32.mrf.mxu0
  %v954 = vadd.f32 0.0, %v953
  %v955 = vpop.f32.mrf.mxu0
  %v956 = vpop.f32.mrf.mxu0
  %v957 = vadd.f32 0.0, %v956
  %v958 = vpop.f32.mrf.mxu0
  %959 = vmatprep.mubr.bf16.mxu0 0
  %960 = vmatmul.mubr.bf16.gmra.mxu0 %v743
  %v961 = vpop.f32.mrf.mxu0
  %v962 = vadd.f32 0.0, %v961
  %v963 = vpop.f32.mrf.mxu0
  %v964 = vpop.f32.mrf.mxu0
  %v965 = vadd.f32 0.0, %v964
  %v966 = vpop.f32.mrf.mxu0
  %967 = vmatprep.mubr.bf16.mxu0 0
  %968 = vmatmul.mubr.bf16.gmra.mxu0 %v746
  %v969 = vpop.f32.mrf.mxu0
  %v970 = vadd.f32 0.0, %v969
  %v971 = vpop.f32.mrf.mxu0
  %v972 = vpop.f32.mrf.mxu0
  %v973 = vadd.f32 0.0, %v972
  %v974 = vpop.f32.mrf.mxu0
  %975 = vmatprep.mubr.bf16.mxu0 0
  %976 = vmatmul.mubr.bf16.gmra.mxu0 %v749
  %v977 = vpop.f32.mrf.mxu0
  %v978 = vadd.f32 0.0, %v977
  %v979 = vpop.f32.mrf.mxu0
  %v980 = vpop.f32.mrf.mxu0
  %v981 = vpop.f32.mrf.mxu0
  %982 = vdwg.mxu0
  %v983 = vmax.f32 %v306, %v786
  %v984 = vmax.f32 %v309, %v789
  %v985 = vmax.f32 %v314, %v794
  %v986 = vmax.f32 %v317, %v797
  %v987 = vmax.f32 %v322, %v802
  %v988 = vmax.f32 %v325, %v805
  %v989 = vmax.f32 %v330, %v810
  %v990 = vmax.f32 %v333, %v813
  %v991 = vmax.f32 %v338, %v818
  %v992 = vmax.f32 %v341, %v821
  %v993 = vmax.f32 %v346, %v826
  %v994 = vmax.f32 %v349, %v829
  %v995 = vmax.f32 %v354, %v834
  %v996 = vmax.f32 %v357, %v837
  %v997 = vmax.f32 %v362, %v842
  %v998 = vmax.f32 %v365, %v845
  %v999 = vmax.f32 %v370, %v850
  %v1000 = vmax.f32 %v373, %v853
  %v1001 = vmax.f32 %v378, %v858
  %v1002 = vmax.f32 %v381, %v861
  %v1003 = vmax.f32 %v386, %v866
  %v1004 = vmax.f32 %v389, %v869
  %v1005 = vmax.f32 %v394, %v874
  %v1006 = vmax.f32 %v397, %v877
  %v1007 = vmax.f32 %v402, %v882
  %v1008 = vmax.f32 %v405, %v885
  %v1009 = vmax.f32 %v410, %v890
  %v1010 = vmax.f32 %v413, %v893
  %v1011 = vmax.f32 %v418, %v898
  %v1012 = vmax.f32 %v421, %v901
  %v1013 = vmax.f32 %v426, %v906
  %v1014 = vmax.f32 %v429, %v909
  %v1015 = vmax.f32 %v434, %v914
  %v1016 = vmax.f32 %v437, %v917
  %v1017 = vmax.f32 %v442, %v922
  %v1018 = vmax.f32 %v445, %v925
  %v1019 = vmax.f32 %v450, %v930
  %v1020 = vmax.f32 %v453, %v933
  %v1021 = vmax.f32 %v458, %v938
  %v1022 = vmax.f32 %v461, %v941
  %v1023 = vmax.f32 %v466, %v946
  %v1024 = vmax.f32 %v469, %v949
  %v1025 = vmax.f32 %v474, %v954
  %v1026 = vmax.f32 %v477, %v957
  %v1027 = vmax.f32 %v482, %v962
  %v1028 = vmax.f32 %v485, %v965
  %v1029 = vmax.f32 %v490, %v970
  %v1030 = vmax.f32 %v493, %v973
  %v1031 = vmax.f32 %v498, %v978
  %s1032 = scalar_lea.vmem %s0, 392
  %v1033 = vld [vmem:[%s1032] sm:$0xf]
  %v1034 = vld [vmem:[%s1032 + $0x4] sm:$0xf]
  %v1035 = vld [vmem:[%s1032 + $0x8] sm:$0xf]
  %v1036 = vld [vmem:[%s1032 + $0xc] sm:$0xf]
  %v1037 = vld [vmem:[%s1032 + $0x10] sm:$0xf]
  %v1038 = vld [vmem:[%s1032 + $0x14] sm:$0xf]
  %v1039 = vld [vmem:[%s1032 + $0x18] sm:$0xf]
  %v1040 = vld [vmem:[%s1032 + $0x1c] sm:$0xf]
  %v1041 = vld [vmem:[%s1032 + $0x20] sm:$0xf]
  %v1042 = vld [vmem:[%s1032 + $0x24] sm:$0xf]
  %v1043 = vld [vmem:[%s1032 + $0x28] sm:$0xf]
  %v1044 = vld [vmem:[%s1032 + $0x2c] sm:$0xf]
  %v1045 = vld [vmem:[%s1032 + $0x30] sm:$0xf]
  %v1046 = vld [vmem:[%s1032 + $0x34] sm:$0xf]
  %v1047 = vld [vmem:[%s1032 + $0x38] sm:$0xf]
  %v1048 = vld [vmem:[%s1032 + $0x3c] sm:$0xf]
  %v1049 = vld [vmem:[%s1032 + $0x40] sm:$0xf]
  %v1050 = vld [vmem:[%s1032 + $0x44] sm:$0xf]
  %v1051 = vld [vmem:[%s1032 + $0x48] sm:$0xf]
  %v1052 = vld [vmem:[%s1032 + $0x4c] sm:$0xf]
  %v1053 = vld [vmem:[%s1032 + $0x50] sm:$0xf]
  %v1054 = vld [vmem:[%s1032 + $0x54] sm:$0xf]
  %v1055 = vld [vmem:[%s1032 + $0x58] sm:$0xf]
  %v1056 = vld [vmem:[%s1032 + $0x5c] sm:$0xf]
  %v1057 = vld [vmem:[%s1032 + $0x60] sm:$0xf]
  %v1058 = vld [vmem:[%s1032 + $0x64] sm:$0xf]
  %v1059 = vld [vmem:[%s1032 + $0x68] sm:$0xf]
  %v1060 = vld [vmem:[%s1032 + $0x6c] sm:$0xf]
  %v1061 = vld [vmem:[%s1032 + $0x70] sm:$0xf]
  %v1062 = vld [vmem:[%s1032 + $0x74] sm:$0xf]
  %v1063 = vld [vmem:[%s1032 + $0x78] sm:$0xf]
  %v1064 = vld [vmem:[%s1032 + $0x7c] sm:$0xf]
  %v1065 = vld [vmem:[%s1032 + $0x80] sm:$0xf]
  %v1066 = vld [vmem:[%s1032 + $0x84] sm:$0xf]
  %v1067 = vld [vmem:[%s1032 + $0x88] sm:$0xf]
  %v1068 = vld [vmem:[%s1032 + $0x8c] sm:$0xf]
  %v1069 = vld [vmem:[%s1032 + $0x90] sm:$0xf]
  %v1070 = vld [vmem:[%s1032 + $0x94] sm:$0xf]
  %v1071 = vld [vmem:[%s1032 + $0x98] sm:$0xf]
  %v1072 = vld [vmem:[%s1032 + $0x9c] sm:$0xf]
  %v1073 = vld [vmem:[%s1032 + $0xa0] sm:$0xf]
  %v1074 = vld [vmem:[%s1032 + $0xa4] sm:$0xf]
  %v1075 = vld [vmem:[%s1032 + $0xa8] sm:$0xf]
  %v1076 = vld [vmem:[%s1032 + $0xac] sm:$0xf]
  %v1077 = vld [vmem:[%s1032 + $0xb0] sm:$0xf]
  %v1078 = vld [vmem:[%s1032 + $0xb4] sm:$0xf]
  %v1079 = vld [vmem:[%s1032 + $0xb8] sm:$0xf]
  %v1080 = vld [vmem:[%s1032 + $0xbc] sm:$0xf]
  %v1081 = vld [vmem:[%s1032 + $0xc0] sm:$0xf]
  %v1131 = vunpack.c.l.b16 %v1033
  %v1132 = vunpack.c.l.b16 %v1034
  %v1133 = vunpack.c.l.b16 %v1035
  %v1134 = vunpack.c.l.b16 %v1036
  %v1135 = vunpack.c.l.b16 %v1037
  %v1136 = vunpack.c.l.b16 %v1038
  %v1137 = vunpack.c.l.b16 %v1039
  %v1138 = vunpack.c.l.b16 %v1040
  %v1139 = vunpack.c.l.b16 %v1041
  %v1140 = vunpack.c.l.b16 %v1042
  %v1141 = vunpack.c.l.b16 %v1043
  %v1142 = vunpack.c.l.b16 %v1044
  %v1143 = vunpack.c.l.b16 %v1045
  %v1144 = vunpack.c.l.b16 %v1046
  %v1145 = vunpack.c.l.b16 %v1047
  %v1146 = vunpack.c.l.b16 %v1048
  %v1147 = vunpack.c.l.b16 %v1049
  %v1148 = vunpack.c.l.b16 %v1050
  %v1149 = vunpack.c.l.b16 %v1051
  %v1150 = vunpack.c.l.b16 %v1052
  %v1151 = vunpack.c.l.b16 %v1053
  %v1152 = vunpack.c.l.b16 %v1054
  %v1153 = vunpack.c.l.b16 %v1055
  %v1154 = vunpack.c.l.b16 %v1056
  %v1155 = vunpack.c.l.b16 %v1057
  %v1156 = vunpack.c.l.b16 %v1058
  %v1157 = vunpack.c.l.b16 %v1059
  %v1158 = vunpack.c.l.b16 %v1060
  %v1159 = vunpack.c.l.b16 %v1061
  %v1160 = vunpack.c.l.b16 %v1062
  %v1161 = vunpack.c.l.b16 %v1063
  %v1162 = vunpack.c.l.b16 %v1064
  %v1163 = vunpack.c.l.b16 %v1065
  %v1164 = vunpack.c.l.b16 %v1066
  %v1165 = vunpack.c.l.b16 %v1067
  %v1166 = vunpack.c.l.b16 %v1068
  %v1167 = vunpack.c.l.b16 %v1069
  %v1168 = vunpack.c.l.b16 %v1070
  %v1169 = vunpack.c.l.b16 %v1071
  %v1170 = vunpack.c.l.b16 %v1072
  %v1171 = vunpack.c.l.b16 %v1073
  %v1172 = vunpack.c.l.b16 %v1074
  %v1173 = vunpack.c.l.b16 %v1075
  %v1174 = vunpack.c.l.b16 %v1076
  %v1175 = vunpack.c.l.b16 %v1077
  %v1176 = vunpack.c.l.b16 %v1078
  %v1177 = vunpack.c.l.b16 %v1079
  %v1178 = vunpack.c.l.b16 %v1080
  %v1179 = vunpack.c.l.b16 %v1081
  %v1180 = vpack.c.b16 %v1132, %v1131
  %v1181 = vpack.c.b16 %v1134, %v1133
  %v1182 = vpack.c.b16 %v1136, %v1135
  %v1183 = vpack.c.b16 %v1138, %v1137
  %v1184 = vpack.c.b16 %v1140, %v1139
  %v1185 = vpack.c.b16 %v1142, %v1141
  %v1186 = vpack.c.b16 %v1144, %v1143
  %v1187 = vpack.c.b16 %v1146, %v1145
  %v1188 = vpack.c.b16 %v1148, %v1147
  %v1189 = vpack.c.b16 %v1150, %v1149
  %v1190 = vpack.c.b16 %v1152, %v1151
  %v1191 = vpack.c.b16 %v1154, %v1153
  %v1192 = vpack.c.b16 %v1156, %v1155
  %v1193 = vpack.c.b16 %v1158, %v1157
  %v1194 = vpack.c.b16 %v1160, %v1159
  %v1195 = vpack.c.b16 %v1162, %v1161
  %v1196 = vpack.c.b16 %v1164, %v1163
  %v1197 = vpack.c.b16 %v1166, %v1165
  %v1198 = vpack.c.b16 %v1168, %v1167
  %v1199 = vpack.c.b16 %v1170, %v1169
  %v1200 = vpack.c.b16 %v1172, %v1171
  %v1201 = vpack.c.b16 %v1174, %v1173
  %v1202 = vpack.c.b16 %v1176, %v1175
  %v1203 = vpack.c.b16 %v1178, %v1177
  %v1204 = vpack.c.b16 %v1179, %v1179
  %v1206 = vsel %vm195, %v1180, 0
  %v1209 = vsel %vm195, %v1181, 0
  %v1212 = vsel %vm195, %v1182, 0
  %v1215 = vsel %vm195, %v1183, 0
  %v1218 = vsel %vm195, %v1184, 0
  %v1221 = vsel %vm195, %v1185, 0
  %v1224 = vsel %vm195, %v1186, 0
  %v1227 = vsel %vm195, %v1187, 0
  %v1230 = vsel %vm195, %v1188, 0
  %v1233 = vsel %vm195, %v1189, 0
  %v1236 = vsel %vm195, %v1190, 0
  %v1239 = vsel %vm195, %v1191, 0
  %v1242 = vsel %vm195, %v1192, 0
  %v1245 = vsel %vm195, %v1193, 0
  %v1248 = vsel %vm195, %v1194, 0
  %v1251 = vsel %vm195, %v1195, 0
  %v1254 = vsel %vm195, %v1196, 0
  %v1257 = vsel %vm195, %v1197, 0
  %v1260 = vsel %vm195, %v1198, 0
  %v1263 = vsel %vm195, %v1199, 0
  %v1266 = vsel %vm195, %v1200, 0
  %v1269 = vsel %vm195, %v1201, 0
  %v1272 = vsel %vm195, %v1202, 0
  %v1275 = vsel %vm195, %v1203, 0
  %v1278 = vsel %vm195, %v1204, 0
  %1280 = vmatprep.subr.bf16.mxu0 0
  %1281 = vmatpush1.bf16.msra.mxu0 0
  %1282 = vmatprep.subr.bf16.mxu0 0
  %1283 = vmatpush1.bf16.msra.mxu0 0
  %1284 = vmatprep.subr.bf16.mxu0 0
  %1285 = vmatpush1.bf16.msra.mxu0 0
  %1286 = vmatprep.subr.bf16.mxu0 0
  %1287 = vmatpush1.bf16.msra.mxu0 0
  %1288 = vmatprep.subr.bf16.mxu0 0
  %1289 = vmatpush1.bf16.msra.mxu0 0
  %1290 = vmatprep.subr.bf16.mxu0 0
  %1291 = vmatpush1.bf16.msra.mxu0 0
  %1292 = vmatprep.subr.bf16.mxu0 0
  %1293 = vmatpush1.bf16.msra.mxu0 0
  %1294 = vmatprep.subr.bf16.mxu0 0
  %1295 = vmatpush1.bf16.msra.mxu0 %v193
  %1296 = vmatprep.subr.bf16.mxu0 0
  %1297 = vmatpush2.bf16.msra.mxu0 0
  %1298 = vmatprep.subr.bf16.mxu0 0
  %1299 = vmatpush2.bf16.msra.mxu0 0
  %1300 = vmatprep.subr.bf16.mxu0 0
  %1301 = vmatpush2.bf16.msra.mxu0 0
  %1302 = vmatprep.subr.bf16.mxu0 0
  %1303 = vmatpush2.bf16.msra.mxu0 0
  %1304 = vmatprep.subr.bf16.mxu0 0
  %1305 = vmatpush2.bf16.msra.mxu0 0
  %1306 = vmatprep.subr.bf16.mxu0 0
  %1307 = vmatpush2.bf16.msra.mxu0 0
  %1308 = vmatprep.subr.bf16.mxu0 0
  %1309 = vmatpush2.bf16.msra.mxu0 0
  %1310 = vmatprep.subr.bf16.mxu0 0
  %1311 = vmatpush2.bf16.msra.mxu0 0
  %1312 = vmatprep.mubr.bf16.mxu0 0
  %1313 = vmatmul.mubr.bf16.gmra.mxu0 %v1206
  %v1314 = vpop.f32.mrf.mxu0
  %v1315 = vadd.f32 0.0, %v1314
  %v1316 = vpop.f32.mrf.mxu0
  %v1317 = vpop.f32.mrf.mxu0
  %v1318 = vadd.f32 0.0, %v1317
  %v1319 = vpop.f32.mrf.mxu0
  %1320 = vmatprep.mubr.bf16.mxu0 0
  %1321 = vmatmul.mubr.bf16.gmra.mxu0 %v1209
  %v1322 = vpop.f32.mrf.mxu0
  %v1323 = vadd.f32 0.0, %v1322
  %v1324 = vpop.f32.mrf.mxu0
  %v1325 = vpop.f32.mrf.mxu0
  %v1326 = vadd.f32 0.0, %v1325
  %v1327 = vpop.f32.mrf.mxu0
  %1328 = vmatprep.mubr.bf16.mxu0 0
  %1329 = vmatmul.mubr.bf16.gmra.mxu0 %v1212
  %v1330 = vpop.f32.mrf.mxu0
  %v1331 = vadd.f32 0.0, %v1330
  %v1332 = vpop.f32.mrf.mxu0
  %v1333 = vpop.f32.mrf.mxu0
  %v1334 = vadd.f32 0.0, %v1333
  %v1335 = vpop.f32.mrf.mxu0
  %1336 = vmatprep.mubr.bf16.mxu0 0
  %1337 = vmatmul.mubr.bf16.gmra.mxu0 %v1215
  %v1338 = vpop.f32.mrf.mxu0
  %v1339 = vadd.f32 0.0, %v1338
  %v1340 = vpop.f32.mrf.mxu0
  %v1341 = vpop.f32.mrf.mxu0
  %v1342 = vadd.f32 0.0, %v1341
  %v1343 = vpop.f32.mrf.mxu0
  %1344 = vmatprep.mubr.bf16.mxu0 0
  %1345 = vmatmul.mubr.bf16.gmra.mxu0 %v1218
  %v1346 = vpop.f32.mrf.mxu0
  %v1347 = vadd.f32 0.0, %v1346
  %v1348 = vpop.f32.mrf.mxu0
  %v1349 = vpop.f32.mrf.mxu0
  %v1350 = vadd.f32 0.0, %v1349
  %v1351 = vpop.f32.mrf.mxu0
  %1352 = vmatprep.mubr.bf16.mxu0 0
  %1353 = vmatmul.mubr.bf16.gmra.mxu0 %v1221
  %v1354 = vpop.f32.mrf.mxu0
  %v1355 = vadd.f32 0.0, %v1354
  %v1356 = vpop.f32.mrf.mxu0
  %v1357 = vpop.f32.mrf.mxu0
  %v1358 = vadd.f32 0.0, %v1357
  %v1359 = vpop.f32.mrf.mxu0
  %1360 = vmatprep.mubr.bf16.mxu0 0
  %1361 = vmatmul.mubr.bf16.gmra.mxu0 %v1224
  %v1362 = vpop.f32.mrf.mxu0
  %v1363 = vadd.f32 0.0, %v1362
  %v1364 = vpop.f32.mrf.mxu0
  %v1365 = vpop.f32.mrf.mxu0
  %v1366 = vadd.f32 0.0, %v1365
  %v1367 = vpop.f32.mrf.mxu0
  %1368 = vmatprep.mubr.bf16.mxu0 0
  %1369 = vmatmul.mubr.bf16.gmra.mxu0 %v1227
  %v1370 = vpop.f32.mrf.mxu0
  %v1371 = vadd.f32 0.0, %v1370
  %v1372 = vpop.f32.mrf.mxu0
  %v1373 = vpop.f32.mrf.mxu0
  %v1374 = vadd.f32 0.0, %v1373
  %v1375 = vpop.f32.mrf.mxu0
  %1376 = vmatprep.mubr.bf16.mxu0 0
  %1377 = vmatmul.mubr.bf16.gmra.mxu0 %v1230
  %v1378 = vpop.f32.mrf.mxu0
  %v1379 = vadd.f32 0.0, %v1378
  %v1380 = vpop.f32.mrf.mxu0
  %v1381 = vpop.f32.mrf.mxu0
  %v1382 = vadd.f32 0.0, %v1381
  %v1383 = vpop.f32.mrf.mxu0
  %1384 = vmatprep.mubr.bf16.mxu0 0
  %1385 = vmatmul.mubr.bf16.gmra.mxu0 %v1233
  %v1386 = vpop.f32.mrf.mxu0
  %v1387 = vadd.f32 0.0, %v1386
  %v1388 = vpop.f32.mrf.mxu0
  %v1389 = vpop.f32.mrf.mxu0
  %v1390 = vadd.f32 0.0, %v1389
  %v1391 = vpop.f32.mrf.mxu0
  %1392 = vmatprep.mubr.bf16.mxu0 0
  %1393 = vmatmul.mubr.bf16.gmra.mxu0 %v1236
  %v1394 = vpop.f32.mrf.mxu0
  %v1395 = vadd.f32 0.0, %v1394
  %v1396 = vpop.f32.mrf.mxu0
  %v1397 = vpop.f32.mrf.mxu0
  %v1398 = vadd.f32 0.0, %v1397
  %v1399 = vpop.f32.mrf.mxu0
  %1400 = vmatprep.mubr.bf16.mxu0 0
  %1401 = vmatmul.mubr.bf16.gmra.mxu0 %v1239
  %v1402 = vpop.f32.mrf.mxu0
  %v1403 = vadd.f32 0.0, %v1402
  %v1404 = vpop.f32.mrf.mxu0
  %v1405 = vpop.f32.mrf.mxu0
  %v1406 = vadd.f32 0.0, %v1405
  %v1407 = vpop.f32.mrf.mxu0
  %1408 = vmatprep.mubr.bf16.mxu0 0
  %1409 = vmatmul.mubr.bf16.gmra.mxu0 %v1242
  %v1410 = vpop.f32.mrf.mxu0
  %v1411 = vadd.f32 0.0, %v1410
  %v1412 = vpop.f32.mrf.mxu0
  %v1413 = vpop.f32.mrf.mxu0
  %v1414 = vadd.f32 0.0, %v1413
  %v1415 = vpop.f32.mrf.mxu0
  %1416 = vmatprep.mubr.bf16.mxu0 0
  %1417 = vmatmul.mubr.bf16.gmra.mxu0 %v1245
  %v1418 = vpop.f32.mrf.mxu0
  %v1419 = vadd.f32 0.0, %v1418
  %v1420 = vpop.f32.mrf.mxu0
  %v1421 = vpop.f32.mrf.mxu0
  %v1422 = vadd.f32 0.0, %v1421
  %v1423 = vpop.f32.mrf.mxu0
  %1424 = vmatprep.mubr.bf16.mxu0 0
  %1425 = vmatmul.mubr.bf16.gmra.mxu0 %v1248
  %v1426 = vpop.f32.mrf.mxu0
  %v1427 = vadd.f32 0.0, %v1426
  %v1428 = vpop.f32.mrf.mxu0
  %v1429 = vpop.f32.mrf.mxu0
  %v1430 = vadd.f32 0.0, %v1429
  %v1431 = vpop.f32.mrf.mxu0
  %1432 = vmatprep.mubr.bf16.mxu0 0
  %1433 = vmatmul.mubr.bf16.gmra.mxu0 %v1251
  %v1434 = vpop.f32.mrf.mxu0
  %v1435 = vadd.f32 0.0, %v1434
  %v1436 = vpop.f32.mrf.mxu0
  %v1437 = vpop.f32.mrf.mxu0
  %v1438 = vadd.f32 0.0, %v1437
  %v1439 = vpop.f32.mrf.mxu0
  %1440 = vmatprep.mubr.bf16.mxu0 0
  %1441 = vmatmul.mubr.bf16.gmra.mxu0 %v1254
  %v1442 = vpop.f32.mrf.mxu0
  %v1443 = vadd.f32 0.0, %v1442
  %v1444 = vpop.f32.mrf.mxu0
  %v1445 = vpop.f32.mrf.mxu0
  %v1446 = vadd.f32 0.0, %v1445
  %v1447 = vpop.f32.mrf.mxu0
  %1448 = vmatprep.mubr.bf16.mxu0 0
  %1449 = vmatmul.mubr.bf16.gmra.mxu0 %v1257
  %v1450 = vpop.f32.mrf.mxu0
  %v1451 = vadd.f32 0.0, %v1450
  %v1452 = vpop.f32.mrf.mxu0
  %v1453 = vpop.f32.mrf.mxu0
  %v1454 = vadd.f32 0.0, %v1453
  %v1455 = vpop.f32.mrf.mxu0
  %1456 = vmatprep.mubr.bf16.mxu0 0
  %1457 = vmatmul.mubr.bf16.gmra.mxu0 %v1260
  %v1458 = vpop.f32.mrf.mxu0
  %v1459 = vadd.f32 0.0, %v1458
  %v1460 = vpop.f32.mrf.mxu0
  %v1461 = vpop.f32.mrf.mxu0
  %v1462 = vadd.f32 0.0, %v1461
  %v1463 = vpop.f32.mrf.mxu0
  %1464 = vmatprep.mubr.bf16.mxu0 0
  %1465 = vmatmul.mubr.bf16.gmra.mxu0 %v1263
  %v1466 = vpop.f32.mrf.mxu0
  %v1467 = vadd.f32 0.0, %v1466
  %v1468 = vpop.f32.mrf.mxu0
  %v1469 = vpop.f32.mrf.mxu0
  %v1470 = vadd.f32 0.0, %v1469
  %v1471 = vpop.f32.mrf.mxu0
  %1472 = vmatprep.mubr.bf16.mxu0 0
  %1473 = vmatmul.mubr.bf16.gmra.mxu0 %v1266
  %v1474 = vpop.f32.mrf.mxu0
  %v1475 = vadd.f32 0.0, %v1474
  %v1476 = vpop.f32.mrf.mxu0
  %v1477 = vpop.f32.mrf.mxu0
  %v1478 = vadd.f32 0.0, %v1477
  %v1479 = vpop.f32.mrf.mxu0
  %1480 = vmatprep.mubr.bf16.mxu0 0
  %1481 = vmatmul.mubr.bf16.gmra.mxu0 %v1269
  %v1482 = vpop.f32.mrf.mxu0
  %v1483 = vadd.f32 0.0, %v1482
  %v1484 = vpop.f32.mrf.mxu0
  %v1485 = vpop.f32.mrf.mxu0
  %v1486 = vadd.f32 0.0, %v1485
  %v1487 = vpop.f32.mrf.mxu0
  %1488 = vmatprep.mubr.bf16.mxu0 0
  %1489 = vmatmul.mubr.bf16.gmra.mxu0 %v1272
  %v1490 = vpop.f32.mrf.mxu0
  %v1491 = vadd.f32 0.0, %v1490
  %v1492 = vpop.f32.mrf.mxu0
  %v1493 = vpop.f32.mrf.mxu0
  %v1494 = vadd.f32 0.0, %v1493
  %v1495 = vpop.f32.mrf.mxu0
  %1496 = vmatprep.mubr.bf16.mxu0 0
  %1497 = vmatmul.mubr.bf16.gmra.mxu0 %v1275
  %v1498 = vpop.f32.mrf.mxu0
  %v1499 = vadd.f32 0.0, %v1498
  %v1500 = vpop.f32.mrf.mxu0
  %v1501 = vpop.f32.mrf.mxu0
  %v1502 = vadd.f32 0.0, %v1501
  %v1503 = vpop.f32.mrf.mxu0
  %1504 = vmatprep.mubr.bf16.mxu0 0
  %1505 = vmatmul.mubr.bf16.gmra.mxu0 %v1278
  %v1506 = vpop.f32.mrf.mxu0
  %v1507 = vadd.f32 0.0, %v1506
  %v1508 = vpop.f32.mrf.mxu0
  %v1509 = vpop.f32.mrf.mxu0
  %v1510 = vpop.f32.mrf.mxu0
  %1511 = vdwg.mxu0
  %v1512 = vmax.f32 %v983, %v1315
  %v1513 = vmax.f32 %v984, %v1318
  %v1514 = vmax.f32 %v985, %v1323
  %v1515 = vmax.f32 %v986, %v1326
  %v1516 = vmax.f32 %v987, %v1331
  %v1517 = vmax.f32 %v988, %v1334
  %v1518 = vmax.f32 %v989, %v1339
  %v1519 = vmax.f32 %v990, %v1342
  %v1520 = vmax.f32 %v991, %v1347
  %v1521 = vmax.f32 %v992, %v1350
  %v1522 = vmax.f32 %v993, %v1355
  %v1523 = vmax.f32 %v994, %v1358
  %v1524 = vmax.f32 %v995, %v1363
  %v1525 = vmax.f32 %v996, %v1366
  %v1526 = vmax.f32 %v997, %v1371
  %v1527 = vmax.f32 %v998, %v1374
  %v1528 = vmax.f32 %v999, %v1379
  %v1529 = vmax.f32 %v1000, %v1382
  %v1530 = vmax.f32 %v1001, %v1387
  %v1531 = vmax.f32 %v1002, %v1390
  %v1532 = vmax.f32 %v1003, %v1395
  %v1533 = vmax.f32 %v1004, %v1398
  %v1534 = vmax.f32 %v1005, %v1403
  %v1535 = vmax.f32 %v1006, %v1406
  %v1536 = vmax.f32 %v1007, %v1411
  %v1537 = vmax.f32 %v1008, %v1414
  %v1538 = vmax.f32 %v1009, %v1419
  %v1539 = vmax.f32 %v1010, %v1422
  %v1540 = vmax.f32 %v1011, %v1427
  %v1541 = vmax.f32 %v1012, %v1430
  %v1542 = vmax.f32 %v1013, %v1435
  %v1543 = vmax.f32 %v1014, %v1438
  %v1544 = vmax.f32 %v1015, %v1443
  %v1545 = vmax.f32 %v1016, %v1446
  %v1546 = vmax.f32 %v1017, %v1451
  %v1547 = vmax.f32 %v1018, %v1454
  %v1548 = vmax.f32 %v1019, %v1459
  %v1549 = vmax.f32 %v1020, %v1462
  %v1550 = vmax.f32 %v1021, %v1467
  %v1551 = vmax.f32 %v1022, %v1470
  %v1552 = vmax.f32 %v1023, %v1475
  %v1553 = vmax.f32 %v1024, %v1478
  %v1554 = vmax.f32 %v1025, %v1483
  %v1555 = vmax.f32 %v1026, %v1486
  %v1556 = vmax.f32 %v1027, %v1491
  %v1557 = vmax.f32 %v1028, %v1494
  %v1558 = vmax.f32 %v1029, %v1499
  %v1559 = vmax.f32 %v1030, %v1502
  %v1560 = vmax.f32 %v1031, %v1507
  %s1561 = scalar_lea.vmem %s0, 588
  %v1562 = vld [vmem:[%s1561] sm:$0xf]
  %v1563 = vld [vmem:[%s1561 + $0x4] sm:$0xf]
  %v1564 = vld [vmem:[%s1561 + $0x8] sm:$0xf]
  %v1565 = vld [vmem:[%s1561 + $0xc] sm:$0xf]
  %v1566 = vld [vmem:[%s1561 + $0x10] sm:$0xf]
  %v1567 = vld [vmem:[%s1561 + $0x14] sm:$0xf]
  %v1568 = vld [vmem:[%s1561 + $0x18] sm:$0xf]
  %v1569 = vld [vmem:[%s1561 + $0x1c] sm:$0xf]
  %v1570 = vld [vmem:[%s1561 + $0x20] sm:$0xf]
  %v1571 = vld [vmem:[%s1561 + $0x24] sm:$0xf]
  %v1572 = vld [vmem:[%s1561 + $0x28] sm:$0xf]
  %v1573 = vld [vmem:[%s1561 + $0x2c] sm:$0xf]
  %v1574 = vld [vmem:[%s1561 + $0x30] sm:$0xf]
  %v1575 = vld [vmem:[%s1561 + $0x34] sm:$0xf]
  %v1576 = vld [vmem:[%s1561 + $0x38] sm:$0xf]
  %v1577 = vld [vmem:[%s1561 + $0x3c] sm:$0xf]
  %v1578 = vld [vmem:[%s1561 + $0x40] sm:$0xf]
  %v1579 = vld [vmem:[%s1561 + $0x44] sm:$0xf]
  %v1580 = vld [vmem:[%s1561 + $0x48] sm:$0xf]
  %v1581 = vld [vmem:[%s1561 + $0x4c] sm:$0xf]
  %v1582 = vld [vmem:[%s1561 + $0x50] sm:$0xf]
  %v1583 = vld [vmem:[%s1561 + $0x54] sm:$0xf]
  %v1584 = vld [vmem:[%s1561 + $0x58] sm:$0xf]
  %v1585 = vld [vmem:[%s1561 + $0x5c] sm:$0xf]
  %v1586 = vld [vmem:[%s1561 + $0x60] sm:$0xf]
  %v1587 = vld [vmem:[%s1561 + $0x64] sm:$0xf]
  %v1588 = vld [vmem:[%s1561 + $0x68] sm:$0xf]
  %v1589 = vld [vmem:[%s1561 + $0x6c] sm:$0xf]
  %v1590 = vld [vmem:[%s1561 + $0x70] sm:$0xf]
  %v1591 = vld [vmem:[%s1561 + $0x74] sm:$0xf]
  %v1592 = vld [vmem:[%s1561 + $0x78] sm:$0xf]
  %v1593 = vld [vmem:[%s1561 + $0x7c] sm:$0xf]
  %v1594 = vld [vmem:[%s1561 + $0x80] sm:$0xf]
  %v1595 = vld [vmem:[%s1561 + $0x84] sm:$0xf]
  %v1596 = vld [vmem:[%s1561 + $0x88] sm:$0xf]
  %v1597 = vld [vmem:[%s1561 + $0x8c] sm:$0xf]
  %v1598 = vld [vmem:[%s1561 + $0x90] sm:$0xf]
  %v1599 = vld [vmem:[%s1561 + $0x94] sm:$0xf]
  %v1600 = vld [vmem:[%s1561 + $0x98] sm:$0xf]
  %v1601 = vld [vmem:[%s1561 + $0x9c] sm:$0xf]
  %v1602 = vld [vmem:[%s1561 + $0xa0] sm:$0xf]
  %v1603 = vld [vmem:[%s1561 + $0xa4] sm:$0xf]
  %v1604 = vld [vmem:[%s1561 + $0xa8] sm:$0xf]
  %v1605 = vld [vmem:[%s1561 + $0xac] sm:$0xf]
  %v1606 = vld [vmem:[%s1561 + $0xb0] sm:$0xf]
  %v1607 = vld [vmem:[%s1561 + $0xb4] sm:$0xf]
  %v1608 = vld [vmem:[%s1561 + $0xb8] sm:$0xf]
  %v1609 = vld [vmem:[%s1561 + $0xbc] sm:$0xf]
  %v1610 = vld [vmem:[%s1561 + $0xc0] sm:$0xf]
  %v1660 = vunpack.c.l.b16 %v1562
  %v1661 = vunpack.c.l.b16 %v1563
  %v1662 = vunpack.c.l.b16 %v1564
  %v1663 = vunpack.c.l.b16 %v1565
  %v1664 = vunpack.c.l.b16 %v1566
  %v1665 = vunpack.c.l.b16 %v1567
  %v1666 = vunpack.c.l.b16 %v1568
  %v1667 = vunpack.c.l.b16 %v1569
  %v1668 = vunpack.c.l.b16 %v1570
  %v1669 = vunpack.c.l.b16 %v1571
  %v1670 = vunpack.c.l.b16 %v1572
  %v1671 = vunpack.c.l.b16 %v1573
  %v1672 = vunpack.c.l.b16 %v1574
  %v1673 = vunpack.c.l.b16 %v1575
  %v1674 = vunpack.c.l.b16 %v1576
  %v1675 = vunpack.c.l.b16 %v1577
  %v1676 = vunpack.c.l.b16 %v1578
  %v1677 = vunpack.c.l.b16 %v1579
  %v1678 = vunpack.c.l.b16 %v1580
  %v1679 = vunpack.c.l.b16 %v1581
  %v1680 = vunpack.c.l.b16 %v1582
  %v1681 = vunpack.c.l.b16 %v1583
  %v1682 = vunpack.c.l.b16 %v1584
  %v1683 = vunpack.c.l.b16 %v1585
  %v1684 = vunpack.c.l.b16 %v1586
  %v1685 = vunpack.c.l.b16 %v1587
  %v1686 = vunpack.c.l.b16 %v1588
  %v1687 = vunpack.c.l.b16 %v1589
  %v1688 = vunpack.c.l.b16 %v1590
  %v1689 = vunpack.c.l.b16 %v1591
  %v1690 = vunpack.c.l.b16 %v1592
  %v1691 = vunpack.c.l.b16 %v1593
  %v1692 = vunpack.c.l.b16 %v1594
  %v1693 = vunpack.c.l.b16 %v1595
  %v1694 = vunpack.c.l.b16 %v1596
  %v1695 = vunpack.c.l.b16 %v1597
  %v1696 = vunpack.c.l.b16 %v1598
  %v1697 = vunpack.c.l.b16 %v1599
  %v1698 = vunpack.c.l.b16 %v1600
  %v1699 = vunpack.c.l.b16 %v1601
  %v1700 = vunpack.c.l.b16 %v1602
  %v1701 = vunpack.c.l.b16 %v1603
  %v1702 = vunpack.c.l.b16 %v1604
  %v1703 = vunpack.c.l.b16 %v1605
  %v1704 = vunpack.c.l.b16 %v1606
  %v1705 = vunpack.c.l.b16 %v1607
  %v1706 = vunpack.c.l.b16 %v1608
  %v1707 = vunpack.c.l.b16 %v1609
  %v1708 = vunpack.c.l.b16 %v1610
  %v1709 = vpack.c.b16 %v1661, %v1660
  %v1710 = vpack.c.b16 %v1663, %v1662
  %v1711 = vpack.c.b16 %v1665, %v1664
  %v1712 = vpack.c.b16 %v1667, %v1666
  %v1713 = vpack.c.b16 %v1669, %v1668
  %v1714 = vpack.c.b16 %v1671, %v1670
  %v1715 = vpack.c.b16 %v1673, %v1672
  %v1716 = vpack.c.b16 %v1675, %v1674
  %v1717 = vpack.c.b16 %v1677, %v1676
  %v1718 = vpack.c.b16 %v1679, %v1678
  %v1719 = vpack.c.b16 %v1681, %v1680
  %v1720 = vpack.c.b16 %v1683, %v1682
  %v1721 = vpack.c.b16 %v1685, %v1684
  %v1722 = vpack.c.b16 %v1687, %v1686
  %v1723 = vpack.c.b16 %v1689, %v1688
  %v1724 = vpack.c.b16 %v1691, %v1690
  %v1725 = vpack.c.b16 %v1693, %v1692
  %v1726 = vpack.c.b16 %v1695, %v1694
  %v1727 = vpack.c.b16 %v1697, %v1696
  %v1728 = vpack.c.b16 %v1699, %v1698
  %v1729 = vpack.c.b16 %v1701, %v1700
  %v1730 = vpack.c.b16 %v1703, %v1702
  %v1731 = vpack.c.b16 %v1705, %v1704
  %v1732 = vpack.c.b16 %v1707, %v1706
  %v1733 = vpack.c.b16 %v1708, %v1708
  %v1735 = vsel %vm195, %v1709, 0
  %v1738 = vsel %vm195, %v1710, 0
  %v1741 = vsel %vm195, %v1711, 0
  %v1744 = vsel %vm195, %v1712, 0
  %v1747 = vsel %vm195, %v1713, 0
  %v1750 = vsel %vm195, %v1714, 0
  %v1753 = vsel %vm195, %v1715, 0
  %v1756 = vsel %vm195, %v1716, 0
  %v1759 = vsel %vm195, %v1717, 0
  %v1762 = vsel %vm195, %v1718, 0
  %v1765 = vsel %vm195, %v1719, 0
  %v1768 = vsel %vm195, %v1720, 0
  %v1771 = vsel %vm195, %v1721, 0
  %v1774 = vsel %vm195, %v1722, 0
  %v1777 = vsel %vm195, %v1723, 0
  %v1780 = vsel %vm195, %v1724, 0
  %v1783 = vsel %vm195, %v1725, 0
  %v1786 = vsel %vm195, %v1726, 0
  %v1789 = vsel %vm195, %v1727, 0
  %v1792 = vsel %vm195, %v1728, 0
  %v1795 = vsel %vm195, %v1729, 0
  %v1798 = vsel %vm195, %v1730, 0
  %v1801 = vsel %vm195, %v1731, 0
  %v1804 = vsel %vm195, %v1732, 0
  %v1807 = vsel %vm195, %v1733, 0
  %1809 = vmatprep.subr.bf16.mxu0 0
  %1810 = vmatpush1.bf16.msra.mxu0 0
  %1811 = vmatprep.subr.bf16.mxu0 0
  %1812 = vmatpush1.bf16.msra.mxu0 0
  %1813 = vmatprep.subr.bf16.mxu0 0
  %1814 = vmatpush1.bf16.msra.mxu0 0
  %1815 = vmatprep.subr.bf16.mxu0 0
  %1816 = vmatpush1.bf16.msra.mxu0 0
  %1817 = vmatprep.subr.bf16.mxu0 0
  %1818 = vmatpush1.bf16.msra.mxu0 0
  %1819 = vmatprep.subr.bf16.mxu0 0
  %1820 = vmatpush1.bf16.msra.mxu0 0
  %1821 = vmatprep.subr.bf16.mxu0 0
  %1822 = vmatpush1.bf16.msra.mxu0 0
  %1823 = vmatprep.subr.bf16.mxu0 0
  %1824 = vmatpush1.bf16.msra.mxu0 %v193
  %1825 = vmatprep.subr.bf16.mxu0 0
  %1826 = vmatpush2.bf16.msra.mxu0 0
  %1827 = vmatprep.subr.bf16.mxu0 0
  %1828 = vmatpush2.bf16.msra.mxu0 0
  %1829 = vmatprep.subr.bf16.mxu0 0
  %1830 = vmatpush2.bf16.msra.mxu0 0
  %1831 = vmatprep.subr.bf16.mxu0 0
  %1832 = vmatpush2.bf16.msra.mxu0 0
  %1833 = vmatprep.subr.bf16.mxu0 0
  %1834 = vmatpush2.bf16.msra.mxu0 0
  %1835 = vmatprep.subr.bf16.mxu0 0
  %1836 = vmatpush2.bf16.msra.mxu0 0
  %1837 = vmatprep.subr.bf16.mxu0 0
  %1838 = vmatpush2.bf16.msra.mxu0 0
  %1839 = vmatprep.subr.bf16.mxu0 0
  %1840 = vmatpush2.bf16.msra.mxu0 0
  %1841 = vmatprep.mubr.bf16.mxu0 0
  %1842 = vmatmul.mubr.bf16.gmra.mxu0 %v1735
  %v1843 = vpop.f32.mrf.mxu0
  %v1844 = vadd.f32 0.0, %v1843
  %v1845 = vpop.f32.mrf.mxu0
  %v1846 = vpop.f32.mrf.mxu0
  %v1847 = vadd.f32 0.0, %v1846
  %v1848 = vpop.f32.mrf.mxu0
  %1849 = vmatprep.mubr.bf16.mxu0 0
  %1850 = vmatmul.mubr.bf16.gmra.mxu0 %v1738
  %v1851 = vpop.f32.mrf.mxu0
  %v1852 = vadd.f32 0.0, %v1851
  %v1853 = vpop.f32.mrf.mxu0
  %v1854 = vpop.f32.mrf.mxu0
  %v1855 = vadd.f32 0.0, %v1854
  %v1856 = vpop.f32.mrf.mxu0
  %1857 = vmatprep.mubr.bf16.mxu0 0
  %1858 = vmatmul.mubr.bf16.gmra.mxu0 %v1741
  %v1859 = vpop.f32.mrf.mxu0
  %v1860 = vadd.f32 0.0, %v1859
  %v1861 = vpop.f32.mrf.mxu0
  %v1862 = vpop.f32.mrf.mxu0
  %v1863 = vadd.f32 0.0, %v1862
  %v1864 = vpop.f32.mrf.mxu0
  %1865 = vmatprep.mubr.bf16.mxu0 0
  %1866 = vmatmul.mubr.bf16.gmra.mxu0 %v1744
  %v1867 = vpop.f32.mrf.mxu0
  %v1868 = vadd.f32 0.0, %v1867
  %v1869 = vpop.f32.mrf.mxu0
  %v1870 = vpop.f32.mrf.mxu0
  %v1871 = vadd.f32 0.0, %v1870
  %v1872 = vpop.f32.mrf.mxu0
  %1873 = vmatprep.mubr.bf16.mxu0 0
  %1874 = vmatmul.mubr.bf16.gmra.mxu0 %v1747
  %v1875 = vpop.f32.mrf.mxu0
  %v1876 = vadd.f32 0.0, %v1875
  %v1877 = vpop.f32.mrf.mxu0
  %v1878 = vpop.f32.mrf.mxu0
  %v1879 = vadd.f32 0.0, %v1878
  %v1880 = vpop.f32.mrf.mxu0
  %1881 = vmatprep.mubr.bf16.mxu0 0
  %1882 = vmatmul.mubr.bf16.gmra.mxu0 %v1750
  %v1883 = vpop.f32.mrf.mxu0
  %v1884 = vadd.f32 0.0, %v1883
  %v1885 = vpop.f32.mrf.mxu0
  %v1886 = vpop.f32.mrf.mxu0
  %v1887 = vadd.f32 0.0, %v1886
  %v1888 = vpop.f32.mrf.mxu0
  %1889 = vmatprep.mubr.bf16.mxu0 0
  %1890 = vmatmul.mubr.bf16.gmra.mxu0 %v1753
  %v1891 = vpop.f32.mrf.mxu0
  %v1892 = vadd.f32 0.0, %v1891
  %v1893 = vpop.f32.mrf.mxu0
  %v1894 = vpop.f32.mrf.mxu0
  %v1895 = vadd.f32 0.0, %v1894
  %v1896 = vpop.f32.mrf.mxu0
  %1897 = vmatprep.mubr.bf16.mxu0 0
  %1898 = vmatmul.mubr.bf16.gmra.mxu0 %v1756
  %v1899 = vpop.f32.mrf.mxu0
  %v1900 = vadd.f32 0.0, %v1899
  %v1901 = vpop.f32.mrf.mxu0
  %v1902 = vpop.f32.mrf.mxu0
  %v1903 = vadd.f32 0.0, %v1902
  %v1904 = vpop.f32.mrf.mxu0
  %1905 = vmatprep.mubr.bf16.mxu0 0
  %1906 = vmatmul.mubr.bf16.gmra.mxu0 %v1759
  %v1907 = vpop.f32.mrf.mxu0
  %v1908 = vadd.f32 0.0, %v1907
  %v1909 = vpop.f32.mrf.mxu0
  %v1910 = vpop.f32.mrf.mxu0
  %v1911 = vadd.f32 0.0, %v1910
  %v1912 = vpop.f32.mrf.mxu0
  %1913 = vmatprep.mubr.bf16.mxu0 0
  %1914 = vmatmul.mubr.bf16.gmra.mxu0 %v1762
  %v1915 = vpop.f32.mrf.mxu0
  %v1916 = vadd.f32 0.0, %v1915
  %v1917 = vpop.f32.mrf.mxu0
  %v1918 = vpop.f32.mrf.mxu0
  %v1919 = vadd.f32 0.0, %v1918
  %v1920 = vpop.f32.mrf.mxu0
  %1921 = vmatprep.mubr.bf16.mxu0 0
  %1922 = vmatmul.mubr.bf16.gmra.mxu0 %v1765
  %v1923 = vpop.f32.mrf.mxu0
  %v1924 = vadd.f32 0.0, %v1923
  %v1925 = vpop.f32.mrf.mxu0
  %v1926 = vpop.f32.mrf.mxu0
  %v1927 = vadd.f32 0.0, %v1926
  %v1928 = vpop.f32.mrf.mxu0
  %1929 = vmatprep.mubr.bf16.mxu0 0
  %1930 = vmatmul.mubr.bf16.gmra.mxu0 %v1768
  %v1931 = vpop.f32.mrf.mxu0
  %v1932 = vadd.f32 0.0, %v1931
  %v1933 = vpop.f32.mrf.mxu0
  %v1934 = vpop.f32.mrf.mxu0
  %v1935 = vadd.f32 0.0, %v1934
  %v1936 = vpop.f32.mrf.mxu0
  %1937 = vmatprep.mubr.bf16.mxu0 0
  %1938 = vmatmul.mubr.bf16.gmra.mxu0 %v1771
  %v1939 = vpop.f32.mrf.mxu0
  %v1940 = vadd.f32 0.0, %v1939
  %v1941 = vpop.f32.mrf.mxu0
  %v1942 = vpop.f32.mrf.mxu0
  %v1943 = vadd.f32 0.0, %v1942
  %v1944 = vpop.f32.mrf.mxu0
  %1945 = vmatprep.mubr.bf16.mxu0 0
  %1946 = vmatmul.mubr.bf16.gmra.mxu0 %v1774
  %v1947 = vpop.f32.mrf.mxu0
  %v1948 = vadd.f32 0.0, %v1947
  %v1949 = vpop.f32.mrf.mxu0
  %v1950 = vpop.f32.mrf.mxu0
  %v1951 = vadd.f32 0.0, %v1950
  %v1952 = vpop.f32.mrf.mxu0
  %1953 = vmatprep.mubr.bf16.mxu0 0
  %1954 = vmatmul.mubr.bf16.gmra.mxu0 %v1777
  %v1955 = vpop.f32.mrf.mxu0
  %v1956 = vadd.f32 0.0, %v1955
  %v1957 = vpop.f32.mrf.mxu0
  %v1958 = vpop.f32.mrf.mxu0
  %v1959 = vadd.f32 0.0, %v1958
  %v1960 = vpop.f32.mrf.mxu0
  %1961 = vmatprep.mubr.bf16.mxu0 0
  %1962 = vmatmul.mubr.bf16.gmra.mxu0 %v1780
  %v1963 = vpop.f32.mrf.mxu0
  %v1964 = vadd.f32 0.0, %v1963
  %v1965 = vpop.f32.mrf.mxu0
  %v1966 = vpop.f32.mrf.mxu0
  %v1967 = vadd.f32 0.0, %v1966
  %v1968 = vpop.f32.mrf.mxu0
  %1969 = vmatprep.mubr.bf16.mxu0 0
  %1970 = vmatmul.mubr.bf16.gmra.mxu0 %v1783
  %v1971 = vpop.f32.mrf.mxu0
  %v1972 = vadd.f32 0.0, %v1971
  %v1973 = vpop.f32.mrf.mxu0
  %v1974 = vpop.f32.mrf.mxu0
  %v1975 = vadd.f32 0.0, %v1974
  %v1976 = vpop.f32.mrf.mxu0
  %1977 = vmatprep.mubr.bf16.mxu0 0
  %1978 = vmatmul.mubr.bf16.gmra.mxu0 %v1786
  %v1979 = vpop.f32.mrf.mxu0
  %v1980 = vadd.f32 0.0, %v1979
  %v1981 = vpop.f32.mrf.mxu0
  %v1982 = vpop.f32.mrf.mxu0
  %v1983 = vadd.f32 0.0, %v1982
  %v1984 = vpop.f32.mrf.mxu0
  %1985 = vmatprep.mubr.bf16.mxu0 0
  %1986 = vmatmul.mubr.bf16.gmra.mxu0 %v1789
  %v1987 = vpop.f32.mrf.mxu0
  %v1988 = vadd.f32 0.0, %v1987
  %v1989 = vpop.f32.mrf.mxu0
  %v1990 = vpop.f32.mrf.mxu0
  %v1991 = vadd.f32 0.0, %v1990
  %v1992 = vpop.f32.mrf.mxu0
  %1993 = vmatprep.mubr.bf16.mxu0 0
  %1994 = vmatmul.mubr.bf16.gmra.mxu0 %v1792
  %v1995 = vpop.f32.mrf.mxu0
  %v1996 = vadd.f32 0.0, %v1995
  %v1997 = vpop.f32.mrf.mxu0
  %v1998 = vpop.f32.mrf.mxu0
  %v1999 = vadd.f32 0.0, %v1998
  %v2000 = vpop.f32.mrf.mxu0
  %2001 = vmatprep.mubr.bf16.mxu0 0
  %2002 = vmatmul.mubr.bf16.gmra.mxu0 %v1795
  %v2003 = vpop.f32.mrf.mxu0
  %v2004 = vadd.f32 0.0, %v2003
  %v2005 = vpop.f32.mrf.mxu0
  %v2006 = vpop.f32.mrf.mxu0
  %v2007 = vadd.f32 0.0, %v2006
  %v2008 = vpop.f32.mrf.mxu0
  %2009 = vmatprep.mubr.bf16.mxu0 0
  %2010 = vmatmul.mubr.bf16.gmra.mxu0 %v1798
  %v2011 = vpop.f32.mrf.mxu0
  %v2012 = vadd.f32 0.0, %v2011
  %v2013 = vpop.f32.mrf.mxu0
  %v2014 = vpop.f32.mrf.mxu0
  %v2015 = vadd.f32 0.0, %v2014
  %v2016 = vpop.f32.mrf.mxu0
  %2017 = vmatprep.mubr.bf16.mxu0 0
  %2018 = vmatmul.mubr.bf16.gmra.mxu0 %v1801
  %v2019 = vpop.f32.mrf.mxu0
  %v2020 = vadd.f32 0.0, %v2019
  %v2021 = vpop.f32.mrf.mxu0
  %v2022 = vpop.f32.mrf.mxu0
  %v2023 = vadd.f32 0.0, %v2022
  %v2024 = vpop.f32.mrf.mxu0
  %2025 = vmatprep.mubr.bf16.mxu0 0
  %2026 = vmatmul.mubr.bf16.gmra.mxu0 %v1804
  %v2027 = vpop.f32.mrf.mxu0
  %v2028 = vadd.f32 0.0, %v2027
  %v2029 = vpop.f32.mrf.mxu0
  %v2030 = vpop.f32.mrf.mxu0
  %v2031 = vadd.f32 0.0, %v2030
  %v2032 = vpop.f32.mrf.mxu0
  %2033 = vmatprep.mubr.bf16.mxu0 0
  %2034 = vmatmul.mubr.bf16.gmra.mxu0 %v1807
  %v2035 = vpop.f32.mrf.mxu0
  %v2036 = vadd.f32 0.0, %v2035
  %v2037 = vpop.f32.mrf.mxu0
  %v2038 = vpop.f32.mrf.mxu0
  %v2039 = vpop.f32.mrf.mxu0
  %2040 = vdwg.mxu0
  %v2041 = vmax.f32 %v1512, %v1844
  %v2042 = vmax.f32 %v1513, %v1847
  %v2043 = vmax.f32 %v1514, %v1852
  %v2044 = vmax.f32 %v1515, %v1855
  %v2045 = vmax.f32 %v1516, %v1860
  %v2046 = vmax.f32 %v1517, %v1863
  %v2047 = vmax.f32 %v1518, %v1868
  %v2048 = vmax.f32 %v1519, %v1871
  %v2049 = vmax.f32 %v1520, %v1876
  %v2050 = vmax.f32 %v1521, %v1879
  %v2051 = vmax.f32 %v1522, %v1884
  %v2052 = vmax.f32 %v1523, %v1887
  %v2053 = vmax.f32 %v1524, %v1892
  %v2054 = vmax.f32 %v1525, %v1895
  %v2055 = vmax.f32 %v1526, %v1900
  %v2056 = vmax.f32 %v1527, %v1903
  %v2057 = vmax.f32 %v1528, %v1908
  %v2058 = vmax.f32 %v1529, %v1911
  %v2059 = vmax.f32 %v1530, %v1916
  %v2060 = vmax.f32 %v1531, %v1919
  %v2061 = vmax.f32 %v1532, %v1924
  %v2062 = vmax.f32 %v1533, %v1927
  %v2063 = vmax.f32 %v1534, %v1932
  %v2064 = vmax.f32 %v1535, %v1935
  %v2065 = vmax.f32 %v1536, %v1940
  %v2066 = vmax.f32 %v1537, %v1943
  %v2067 = vmax.f32 %v1538, %v1948
  %v2068 = vmax.f32 %v1539, %v1951
  %v2069 = vmax.f32 %v1540, %v1956
  %v2070 = vmax.f32 %v1541, %v1959
  %v2071 = vmax.f32 %v1542, %v1964
  %v2072 = vmax.f32 %v1543, %v1967
  %v2073 = vmax.f32 %v1544, %v1972
  %v2074 = vmax.f32 %v1545, %v1975
  %v2075 = vmax.f32 %v1546, %v1980
  %v2076 = vmax.f32 %v1547, %v1983
  %v2077 = vmax.f32 %v1548, %v1988
  %v2078 = vmax.f32 %v1549, %v1991
  %v2079 = vmax.f32 %v1550, %v1996
  %v2080 = vmax.f32 %v1551, %v1999
  %v2081 = vmax.f32 %v1552, %v2004
  %v2082 = vmax.f32 %v1553, %v2007
  %v2083 = vmax.f32 %v1554, %v2012
  %v2084 = vmax.f32 %v1555, %v2015
  %v2085 = vmax.f32 %v1556, %v2020
  %v2086 = vmax.f32 %v1557, %v2023
  %v2087 = vmax.f32 %v1558, %v2028
  %v2088 = vmax.f32 %v1559, %v2031
  %v2089 = vmax.f32 %v1560, %v2036
  %v2090 = vld [vmem:[%s2] sm:$0x1]
  %v2092 = vlaneseq
  %v2093 = vshrl.u32 %v2092, 7
  %v2094 = vsub.s32 0, %v2093
  %v2095 = vrot.slane %v2090, %v2094
  %v2097 = vadd.f32 %v2041, %v2095
  %v2098 = vadd.f32 %v2042, %v2095
  %v2099 = vadd.f32 %v2043, %v2095
  %v2100 = vadd.f32 %v2044, %v2095
  %v2101 = vadd.f32 %v2045, %v2095
  %v2102 = vadd.f32 %v2046, %v2095
  %v2103 = vadd.f32 %v2047, %v2095
  %v2104 = vadd.f32 %v2048, %v2095
  %v2105 = vadd.f32 %v2049, %v2095
  %v2106 = vadd.f32 %v2050, %v2095
  %v2107 = vadd.f32 %v2051, %v2095
  %v2108 = vadd.f32 %v2052, %v2095
  %v2109 = vadd.f32 %v2053, %v2095
  %v2110 = vadd.f32 %v2054, %v2095
  %v2111 = vadd.f32 %v2055, %v2095
  %v2112 = vadd.f32 %v2056, %v2095
  %v2113 = vadd.f32 %v2057, %v2095
  %v2114 = vadd.f32 %v2058, %v2095
  %v2115 = vadd.f32 %v2059, %v2095
  %v2116 = vadd.f32 %v2060, %v2095
  %v2117 = vadd.f32 %v2061, %v2095
  %v2118 = vadd.f32 %v2062, %v2095
  %v2119 = vadd.f32 %v2063, %v2095
  %v2120 = vadd.f32 %v2064, %v2095
  %v2121 = vadd.f32 %v2065, %v2095
  %v2122 = vadd.f32 %v2066, %v2095
  %v2123 = vadd.f32 %v2067, %v2095
  %v2124 = vadd.f32 %v2068, %v2095
  %v2125 = vadd.f32 %v2069, %v2095
  %v2126 = vadd.f32 %v2070, %v2095
  %v2127 = vadd.f32 %v2071, %v2095
  %v2128 = vadd.f32 %v2072, %v2095
  %v2129 = vadd.f32 %v2073, %v2095
  %v2130 = vadd.f32 %v2074, %v2095
  %v2131 = vadd.f32 %v2075, %v2095
  %v2132 = vadd.f32 %v2076, %v2095
  %v2133 = vadd.f32 %v2077, %v2095
  %v2134 = vadd.f32 %v2078, %v2095
  %v2135 = vadd.f32 %v2079, %v2095
  %v2136 = vadd.f32 %v2080, %v2095
  %v2137 = vadd.f32 %v2081, %v2095
  %v2138 = vadd.f32 %v2082, %v2095
  %v2139 = vadd.f32 %v2083, %v2095
  %v2140 = vadd.f32 %v2084, %v2095
  %v2141 = vadd.f32 %v2085, %v2095
  %v2142 = vadd.f32 %v2086, %v2095
  %v2143 = vadd.f32 %v2087, %v2095
  %v2144 = vadd.f32 %v2088, %v2095
  %v2145 = vadd.f32 %v2089, %v2095
  %v2146 = vmax.f32 %v2097, 0.0
  %v2147 = vmax.f32 %v2098, 0.0
  %v2148 = vmax.f32 %v2099, 0.0
  %v2149 = vmax.f32 %v2100, 0.0
  %v2150 = vmax.f32 %v2101, 0.0
  %v2151 = vmax.f32 %v2102, 0.0
  %v2152 = vmax.f32 %v2103, 0.0
  %v2153 = vmax.f32 %v2104, 0.0
  %v2154 = vmax.f32 %v2105, 0.0
  %v2155 = vmax.f32 %v2106, 0.0
  %v2156 = vmax.f32 %v2107, 0.0
  %v2157 = vmax.f32 %v2108, 0.0
  %v2158 = vmax.f32 %v2109, 0.0
  %v2159 = vmax.f32 %v2110, 0.0
  %v2160 = vmax.f32 %v2111, 0.0
  %v2161 = vmax.f32 %v2112, 0.0
  %v2162 = vmax.f32 %v2113, 0.0
  %v2163 = vmax.f32 %v2114, 0.0
  %v2164 = vmax.f32 %v2115, 0.0
  %v2165 = vmax.f32 %v2116, 0.0
  %v2166 = vmax.f32 %v2117, 0.0
  %v2167 = vmax.f32 %v2118, 0.0
  %v2168 = vmax.f32 %v2119, 0.0
  %v2169 = vmax.f32 %v2120, 0.0
  %v2170 = vmax.f32 %v2121, 0.0
  %v2171 = vmax.f32 %v2122, 0.0
  %v2172 = vmax.f32 %v2123, 0.0
  %v2173 = vmax.f32 %v2124, 0.0
  %v2174 = vmax.f32 %v2125, 0.0
  %v2175 = vmax.f32 %v2126, 0.0
  %v2176 = vmax.f32 %v2127, 0.0
  %v2177 = vmax.f32 %v2128, 0.0
  %v2178 = vmax.f32 %v2129, 0.0
  %v2179 = vmax.f32 %v2130, 0.0
  %v2180 = vmax.f32 %v2131, 0.0
  %v2181 = vmax.f32 %v2132, 0.0
  %v2182 = vmax.f32 %v2133, 0.0
  %v2183 = vmax.f32 %v2134, 0.0
  %v2184 = vmax.f32 %v2135, 0.0
  %v2185 = vmax.f32 %v2136, 0.0
  %v2186 = vmax.f32 %v2137, 0.0
  %v2187 = vmax.f32 %v2138, 0.0
  %v2188 = vmax.f32 %v2139, 0.0
  %v2189 = vmax.f32 %v2140, 0.0
  %v2190 = vmax.f32 %v2141, 0.0
  %v2191 = vmax.f32 %v2142, 0.0
  %v2192 = vmax.f32 %v2143, 0.0
  %v2193 = vmax.f32 %v2144, 0.0
  %v2194 = vmax.f32 %v2145, 0.0
  %v2195 = vpack.c.bf16 %v2147, %v2146
  %v2196 = vpack.c.bf16 %v2149, %v2148
  %v2197 = vpack.c.bf16 %v2151, %v2150
  %v2198 = vpack.c.bf16 %v2153, %v2152
  %v2199 = vpack.c.bf16 %v2155, %v2154
  %v2200 = vpack.c.bf16 %v2157, %v2156
  %v2201 = vpack.c.bf16 %v2159, %v2158
  %v2202 = vpack.c.bf16 %v2161, %v2160
  %v2203 = vpack.c.bf16 %v2163, %v2162
  %v2204 = vpack.c.bf16 %v2165, %v2164
  %v2205 = vpack.c.bf16 %v2167, %v2166
  %v2206 = vpack.c.bf16 %v2169, %v2168
  %v2207 = vpack.c.bf16 %v2171, %v2170
  %v2208 = vpack.c.bf16 %v2173, %v2172
  %v2209 = vpack.c.bf16 %v2175, %v2174
  %v2210 = vpack.c.bf16 %v2177, %v2176
  %v2211 = vpack.c.bf16 %v2179, %v2178
  %v2212 = vpack.c.bf16 %v2181, %v2180
  %v2213 = vpack.c.bf16 %v2183, %v2182
  %v2214 = vpack.c.bf16 %v2185, %v2184
  %v2215 = vpack.c.bf16 %v2187, %v2186
  %v2216 = vpack.c.bf16 %v2189, %v2188
  %v2217 = vpack.c.bf16 %v2191, %v2190
  %v2218 = vpack.c.bf16 %v2193, %v2192
  %v2219 = vpack.c.bf16 %v2194, %v2194
  %v2245 = vunpack.c.l.b16 %v2195
  %v2246 = vunpack.c.h.b16 %v2195
  %v2247 = vunpack.c.l.b16 %v2196
  %v2248 = vunpack.c.h.b16 %v2196
  %v2249 = vunpack.c.l.b16 %v2197
  %v2250 = vunpack.c.h.b16 %v2197
  %v2251 = vunpack.c.l.b16 %v2198
  %v2252 = vunpack.c.h.b16 %v2198
  %v2253 = vunpack.c.l.b16 %v2199
  %v2254 = vunpack.c.h.b16 %v2199
  %v2255 = vunpack.c.l.b16 %v2200
  %v2256 = vunpack.c.h.b16 %v2200
  %v2257 = vunpack.c.l.b16 %v2201
  %v2258 = vunpack.c.h.b16 %v2201
  %v2259 = vunpack.c.l.b16 %v2202
  %v2260 = vunpack.c.h.b16 %v2202
  %v2261 = vunpack.c.l.b16 %v2203
  %v2262 = vunpack.c.h.b16 %v2203
  %v2263 = vunpack.c.l.b16 %v2204
  %v2264 = vunpack.c.h.b16 %v2204
  %v2265 = vunpack.c.l.b16 %v2205
  %v2266 = vunpack.c.h.b16 %v2205
  %v2267 = vunpack.c.l.b16 %v2206
  %v2268 = vunpack.c.h.b16 %v2206
  %v2269 = vunpack.c.l.b16 %v2207
  %v2270 = vunpack.c.h.b16 %v2207
  %v2271 = vunpack.c.l.b16 %v2208
  %v2272 = vunpack.c.h.b16 %v2208
  %v2273 = vunpack.c.l.b16 %v2209
  %v2274 = vunpack.c.h.b16 %v2209
  %v2275 = vunpack.c.l.b16 %v2210
  %v2276 = vunpack.c.h.b16 %v2210
  %v2277 = vunpack.c.l.b16 %v2211
  %v2278 = vunpack.c.h.b16 %v2211
  %v2279 = vunpack.c.l.b16 %v2212
  %v2280 = vunpack.c.h.b16 %v2212
  %v2281 = vunpack.c.l.b16 %v2213
  %v2282 = vunpack.c.h.b16 %v2213
  %v2283 = vunpack.c.l.b16 %v2214
  %v2284 = vunpack.c.h.b16 %v2214
  %v2285 = vunpack.c.l.b16 %v2215
  %v2286 = vunpack.c.h.b16 %v2215
  %v2287 = vunpack.c.l.b16 %v2216
  %v2288 = vunpack.c.h.b16 %v2216
  %v2289 = vunpack.c.l.b16 %v2217
  %v2290 = vunpack.c.h.b16 %v2217
  %v2291 = vunpack.c.l.b16 %v2218
  %v2292 = vunpack.c.h.b16 %v2218
  %v2293 = vunpack.c.l.b16 %v2219
  %v2294 = vpack.c.b16 %v2245, %v2245
  %v2295 = vpack.c.b16 %v2246, %v2246
  %v2296 = vpack.c.b16 %v2247, %v2247
  %v2297 = vpack.c.b16 %v2248, %v2248
  %v2298 = vpack.c.b16 %v2249, %v2249
  %v2299 = vpack.c.b16 %v2250, %v2250
  %v2300 = vpack.c.b16 %v2251, %v2251
  %v2301 = vpack.c.b16 %v2252, %v2252
  %v2302 = vpack.c.b16 %v2253, %v2253
  %v2303 = vpack.c.b16 %v2254, %v2254
  %v2304 = vpack.c.b16 %v2255, %v2255
  %v2305 = vpack.c.b16 %v2256, %v2256
  %v2306 = vpack.c.b16 %v2257, %v2257
  %v2307 = vpack.c.b16 %v2258, %v2258
  %v2308 = vpack.c.b16 %v2259, %v2259
  %v2309 = vpack.c.b16 %v2260, %v2260
  %v2310 = vpack.c.b16 %v2261, %v2261
  %v2311 = vpack.c.b16 %v2262, %v2262
  %v2312 = vpack.c.b16 %v2263, %v2263
  %v2313 = vpack.c.b16 %v2264, %v2264
  %v2314 = vpack.c.b16 %v2265, %v2265
  %v2315 = vpack.c.b16 %v2266, %v2266
  %v2316 = vpack.c.b16 %v2267, %v2267
  %v2317 = vpack.c.b16 %v2268, %v2268
  %v2318 = vpack.c.b16 %v2269, %v2269
  %v2319 = vpack.c.b16 %v2270, %v2270
  %v2320 = vpack.c.b16 %v2271, %v2271
  %v2321 = vpack.c.b16 %v2272, %v2272
  %v2322 = vpack.c.b16 %v2273, %v2273
  %v2323 = vpack.c.b16 %v2274, %v2274
  %v2324 = vpack.c.b16 %v2275, %v2275
  %v2325 = vpack.c.b16 %v2276, %v2276
  %v2326 = vpack.c.b16 %v2277, %v2277
  %v2327 = vpack.c.b16 %v2278, %v2278
  %v2328 = vpack.c.b16 %v2279, %v2279
  %v2329 = vpack.c.b16 %v2280, %v2280
  %v2330 = vpack.c.b16 %v2281, %v2281
  %v2331 = vpack.c.b16 %v2282, %v2282
  %v2332 = vpack.c.b16 %v2283, %v2283
  %v2333 = vpack.c.b16 %v2284, %v2284
  %v2334 = vpack.c.b16 %v2285, %v2285
  %v2335 = vpack.c.b16 %v2286, %v2286
  %v2336 = vpack.c.b16 %v2287, %v2287
  %v2337 = vpack.c.b16 %v2288, %v2288
  %v2338 = vpack.c.b16 %v2289, %v2289
  %v2339 = vpack.c.b16 %v2290, %v2290
  %v2340 = vpack.c.b16 %v2291, %v2291
  %v2341 = vpack.c.b16 %v2292, %v2292
  %v2342 = vpack.c.b16 %v2293, %v2293
  %vm2392 = vcmask 257024
  %2393 = vst.msk [vmem:[%s3] sm:$0xf] %vm2392, %v2294
  %2394 = vst.msk [vmem:[%s3 + $0x4] sm:$0xf] %vm2392, %v2295
  %2395 = vst.msk [vmem:[%s3 + $0x8] sm:$0xf] %vm2392, %v2296
  %2396 = vst.msk [vmem:[%s3 + $0xc] sm:$0xf] %vm2392, %v2297
  %2397 = vst.msk [vmem:[%s3 + $0x10] sm:$0xf] %vm2392, %v2298
  %2398 = vst.msk [vmem:[%s3 + $0x14] sm:$0xf] %vm2392, %v2299
  %2399 = vst.msk [vmem:[%s3 + $0x18] sm:$0xf] %vm2392, %v2300
  %2400 = vst.msk [vmem:[%s3 + $0x1c] sm:$0xf] %vm2392, %v2301
  %2401 = vst.msk [vmem:[%s3 + $0x20] sm:$0xf] %vm2392, %v2302
  %2402 = vst.msk [vmem:[%s3 + $0x24] sm:$0xf] %vm2392, %v2303
  %2403 = vst.msk [vmem:[%s3 + $0x28] sm:$0xf] %vm2392, %v2304
  %2404 = vst.msk [vmem:[%s3 + $0x2c] sm:$0xf] %vm2392, %v2305
  %2405 = vst.msk [vmem:[%s3 + $0x30] sm:$0xf] %vm2392, %v2306
  %2406 = vst.msk [vmem:[%s3 + $0x34] sm:$0xf] %vm2392, %v2307
  %2407 = vst.msk [vmem:[%s3 + $0x38] sm:$0xf] %vm2392, %v2308
  %2408 = vst.msk [vmem:[%s3 + $0x3c] sm:$0xf] %vm2392, %v2309
  %2409 = vst.msk [vmem:[%s3 + $0x40] sm:$0xf] %vm2392, %v2310
  %2410 = vst.msk [vmem:[%s3 + $0x44] sm:$0xf] %vm2392, %v2311
  %2411 = vst.msk [vmem:[%s3 + $0x48] sm:$0xf] %vm2392, %v2312
  %2412 = vst.msk [vmem:[%s3 + $0x4c] sm:$0xf] %vm2392, %v2313
  %2413 = vst.msk [vmem:[%s3 + $0x50] sm:$0xf] %vm2392, %v2314
  %2414 = vst.msk [vmem:[%s3 + $0x54] sm:$0xf] %vm2392, %v2315
  %2415 = vst.msk [vmem:[%s3 + $0x58] sm:$0xf] %vm2392, %v2316
  %2416 = vst.msk [vmem:[%s3 + $0x5c] sm:$0xf] %vm2392, %v2317
  %2417 = vst.msk [vmem:[%s3 + $0x60] sm:$0xf] %vm2392, %v2318
  %2418 = vst.msk [vmem:[%s3 + $0x64] sm:$0xf] %vm2392, %v2319
  %2419 = vst.msk [vmem:[%s3 + $0x68] sm:$0xf] %vm2392, %v2320
  %2420 = vst.msk [vmem:[%s3 + $0x6c] sm:$0xf] %vm2392, %v2321
  %2421 = vst.msk [vmem:[%s3 + $0x70] sm:$0xf] %vm2392, %v2322
  %2422 = vst.msk [vmem:[%s3 + $0x74] sm:$0xf] %vm2392, %v2323
  %2423 = vst.msk [vmem:[%s3 + $0x78] sm:$0xf] %vm2392, %v2324
  %2424 = vst.msk [vmem:[%s3 + $0x7c] sm:$0xf] %vm2392, %v2325
  %2425 = vst.msk [vmem:[%s3 + $0x80] sm:$0xf] %vm2392, %v2326
  %2426 = vst.msk [vmem:[%s3 + $0x84] sm:$0xf] %vm2392, %v2327
  %2427 = vst.msk [vmem:[%s3 + $0x88] sm:$0xf] %vm2392, %v2328
  %2428 = vst.msk [vmem:[%s3 + $0x8c] sm:$0xf] %vm2392, %v2329
  %2429 = vst.msk [vmem:[%s3 + $0x90] sm:$0xf] %vm2392, %v2330
  %2430 = vst.msk [vmem:[%s3 + $0x94] sm:$0xf] %vm2392, %v2331
  %2431 = vst.msk [vmem:[%s3 + $0x98] sm:$0xf] %vm2392, %v2332
  %2432 = vst.msk [vmem:[%s3 + $0x9c] sm:$0xf] %vm2392, %v2333
  %2433 = vst.msk [vmem:[%s3 + $0xa0] sm:$0xf] %vm2392, %v2334
  %2434 = vst.msk [vmem:[%s3 + $0xa4] sm:$0xf] %vm2392, %v2335
  %2435 = vst.msk [vmem:[%s3 + $0xa8] sm:$0xf] %vm2392, %v2336
  %2436 = vst.msk [vmem:[%s3 + $0xac] sm:$0xf] %vm2392, %v2337
  %2437 = vst.msk [vmem:[%s3 + $0xb0] sm:$0xf] %vm2392, %v2338
  %2438 = vst.msk [vmem:[%s3 + $0xb4] sm:$0xf] %vm2392, %v2339
  %2439 = vst.msk [vmem:[%s3 + $0xb8] sm:$0xf] %vm2392, %v2340
  %2440 = vst.msk [vmem:[%s3 + $0xbc] sm:$0xf] %vm2392, %v2341
  %2441 = vst.msk [vmem:[%s3 + $0xc0] sm:$0xf] %vm2392, %v2342
  // Predicated region
  $region14: #{car_model_forward.3} parent=0 // pred_check
    _
  $region15: #{car_model_forward.3} parent=0 // pred_check_branch
    %2443 = sbr.rel (0) target = $region17
  $region16: #{car_model_forward.3} parent=0 // pred_region
    _
  $region17: #{car_model_forward.3} parent=0 // pred_fallthru
    _
  // Predicated region
  $region18: #{car_model_forward.3} parent=0 // pred_check
    _
  $region19: #{car_model_forward.3} parent=0 // pred_check_branch
    %2445 = sbr.rel (0) target = $region21
  $region20: #{car_model_forward.3} parent=0 // pred_region
    _
  $region21: #{car_model_forward.3} parent=0 // pred_fallthru
    _

// kernel: car_model_forward.4
$region0: #{car_model_forward.4}
  #allocation0 [shape = 'u32[]', space=smem, size = 0x4, offset = 0x4, fixed_abs, tag = 'smem constant byte address 0x4 - core index']
  #allocation1 [shape = 'u32[144,128]{1,0:T(1,128)}', space=vmem, size = 0x12000, scoped, tag = 'internal scratch']
  %s0 = inlined_call_operand.vmem [shape: bf16[4,104,288], index: 0, kind: input, shape index: {}]
  %s1 = inlined_call_operand.vmem [shape: bf16[288,64], index: 1, kind: input, shape index: {}]
  %s2 = inlined_call_operand.vmem [shape: f32[1,64], index: 2, kind: input, shape index: {}]
  %s3 = inlined_call_operand.vmem [shape: bf16[104,64], index: 3, kind: output, shape index: {}]
  %s4 = sld [smem:[#allocation0]]
  $region22: #{car_model_forward.4} parent=0
    _
  %s6 = ssub.s32 1, %s4
  %s7 = scalar_select 0, %s6, %s4
  // Predicated region
  $region2: #{car_model_forward.4} parent=0 // pred_check
    _
  $region3: #{car_model_forward.4} parent=0 // pred_check_branch
    %9 = sbr.rel (0) target = $region5
  $region4: #{car_model_forward.4} parent=0 // pred_region
    _
  $region5: #{car_model_forward.4} parent=0 // pred_fallthru
    _
  // Predicated region
  $region6: #{car_model_forward.4} parent=0 // pred_check
    _
  $region7: #{car_model_forward.4} parent=0 // pred_check_branch
    %11 = sbr.rel (0) target = $region9
  $region8: #{car_model_forward.4} parent=0 // pred_region
    _
  $region9: #{car_model_forward.4} parent=0 // pred_fallthru
    _
  // Predicated region
  $region10: #{car_model_forward.4} parent=0 // pred_check
    _
  $region11: #{car_model_forward.4} parent=0 // pred_check_branch
    %13 = sbr.rel (0) target = $region13
  $region12: #{car_model_forward.4} parent=0 // pred_region
    _
  $region13: #{car_model_forward.4} parent=0 // pred_fallthru
    _
  %v15 = vld [vmem:[%s1] sm:$0xf]
  %v16 = vld [vmem:[%s1 + $0x4] sm:$0xf]
  %v17 = vld [vmem:[%s1 + $0x8] sm:$0xf]
  %v18 = vld [vmem:[%s1 + $0xc] sm:$0xf]
  %v19 = vld [vmem:[%s1 + $0x10] sm:$0xf]
  %v20 = vld [vmem:[%s1 + $0x14] sm:$0xf]
  %v21 = vld [vmem:[%s1 + $0x18] sm:$0xf]
  %v22 = vld [vmem:[%s1 + $0x1c] sm:$0xf]
  %v23 = vld [vmem:[%s1 + $0x20] sm:$0xf]
  %v24 = vld [vmem:[%s1 + $0x24] sm:$0xf]
  %v25 = vld [vmem:[%s1 + $0x28] sm:$0xf]
  %v26 = vld [vmem:[%s1 + $0x2c] sm:$0xf]
  %v27 = vld [vmem:[%s1 + $0x30] sm:$0xf]
  %v28 = vld [vmem:[%s1 + $0x34] sm:$0xf]
  %v29 = vld [vmem:[%s1 + $0x38] sm:$0xf]
  %v30 = vld [vmem:[%s1 + $0x3c] sm:$0xf]
  %v31 = vld [vmem:[%s1 + $0x40] sm:$0xf]
  %v32 = vld [vmem:[%s1 + $0x44] sm:$0xf]
  %v33 = vld [vmem:[%s1 + $0x48] sm:$0xf]
  %v34 = vld [vmem:[%s1 + $0x4c] sm:$0xf]
  %v35 = vld [vmem:[%s1 + $0x50] sm:$0xf]
  %v36 = vld [vmem:[%s1 + $0x54] sm:$0xf]
  %v37 = vld [vmem:[%s1 + $0x58] sm:$0xf]
  %v38 = vld [vmem:[%s1 + $0x5c] sm:$0xf]
  %v39 = vld [vmem:[%s1 + $0x60] sm:$0xf]
  %v40 = vld [vmem:[%s1 + $0x64] sm:$0xf]
  %v41 = vld [vmem:[%s1 + $0x68] sm:$0xf]
  %v42 = vld [vmem:[%s1 + $0x6c] sm:$0xf]
  %v43 = vld [vmem:[%s1 + $0x70] sm:$0xf]
  %v44 = vld [vmem:[%s1 + $0x74] sm:$0xf]
  %v45 = vld [vmem:[%s1 + $0x78] sm:$0xf]
  %v46 = vld [vmem:[%s1 + $0x7c] sm:$0xf]
  %v47 = vld [vmem:[%s1 + $0x80] sm:$0xf]
  %v48 = vld [vmem:[%s1 + $0x84] sm:$0xf]
  %v49 = vld [vmem:[%s1 + $0x88] sm:$0xf]
  %v50 = vld [vmem:[%s1 + $0x8c] sm:$0xf]
  %v51 = vld [vmem:[%s0] sm:$0xff]
  %v52 = vld [vmem:[%s0 + $0x8] sm:$0xf]
  %v53 = vld [vmem:[%s0 + $0xc] sm:$0xff]
  %v54 = vld [vmem:[%s0 + $0x14] sm:$0xf]
  %v55 = vld [vmem:[%s0 + $0x18] sm:$0xff]
  %v56 = vld [vmem:[%s0 + $0x20] sm:$0xf]
  %v57 = vld [vmem:[%s0 + $0x24] sm:$0xff]
  %v58 = vld [vmem:[%s0 + $0x2c] sm:$0xf]
  %v59 = vld [vmem:[%s0 + $0x30] sm:$0xff]
  %v60 = vld [vmem:[%s0 + $0x38] sm:$0xf]
  %v61 = vld [vmem:[%s0 + $0x3c] sm:$0xff]
  %v62 = vld [vmem:[%s0 + $0x44] sm:$0xf]
  %v63 = vld [vmem:[%s0 + $0x48] sm:$0xff]
  %v64 = vld [vmem:[%s0 + $0x50] sm:$0xf]
  %v65 = vld [vmem:[%s0 + $0x54] sm:$0xff]
  %v66 = vld [vmem:[%s0 + $0x5c] sm:$0xf]
  %v67 = vld [vmem:[%s0 + $0x60] sm:$0xff]
  %v68 = vld [vmem:[%s0 + $0x68] sm:$0xf]
  %v69 = vld [vmem:[%s0 + $0x6c] sm:$0xff]
  %v70 = vld [vmem:[%s0 + $0x74] sm:$0xf]
  %v71 = vld [vmem:[%s0 + $0x78] sm:$0xff]
  %v72 = vld [vmem:[%s0 + $0x80] sm:$0xf]
  %v73 = vld [vmem:[%s0 + $0x84] sm:$0xff]
  %v74 = vld [vmem:[%s0 + $0x8c] sm:$0xf]
  %v75 = vld [vmem:[%s0 + $0x90] sm:$0xff]
  %v76 = vld [vmem:[%s0 + $0x98] sm:$0xf]
  %v103 = vunpack.c.l.b16 %v51
  %v104 = vunpack.c.h.b16 %v51
  %v105 = vunpack.c.l.b16 %v52
  %v106 = vunpack.c.l.b16 %v53
  %v107 = vunpack.c.h.b16 %v53
  %v108 = vunpack.c.l.b16 %v54
  %v109 = vunpack.c.l.b16 %v55
  %v110 = vunpack.c.h.b16 %v55
  %v111 = vunpack.c.l.b16 %v56
  %v112 = vunpack.c.l.b16 %v57
  %v113 = vunpack.c.h.b16 %v57
  %v114 = vunpack.c.l.b16 %v58
  %v115 = vunpack.c.l.b16 %v59
  %v116 = vunpack.c.h.b16 %v59
  %v117 = vunpack.c.l.b16 %v60
  %v118 = vunpack.c.l.b16 %v61
  %v119 = vunpack.c.h.b16 %v61
  %v120 = vunpack.c.l.b16 %v62
  %v121 = vunpack.c.l.b16 %v63
  %v122 = vunpack.c.h.b16 %v63
  %v123 = vunpack.c.l.b16 %v64
  %v124 = vunpack.c.l.b16 %v65
  %v125 = vunpack.c.h.b16 %v65
  %v126 = vunpack.c.l.b16 %v66
  %v127 = vunpack.c.l.b16 %v67
  %v128 = vunpack.c.h.b16 %v67
  %v129 = vunpack.c.l.b16 %v68
  %v130 = vunpack.c.l.b16 %v69
  %v131 = vunpack.c.h.b16 %v69
  %v132 = vunpack.c.l.b16 %v70
  %v133 = vunpack.c.l.b16 %v71
  %v134 = vunpack.c.h.b16 %v71
  %v135 = vunpack.c.l.b16 %v72
  %v136 = vunpack.c.l.b16 %v73
  %v137 = vunpack.c.h.b16 %v73
  %v138 = vunpack.c.l.b16 %v74
  %v139 = vunpack.c.l.b16 %v75
  %v140 = vunpack.c.h.b16 %v75
  %v141 = vunpack.c.l.b16 %v76
  %v142 = vpack.c.b16 %v106, %v103
  %v143 = vpack.c.b16 %v107, %v104
  %v144 = vpack.c.b16 %v108, %v105
  %v145 = vpack.c.b16 %v112, %v109
  %v146 = vpack.c.b16 %v113, %v110
  %v147 = vpack.c.b16 %v114, %v111
  %v148 = vpack.c.b16 %v118, %v115
  %v149 = vpack.c.b16 %v119, %v116
  %v150 = vpack.c.b16 %v120, %v117
  %v151 = vpack.c.b16 %v124, %v121
  %v152 = vpack.c.b16 %v125, %v122
  %v153 = vpack.c.b16 %v126, %v123
  %v154 = vpack.c.b16 %v130, %v127
  %v155 = vpack.c.b16 %v131, %v128
  %v156 = vpack.c.b16 %v132, %v129
  %v157 = vpack.c.b16 %v136, %v133
  %v158 = vpack.c.b16 %v137, %v134
  %v159 = vpack.c.b16 %v138, %v135
  %v160 = vpack.c.b16 %v139, %v139
  %v161 = vpack.c.b16 %v140, %v140
  %v162 = vpack.c.b16 %v141, %v141
  %v213 = vunpack.c.l.b16 %v15
  %v214 = vunpack.c.l.b16 %v16
  %v215 = vunpack.c.l.b16 %v17
  %v216 = vunpack.c.l.b16 %v18
  %v217 = vunpack.c.l.b16 %v19
  %v218 = vunpack.c.l.b16 %v20
  %v219 = vunpack.c.l.b16 %v21
  %v220 = vunpack.c.l.b16 %v22
  %v221 = vunpack.c.l.b16 %v23
  %v222 = vunpack.c.l.b16 %v24
  %v223 = vunpack.c.l.b16 %v25
  %v224 = vunpack.c.l.b16 %v26
  %v225 = vunpack.c.l.b16 %v27
  %v226 = vunpack.c.l.b16 %v28
  %v227 = vunpack.c.l.b16 %v29
  %v228 = vunpack.c.l.b16 %v30
  %v229 = vunpack.c.l.b16 %v31
  %v230 = vunpack.c.l.b16 %v32
  %v231 = vunpack.c.l.b16 %v33
  %v232 = vunpack.c.l.b16 %v34
  %v233 = vunpack.c.l.b16 %v35
  %v234 = vunpack.c.l.b16 %v36
  %v235 = vunpack.c.l.b16 %v37
  %v236 = vunpack.c.l.b16 %v38
  %v237 = vunpack.c.l.b16 %v39
  %v238 = vunpack.c.l.b16 %v40
  %v239 = vunpack.c.l.b16 %v41
  %v240 = vunpack.c.l.b16 %v42
  %v241 = vunpack.c.l.b16 %v43
  %v242 = vunpack.c.l.b16 %v44
  %v243 = vunpack.c.l.b16 %v45
  %v244 = vunpack.c.l.b16 %v46
  %v245 = vunpack.c.l.b16 %v47
  %v246 = vunpack.c.l.b16 %v48
  %v247 = vunpack.c.l.b16 %v49
  %v248 = vunpack.c.l.b16 %v50
  %v249 = vpack.c.b16 %v214, %v213
  %v250 = vpack.c.b16 %v216, %v215
  %v251 = vpack.c.b16 %v218, %v217
  %v252 = vpack.c.b16 %v220, %v219
  %v253 = vpack.c.b16 %v222, %v221
  %v254 = vpack.c.b16 %v224, %v223
  %v255 = vpack.c.b16 %v226, %v225
  %v256 = vpack.c.b16 %v228, %v227
  %v257 = vpack.c.b16 %v230, %v229
  %v258 = vpack.c.b16 %v232, %v231
  %v259 = vpack.c.b16 %v234, %v233
  %v260 = vpack.c.b16 %v236, %v235
  %v261 = vpack.c.b16 %v238, %v237
  %v262 = vpack.c.b16 %v240, %v239
  %v263 = vpack.c.b16 %v242, %v241
  %v264 = vpack.c.b16 %v244, %v243
  %v265 = vpack.c.b16 %v246, %v245
  %v266 = vpack.c.b16 %v248, %v247
  %vm285 = vcmask 261120
  %v287 = vsel %vm285, %v144, 0
  %v290 = vsel %vm285, %v147, 0
  %v293 = vsel %vm285, %v150, 0
  %v296 = vsel %vm285, %v153, 0
  %v299 = vsel %vm285, %v156, 0
  %v302 = vsel %vm285, %v159, 0
  %v305 = vsel %vm285, %v162, 0
  %307 = vmatprep.subr.bf16.mxu0 0
  %308 = vmatpush1.bf16.msra.mxu0 %v256
  %309 = vmatprep.subr.bf16.mxu0 0
  %310 = vmatpush1.bf16.msra.mxu0 %v255
  %311 = vmatprep.subr.bf16.mxu0 0
  %312 = vmatpush1.bf16.msra.mxu0 %v254
  %313 = vmatprep.subr.bf16.mxu0 0
  %314 = vmatpush1.bf16.msra.mxu0 %v253
  %315 = vmatprep.subr.bf16.mxu0 0
  %316 = vmatpush1.bf16.msra.mxu0 %v252
  %317 = vmatprep.subr.bf16.mxu0 0
  %318 = vmatpush1.bf16.msra.mxu0 %v251
  %319 = vmatprep.subr.bf16.mxu0 0
  %320 = vmatpush1.bf16.msra.mxu0 %v250
  %321 = vmatprep.subr.bf16.mxu0 0
  %322 = vmatpush1.bf16.msra.mxu0 %v249
  %323 = vmatprep.subr.bf16.mxu0 0
  %324 = vmatpush2.bf16.msra.mxu0 %v264
  %325 = vmatprep.subr.bf16.mxu0 0
  %326 = vmatpush2.bf16.msra.mxu0 %v263
  %327 = vmatprep.subr.bf16.mxu0 0
  %328 = vmatpush2.bf16.msra.mxu0 %v262
  %329 = vmatprep.subr.bf16.mxu0 0
  %330 = vmatpush2.bf16.msra.mxu0 %v261
  %331 = vmatprep.subr.bf16.mxu0 0
  %332 = vmatpush2.bf16.msra.mxu0 %v260
  %333 = vmatprep.subr.bf16.mxu0 0
  %334 = vmatpush2.bf16.msra.mxu0 %v259
  %335 = vmatprep.subr.bf16.mxu0 0
  %336 = vmatpush2.bf16.msra.mxu0 %v258
  %337 = vmatprep.subr.bf16.mxu0 0
  %338 = vmatpush2.bf16.msra.mxu0 %v257
  %339 = vmatprep.mubr.bf16.mxu0 %v143
  %340 = vmatmul.mubr.bf16.gmra.mxu0 %v142
  %v341 = vpop.f32.mrf.mxu0
  %v342 = vadd.f32 0.0, %v341
  %v343 = vpop.f32.mrf.mxu0
  %v344 = vpop.f32.mrf.mxu0
  %v345 = vadd.f32 0.0, %v344
  %v346 = vpop.f32.mrf.mxu0
  %347 = vmatprep.mubr.bf16.mxu0 %v146
  %348 = vmatmul.mubr.bf16.gmra.mxu0 %v145
  %v349 = vpop.f32.mrf.mxu0
  %v350 = vadd.f32 0.0, %v349
  %v351 = vpop.f32.mrf.mxu0
  %v352 = vpop.f32.mrf.mxu0
  %v353 = vadd.f32 0.0, %v352
  %v354 = vpop.f32.mrf.mxu0
  %355 = vmatprep.mubr.bf16.mxu0 %v149
  %356 = vmatmul.mubr.bf16.gmra.mxu0 %v148
  %v357 = vpop.f32.mrf.mxu0
  %v358 = vadd.f32 0.0, %v357
  %v359 = vpop.f32.mrf.mxu0
  %v360 = vpop.f32.mrf.mxu0
  %v361 = vadd.f32 0.0, %v360
  %v362 = vpop.f32.mrf.mxu0
  %363 = vmatprep.mubr.bf16.mxu0 %v152
  %364 = vmatmul.mubr.bf16.gmra.mxu0 %v151
  %v365 = vpop.f32.mrf.mxu0
  %v366 = vadd.f32 0.0, %v365
  %v367 = vpop.f32.mrf.mxu0
  %v368 = vpop.f32.mrf.mxu0
  %v369 = vadd.f32 0.0, %v368
  %v370 = vpop.f32.mrf.mxu0
  %371 = vmatprep.mubr.bf16.mxu0 %v155
  %372 = vmatmul.mubr.bf16.gmra.mxu0 %v154
  %v373 = vpop.f32.mrf.mxu0
  %v374 = vadd.f32 0.0, %v373
  %v375 = vpop.f32.mrf.mxu0
  %v376 = vpop.f32.mrf.mxu0
  %v377 = vadd.f32 0.0, %v376
  %v378 = vpop.f32.mrf.mxu0
  %379 = vmatprep.mubr.bf16.mxu0 %v158
  %380 = vmatmul.mubr.bf16.gmra.mxu0 %v157
  %v381 = vpop.f32.mrf.mxu0
  %v382 = vadd.f32 0.0, %v381
  %v383 = vpop.f32.mrf.mxu0
  %v384 = vpop.f32.mrf.mxu0
  %v385 = vadd.f32 0.0, %v384
  %v386 = vpop.f32.mrf.mxu0
  %387 = vmatprep.mubr.bf16.mxu0 %v161
  %388 = vmatmul.mubr.bf16.gmra.mxu0 %v160
  %v389 = vpop.f32.mrf.mxu0
  %v390 = vadd.f32 0.0, %v389
  %v391 = vpop.f32.mrf.mxu0
  %v392 = vpop.f32.mrf.mxu0
  %v393 = vpop.f32.mrf.mxu0
  %394 = vdwg.mxu0
  %395 = vmatprep.subr.bf16.mxu0 0
  %396 = vmatpush1.bf16.msra.mxu0 0
  %397 = vmatprep.subr.bf16.mxu0 0
  %398 = vmatpush1.bf16.msra.mxu0 0
  %399 = vmatprep.subr.bf16.mxu0 0
  %400 = vmatpush1.bf16.msra.mxu0 0
  %401 = vmatprep.subr.bf16.mxu0 0
  %402 = vmatpush1.bf16.msra.mxu0 0
  %403 = vmatprep.subr.bf16.mxu0 0
  %404 = vmatpush1.bf16.msra.mxu0 0
  %405 = vmatprep.subr.bf16.mxu0 0
  %406 = vmatpush1.bf16.msra.mxu0 0
  %407 = vmatprep.subr.bf16.mxu0 0
  %408 = vmatpush1.bf16.msra.mxu0 %v266
  %409 = vmatprep.subr.bf16.mxu0 0
  %410 = vmatpush1.bf16.msra.mxu0 %v265
  %411 = vmatprep.subr.bf16.mxu0 0
  %412 = vmatpush2.bf16.msra.mxu0 0
  %413 = vmatprep.subr.bf16.mxu0 0
  %414 = vmatpush2.bf16.msra.mxu0 0
  %415 = vmatprep.subr.bf16.mxu0 0
  %416 = vmatpush2.bf16.msra.mxu0 0
  %417 = vmatprep.subr.bf16.mxu0 0
  %418 = vmatpush2.bf16.msra.mxu0 0
  %419 = vmatprep.subr.bf16.mxu0 0
  %420 = vmatpush2.bf16.msra.mxu0 0
  %421 = vmatprep.subr.bf16.mxu0 0
  %422 = vmatpush2.bf16.msra.mxu0 0
  %423 = vmatprep.subr.bf16.mxu0 0
  %424 = vmatpush2.bf16.msra.mxu0 0
  %425 = vmatprep.subr.bf16.mxu0 0
  %426 = vmatpush2.bf16.msra.mxu0 0
  %427 = vmatprep.mubr.bf16.mxu0 0
  %428 = vmatmul.mubr.bf16.gmra.mxu0 %v287
  %v429 = vpop.f32.mrf.mxu0
  %v430 = vadd.f32 %v342, %v429
  %v431 = vpop.f32.mrf.mxu0
  %v432 = vpop.f32.mrf.mxu0
  %v433 = vadd.f32 %v345, %v432
  %v434 = vpop.f32.mrf.mxu0
  %435 = vmatprep.mubr.bf16.mxu0 0
  %436 = vmatmul.mubr.bf16.gmra.mxu0 %v290
  %v437 = vpop.f32.mrf.mxu0
  %v438 = vadd.f32 %v350, %v437
  %v439 = vpop.f32.mrf.mxu0
  %v440 = vpop.f32.mrf.mxu0
  %v441 = vadd.f32 %v353, %v440
  %v442 = vpop.f32.mrf.mxu0
  %443 = vmatprep.mubr.bf16.mxu0 0
  %444 = vmatmul.mubr.bf16.gmra.mxu0 %v293
  %v445 = vpop.f32.mrf.mxu0
  %v446 = vadd.f32 %v358, %v445
  %v447 = vpop.f32.mrf.mxu0
  %v448 = vpop.f32.mrf.mxu0
  %v449 = vadd.f32 %v361, %v448
  %v450 = vpop.f32.mrf.mxu0
  %451 = vmatprep.mubr.bf16.mxu0 0
  %452 = vmatmul.mubr.bf16.gmra.mxu0 %v296
  %v453 = vpop.f32.mrf.mxu0
  %v454 = vadd.f32 %v366, %v453
  %v455 = vpop.f32.mrf.mxu0
  %v456 = vpop.f32.mrf.mxu0
  %v457 = vadd.f32 %v369, %v456
  %v458 = vpop.f32.mrf.mxu0
  %459 = vmatprep.mubr.bf16.mxu0 0
  %460 = vmatmul.mubr.bf16.gmra.mxu0 %v299
  %v461 = vpop.f32.mrf.mxu0
  %v462 = vadd.f32 %v374, %v461
  %v463 = vpop.f32.mrf.mxu0
  %v464 = vpop.f32.mrf.mxu0
  %v465 = vadd.f32 %v377, %v464
  %v466 = vpop.f32.mrf.mxu0
  %467 = vmatprep.mubr.bf16.mxu0 0
  %468 = vmatmul.mubr.bf16.gmra.mxu0 %v302
  %v469 = vpop.f32.mrf.mxu0
  %v470 = vadd.f32 %v382, %v469
  %v471 = vpop.f32.mrf.mxu0
  %v472 = vpop.f32.mrf.mxu0
  %v473 = vadd.f32 %v385, %v472
  %v474 = vpop.f32.mrf.mxu0
  %475 = vmatprep.mubr.bf16.mxu0 0
  %476 = vmatmul.mubr.bf16.gmra.mxu0 %v305
  %v477 = vpop.f32.mrf.mxu0
  %v478 = vadd.f32 %v390, %v477
  %v479 = vpop.f32.mrf.mxu0
  %v480 = vpop.f32.mrf.mxu0
  %v481 = vpop.f32.mrf.mxu0
  %482 = vdwg.mxu0
  %s483 = scalar_lea.vmem %s0, 156
  %v484 = vld [vmem:[%s483] sm:$0xff]
  %v485 = vld [vmem:[%s483 + $0x8] sm:$0xf]
  %v486 = vld [vmem:[%s483 + $0xc] sm:$0xff]
  %v487 = vld [vmem:[%s483 + $0x14] sm:$0xf]
  %v488 = vld [vmem:[%s483 + $0x18] sm:$0xff]
  %v489 = vld [vmem:[%s483 + $0x20] sm:$0xf]
  %v490 = vld [vmem:[%s483 + $0x24] sm:$0xff]
  %v491 = vld [vmem:[%s483 + $0x2c] sm:$0xf]
  %v492 = vld [vmem:[%s483 + $0x30] sm:$0xff]
  %v493 = vld [vmem:[%s483 + $0x38] sm:$0xf]
  %v494 = vld [vmem:[%s483 + $0x3c] sm:$0xff]
  %v495 = vld [vmem:[%s483 + $0x44] sm:$0xf]
  %v496 = vld [vmem:[%s483 + $0x48] sm:$0xff]
  %v497 = vld [vmem:[%s483 + $0x50] sm:$0xf]
  %v498 = vld [vmem:[%s483 + $0x54] sm:$0xff]
  %v499 = vld [vmem:[%s483 + $0x5c] sm:$0xf]
  %v500 = vld [vmem:[%s483 + $0x60] sm:$0xff]
  %v501 = vld [vmem:[%s483 + $0x68] sm:$0xf]
  %v502 = vld [vmem:[%s483 + $0x6c] sm:$0xff]
  %v503 = vld [vmem:[%s483 + $0x74] sm:$0xf]
  %v504 = vld [vmem:[%s483 + $0x78] sm:$0xff]
  %v505 = vld [vmem:[%s483 + $0x80] sm:$0xf]
  %v506 = vld [vmem:[%s483 + $0x84] sm:$0xff]
  %v507 = vld [vmem:[%s483 + $0x8c] sm:$0xf]
  %v508 = vld [vmem:[%s483 + $0x90] sm:$0xff]
  %v509 = vld [vmem:[%s483 + $0x98] sm:$0xf]
  %v536 = vunpack.c.l.b16 %v484
  %v537 = vunpack.c.h.b16 %v484
  %v538 = vunpack.c.l.b16 %v485
  %v539 = vunpack.c.l.b16 %v486
  %v540 = vunpack.c.h.b16 %v486
  %v541 = vunpack.c.l.b16 %v487
  %v542 = vunpack.c.l.b16 %v488
  %v543 = vunpack.c.h.b16 %v488
  %v544 = vunpack.c.l.b16 %v489
  %v545 = vunpack.c.l.b16 %v490
  %v546 = vunpack.c.h.b16 %v490
  %v547 = vunpack.c.l.b16 %v491
  %v548 = vunpack.c.l.b16 %v492
  %v549 = vunpack.c.h.b16 %v492
  %v550 = vunpack.c.l.b16 %v493
  %v551 = vunpack.c.l.b16 %v494
  %v552 = vunpack.c.h.b16 %v494
  %v553 = vunpack.c.l.b16 %v495
  %v554 = vunpack.c.l.b16 %v496
  %v555 = vunpack.c.h.b16 %v496
  %v556 = vunpack.c.l.b16 %v497
  %v557 = vunpack.c.l.b16 %v498
  %v558 = vunpack.c.h.b16 %v498
  %v559 = vunpack.c.l.b16 %v499
  %v560 = vunpack.c.l.b16 %v500
  %v561 = vunpack.c.h.b16 %v500
  %v562 = vunpack.c.l.b16 %v501
  %v563 = vunpack.c.l.b16 %v502
  %v564 = vunpack.c.h.b16 %v502
  %v565 = vunpack.c.l.b16 %v503
  %v566 = vunpack.c.l.b16 %v504
  %v567 = vunpack.c.h.b16 %v504
  %v568 = vunpack.c.l.b16 %v505
  %v569 = vunpack.c.l.b16 %v506
  %v570 = vunpack.c.h.b16 %v506
  %v571 = vunpack.c.l.b16 %v507
  %v572 = vunpack.c.l.b16 %v508
  %v573 = vunpack.c.h.b16 %v508
  %v574 = vunpack.c.l.b16 %v509
  %v575 = vpack.c.b16 %v539, %v536
  %v576 = vpack.c.b16 %v540, %v537
  %v577 = vpack.c.b16 %v541, %v538
  %v578 = vpack.c.b16 %v545, %v542
  %v579 = vpack.c.b16 %v546, %v543
  %v580 = vpack.c.b16 %v547, %v544
  %v581 = vpack.c.b16 %v551, %v548
  %v582 = vpack.c.b16 %v552, %v549
  %v583 = vpack.c.b16 %v553, %v550
  %v584 = vpack.c.b16 %v557, %v554
  %v585 = vpack.c.b16 %v558, %v555
  %v586 = vpack.c.b16 %v559, %v556
  %v587 = vpack.c.b16 %v563, %v560
  %v588 = vpack.c.b16 %v564, %v561
  %v589 = vpack.c.b16 %v565, %v562
  %v590 = vpack.c.b16 %v569, %v566
  %v591 = vpack.c.b16 %v570, %v567
  %v592 = vpack.c.b16 %v571, %v568
  %v593 = vpack.c.b16 %v572, %v572
  %v594 = vpack.c.b16 %v573, %v573
  %v595 = vpack.c.b16 %v574, %v574
  %v611 = vsel %vm285, %v577, 0
  %v614 = vsel %vm285, %v580, 0
  %v617 = vsel %vm285, %v583, 0
  %v620 = vsel %vm285, %v586, 0
  %v623 = vsel %vm285, %v589, 0
  %v626 = vsel %vm285, %v592, 0
  %v629 = vsel %vm285, %v595, 0
  %631 = vmatprep.subr.bf16.mxu0 0
  %632 = vmatpush1.bf16.msra.mxu0 %v256
  %633 = vmatprep.subr.bf16.mxu0 0
  %634 = vmatpush1.bf16.msra.mxu0 %v255
  %635 = vmatprep.subr.bf16.mxu0 0
  %636 = vmatpush1.bf16.msra.mxu0 %v254
  %637 = vmatprep.subr.bf16.mxu0 0
  %638 = vmatpush1.bf16.msra.mxu0 %v253
  %639 = vmatprep.subr.bf16.mxu0 0
  %640 = vmatpush1.bf16.msra.mxu0 %v252
  %641 = vmatprep.subr.bf16.mxu0 0
  %642 = vmatpush1.bf16.msra.mxu0 %v251
  %643 = vmatprep.subr.bf16.mxu0 0
  %644 = vmatpush1.bf16.msra.mxu0 %v250
  %645 = vmatprep.subr.bf16.mxu0 0
  %646 = vmatpush1.bf16.msra.mxu0 %v249
  %647 = vmatprep.subr.bf16.mxu0 0
  %648 = vmatpush2.bf16.msra.mxu0 %v264
  %649 = vmatprep.subr.bf16.mxu0 0
  %650 = vmatpush2.bf16.msra.mxu0 %v263
  %651 = vmatprep.subr.bf16.mxu0 0
  %652 = vmatpush2.bf16.msra.mxu0 %v262
  %653 = vmatprep.subr.bf16.mxu0 0
  %654 = vmatpush2.bf16.msra.mxu0 %v261
  %655 = vmatprep.subr.bf16.mxu0 0
  %656 = vmatpush2.bf16.msra.mxu0 %v260
  %657 = vmatprep.subr.bf16.mxu0 0
  %658 = vmatpush2.bf16.msra.mxu0 %v259
  %659 = vmatprep.subr.bf16.mxu0 0
  %660 = vmatpush2.bf16.msra.mxu0 %v258
  %661 = vmatprep.subr.bf16.mxu0 0
  %662 = vmatpush2.bf16.msra.mxu0 %v257
  %663 = vmatprep.mubr.bf16.mxu0 %v576
  %664 = vmatmul.mubr.bf16.gmra.mxu0 %v575
  %v665 = vpop.f32.mrf.mxu0
  %v666 = vadd.f32 0.0, %v665
  %v667 = vpop.f32.mrf.mxu0
  %v668 = vpop.f32.mrf.mxu0
  %v669 = vadd.f32 0.0, %v668
  %v670 = vpop.f32.mrf.mxu0
  %671 = vmatprep.mubr.bf16.mxu0 %v579
  %672 = vmatmul.mubr.bf16.gmra.mxu0 %v578
  %v673 = vpop.f32.mrf.mxu0
  %v674 = vadd.f32 0.0, %v673
  %v675 = vpop.f32.mrf.mxu0
  %v676 = vpop.f32.mrf.mxu0
  %v677 = vadd.f32 0.0, %v676
  %v678 = vpop.f32.mrf.mxu0
  %679 = vmatprep.mubr.bf16.mxu0 %v582
  %680 = vmatmul.mubr.bf16.gmra.mxu0 %v581
  %v681 = vpop.f32.mrf.mxu0
  %v682 = vadd.f32 0.0, %v681
  %v683 = vpop.f32.mrf.mxu0
  %v684 = vpop.f32.mrf.mxu0
  %v685 = vadd.f32 0.0, %v684
  %v686 = vpop.f32.mrf.mxu0
  %687 = vmatprep.mubr.bf16.mxu0 %v585
  %688 = vmatmul.mubr.bf16.gmra.mxu0 %v584
  %v689 = vpop.f32.mrf.mxu0
  %v690 = vadd.f32 0.0, %v689
  %v691 = vpop.f32.mrf.mxu0
  %v692 = vpop.f32.mrf.mxu0
  %v693 = vadd.f32 0.0, %v692
  %v694 = vpop.f32.mrf.mxu0
  %695 = vmatprep.mubr.bf16.mxu0 %v588
  %696 = vmatmul.mubr.bf16.gmra.mxu0 %v587
  %v697 = vpop.f32.mrf.mxu0
  %v698 = vadd.f32 0.0, %v697
  %v699 = vpop.f32.mrf.mxu0
  %v700 = vpop.f32.mrf.mxu0
  %v701 = vadd.f32 0.0, %v700
  %v702 = vpop.f32.mrf.mxu0
  %703 = vmatprep.mubr.bf16.mxu0 %v591
  %704 = vmatmul.mubr.bf16.gmra.mxu0 %v590
  %v705 = vpop.f32.mrf.mxu0
  %v706 = vadd.f32 0.0, %v705
  %v707 = vpop.f32.mrf.mxu0
  %v708 = vpop.f32.mrf.mxu0
  %v709 = vadd.f32 0.0, %v708
  %v710 = vpop.f32.mrf.mxu0
  %711 = vmatprep.mubr.bf16.mxu0 %v594
  %712 = vmatmul.mubr.bf16.gmra.mxu0 %v593
  %v713 = vpop.f32.mrf.mxu0
  %v714 = vadd.f32 0.0, %v713
  %v715 = vpop.f32.mrf.mxu0
  %v716 = vpop.f32.mrf.mxu0
  %v717 = vpop.f32.mrf.mxu0
  %718 = vdwg.mxu0
  %719 = vmatprep.subr.bf16.mxu0 0
  %720 = vmatpush1.bf16.msra.mxu0 0
  %721 = vmatprep.subr.bf16.mxu0 0
  %722 = vmatpush1.bf16.msra.mxu0 0
  %723 = vmatprep.subr.bf16.mxu0 0
  %724 = vmatpush1.bf16.msra.mxu0 0
  %725 = vmatprep.subr.bf16.mxu0 0
  %726 = vmatpush1.bf16.msra.mxu0 0
  %727 = vmatprep.subr.bf16.mxu0 0
  %728 = vmatpush1.bf16.msra.mxu0 0
  %729 = vmatprep.subr.bf16.mxu0 0
  %730 = vmatpush1.bf16.msra.mxu0 0
  %731 = vmatprep.subr.bf16.mxu0 0
  %732 = vmatpush1.bf16.msra.mxu0 %v266
  %733 = vmatprep.subr.bf16.mxu0 0
  %734 = vmatpush1.bf16.msra.mxu0 %v265
  %735 = vmatprep.subr.bf16.mxu0 0
  %736 = vmatpush2.bf16.msra.mxu0 0
  %737 = vmatprep.subr.bf16.mxu0 0
  %738 = vmatpush2.bf16.msra.mxu0 0
  %739 = vmatprep.subr.bf16.mxu0 0
  %740 = vmatpush2.bf16.msra.mxu0 0
  %741 = vmatprep.subr.bf16.mxu0 0
  %742 = vmatpush2.bf16.msra.mxu0 0
  %743 = vmatprep.subr.bf16.mxu0 0
  %744 = vmatpush2.bf16.msra.mxu0 0
  %745 = vmatprep.subr.bf16.mxu0 0
  %746 = vmatpush2.bf16.msra.mxu0 0
  %747 = vmatprep.subr.bf16.mxu0 0
  %748 = vmatpush2.bf16.msra.mxu0 0
  %749 = vmatprep.subr.bf16.mxu0 0
  %750 = vmatpush2.bf16.msra.mxu0 0
  %751 = vmatprep.mubr.bf16.mxu0 0
  %752 = vmatmul.mubr.bf16.gmra.mxu0 %v611
  %v753 = vpop.f32.mrf.mxu0
  %v754 = vadd.f32 %v666, %v753
  %v755 = vpop.f32.mrf.mxu0
  %v756 = vpop.f32.mrf.mxu0
  %v757 = vadd.f32 %v669, %v756
  %v758 = vpop.f32.mrf.mxu0
  %759 = vmatprep.mubr.bf16.mxu0 0
  %760 = vmatmul.mubr.bf16.gmra.mxu0 %v614
  %v761 = vpop.f32.mrf.mxu0
  %v762 = vadd.f32 %v674, %v761
  %v763 = vpop.f32.mrf.mxu0
  %v764 = vpop.f32.mrf.mxu0
  %v765 = vadd.f32 %v677, %v764
  %v766 = vpop.f32.mrf.mxu0
  %767 = vmatprep.mubr.bf16.mxu0 0
  %768 = vmatmul.mubr.bf16.gmra.mxu0 %v617
  %v769 = vpop.f32.mrf.mxu0
  %v770 = vadd.f32 %v682, %v769
  %v771 = vpop.f32.mrf.mxu0
  %v772 = vpop.f32.mrf.mxu0
  %v773 = vadd.f32 %v685, %v772
  %v774 = vpop.f32.mrf.mxu0
  %775 = vmatprep.mubr.bf16.mxu0 0
  %776 = vmatmul.mubr.bf16.gmra.mxu0 %v620
  %v777 = vpop.f32.mrf.mxu0
  %v778 = vadd.f32 %v690, %v777
  %v779 = vpop.f32.mrf.mxu0
  %v780 = vpop.f32.mrf.mxu0
  %v781 = vadd.f32 %v693, %v780
  %v782 = vpop.f32.mrf.mxu0
  %783 = vmatprep.mubr.bf16.mxu0 0
  %784 = vmatmul.mubr.bf16.gmra.mxu0 %v623
  %v785 = vpop.f32.mrf.mxu0
  %v786 = vadd.f32 %v698, %v785
  %v787 = vpop.f32.mrf.mxu0
  %v788 = vpop.f32.mrf.mxu0
  %v789 = vadd.f32 %v701, %v788
  %v790 = vpop.f32.mrf.mxu0
  %791 = vmatprep.mubr.bf16.mxu0 0
  %792 = vmatmul.mubr.bf16.gmra.mxu0 %v626
  %v793 = vpop.f32.mrf.mxu0
  %v794 = vadd.f32 %v706, %v793
  %v795 = vpop.f32.mrf.mxu0
  %v796 = vpop.f32.mrf.mxu0
  %v797 = vadd.f32 %v709, %v796
  %v798 = vpop.f32.mrf.mxu0
  %799 = vmatprep.mubr.bf16.mxu0 0
  %800 = vmatmul.mubr.bf16.gmra.mxu0 %v629
  %v801 = vpop.f32.mrf.mxu0
  %v802 = vadd.f32 %v714, %v801
  %v803 = vpop.f32.mrf.mxu0
  %v804 = vpop.f32.mrf.mxu0
  %v805 = vpop.f32.mrf.mxu0
  %806 = vdwg.mxu0
  %v807 = vmax.f32 %v430, %v754
  %v808 = vmax.f32 %v433, %v757
  %v809 = vmax.f32 %v438, %v762
  %v810 = vmax.f32 %v441, %v765
  %v811 = vmax.f32 %v446, %v770
  %v812 = vmax.f32 %v449, %v773
  %v813 = vmax.f32 %v454, %v778
  %v814 = vmax.f32 %v457, %v781
  %v815 = vmax.f32 %v462, %v786
  %v816 = vmax.f32 %v465, %v789
  %v817 = vmax.f32 %v470, %v794
  %v818 = vmax.f32 %v473, %v797
  %v819 = vmax.f32 %v478, %v802
  %s820 = scalar_lea.vmem %s0, 312
  %v821 = vld [vmem:[%s820] sm:$0xff]
  %v822 = vld [vmem:[%s820 + $0x8] sm:$0xf]
  %v823 = vld [vmem:[%s820 + $0xc] sm:$0xff]
  %v824 = vld [vmem:[%s820 + $0x14] sm:$0xf]
  %v825 = vld [vmem:[%s820 + $0x18] sm:$0xff]
  %v826 = vld [vmem:[%s820 + $0x20] sm:$0xf]
  %v827 = vld [vmem:[%s820 + $0x24] sm:$0xff]
  %v828 = vld [vmem:[%s820 + $0x2c] sm:$0xf]
  %v829 = vld [vmem:[%s820 + $0x30] sm:$0xff]
  %v830 = vld [vmem:[%s820 + $0x38] sm:$0xf]
  %v831 = vld [vmem:[%s820 + $0x3c] sm:$0xff]
  %v832 = vld [vmem:[%s820 + $0x44] sm:$0xf]
  %v833 = vld [vmem:[%s820 + $0x48] sm:$0xff]
  %v834 = vld [vmem:[%s820 + $0x50] sm:$0xf]
  %v835 = vld [vmem:[%s820 + $0x54] sm:$0xff]
  %v836 = vld [vmem:[%s820 + $0x5c] sm:$0xf]
  %v837 = vld [vmem:[%s820 + $0x60] sm:$0xff]
  %v838 = vld [vmem:[%s820 + $0x68] sm:$0xf]
  %v839 = vld [vmem:[%s820 + $0x6c] sm:$0xff]
  %v840 = vld [vmem:[%s820 + $0x74] sm:$0xf]
  %v841 = vld [vmem:[%s820 + $0x78] sm:$0xff]
  %v842 = vld [vmem:[%s820 + $0x80] sm:$0xf]
  %v843 = vld [vmem:[%s820 + $0x84] sm:$0xff]
  %v844 = vld [vmem:[%s820 + $0x8c] sm:$0xf]
  %v845 = vld [vmem:[%s820 + $0x90] sm:$0xff]
  %v846 = vld [vmem:[%s820 + $0x98] sm:$0xf]
  %v873 = vunpack.c.l.b16 %v821
  %v874 = vunpack.c.h.b16 %v821
  %v875 = vunpack.c.l.b16 %v822
  %v876 = vunpack.c.l.b16 %v823
  %v877 = vunpack.c.h.b16 %v823
  %v878 = vunpack.c.l.b16 %v824
  %v879 = vunpack.c.l.b16 %v825
  %v880 = vunpack.c.h.b16 %v825
  %v881 = vunpack.c.l.b16 %v826
  %v882 = vunpack.c.l.b16 %v827
  %v883 = vunpack.c.h.b16 %v827
  %v884 = vunpack.c.l.b16 %v828
  %v885 = vunpack.c.l.b16 %v829
  %v886 = vunpack.c.h.b16 %v829
  %v887 = vunpack.c.l.b16 %v830
  %v888 = vunpack.c.l.b16 %v831
  %v889 = vunpack.c.h.b16 %v831
  %v890 = vunpack.c.l.b16 %v832
  %v891 = vunpack.c.l.b16 %v833
  %v892 = vunpack.c.h.b16 %v833
  %v893 = vunpack.c.l.b16 %v834
  %v894 = vunpack.c.l.b16 %v835
  %v895 = vunpack.c.h.b16 %v835
  %v896 = vunpack.c.l.b16 %v836
  %v897 = vunpack.c.l.b16 %v837
  %v898 = vunpack.c.h.b16 %v837
  %v899 = vunpack.c.l.b16 %v838
  %v900 = vunpack.c.l.b16 %v839
  %v901 = vunpack.c.h.b16 %v839
  %v902 = vunpack.c.l.b16 %v840
  %v903 = vunpack.c.l.b16 %v841
  %v904 = vunpack.c.h.b16 %v841
  %v905 = vunpack.c.l.b16 %v842
  %v906 = vunpack.c.l.b16 %v843
  %v907 = vunpack.c.h.b16 %v843
  %v908 = vunpack.c.l.b16 %v844
  %v909 = vunpack.c.l.b16 %v845
  %v910 = vunpack.c.h.b16 %v845
  %v911 = vunpack.c.l.b16 %v846
  %v912 = vpack.c.b16 %v876, %v873
  %v913 = vpack.c.b16 %v877, %v874
  %v914 = vpack.c.b16 %v878, %v875
  %v915 = vpack.c.b16 %v882, %v879
  %v916 = vpack.c.b16 %v883, %v880
  %v917 = vpack.c.b16 %v884, %v881
  %v918 = vpack.c.b16 %v888, %v885
  %v919 = vpack.c.b16 %v889, %v886
  %v920 = vpack.c.b16 %v890, %v887
  %v921 = vpack.c.b16 %v894, %v891
  %v922 = vpack.c.b16 %v895, %v892
  %v923 = vpack.c.b16 %v896, %v893
  %v924 = vpack.c.b16 %v900, %v897
  %v925 = vpack.c.b16 %v901, %v898
  %v926 = vpack.c.b16 %v902, %v899
  %v927 = vpack.c.b16 %v906, %v903
  %v928 = vpack.c.b16 %v907, %v904
  %v929 = vpack.c.b16 %v908, %v905
  %v930 = vpack.c.b16 %v909, %v909
  %v931 = vpack.c.b16 %v910, %v910
  %v932 = vpack.c.b16 %v911, %v911
  %v948 = vsel %vm285, %v914, 0
  %v951 = vsel %vm285, %v917, 0
  %v954 = vsel %vm285, %v920, 0
  %v957 = vsel %vm285, %v923, 0
  %v960 = vsel %vm285, %v926, 0
  %v963 = vsel %vm285, %v929, 0
  %v966 = vsel %vm285, %v932, 0
  %968 = vmatprep.subr.bf16.mxu0 0
  %969 = vmatpush1.bf16.msra.mxu0 %v256
  %970 = vmatprep.subr.bf16.mxu0 0
  %971 = vmatpush1.bf16.msra.mxu0 %v255
  %972 = vmatprep.subr.bf16.mxu0 0
  %973 = vmatpush1.bf16.msra.mxu0 %v254
  %974 = vmatprep.subr.bf16.mxu0 0
  %975 = vmatpush1.bf16.msra.mxu0 %v253
  %976 = vmatprep.subr.bf16.mxu0 0
  %977 = vmatpush1.bf16.msra.mxu0 %v252
  %978 = vmatprep.subr.bf16.mxu0 0
  %979 = vmatpush1.bf16.msra.mxu0 %v251
  %980 = vmatprep.subr.bf16.mxu0 0
  %981 = vmatpush1.bf16.msra.mxu0 %v250
  %982 = vmatprep.subr.bf16.mxu0 0
  %983 = vmatpush1.bf16.msra.mxu0 %v249
  %984 = vmatprep.subr.bf16.mxu0 0
  %985 = vmatpush2.bf16.msra.mxu0 %v264
  %986 = vmatprep.subr.bf16.mxu0 0
  %987 = vmatpush2.bf16.msra.mxu0 %v263
  %988 = vmatprep.subr.bf16.mxu0 0
  %989 = vmatpush2.bf16.msra.mxu0 %v262
  %990 = vmatprep.subr.bf16.mxu0 0
  %991 = vmatpush2.bf16.msra.mxu0 %v261
  %992 = vmatprep.subr.bf16.mxu0 0
  %993 = vmatpush2.bf16.msra.mxu0 %v260
  %994 = vmatprep.subr.bf16.mxu0 0
  %995 = vmatpush2.bf16.msra.mxu0 %v259
  %996 = vmatprep.subr.bf16.mxu0 0
  %997 = vmatpush2.bf16.msra.mxu0 %v258
  %998 = vmatprep.subr.bf16.mxu0 0
  %999 = vmatpush2.bf16.msra.mxu0 %v257
  %1000 = vmatprep.mubr.bf16.mxu0 %v913
  %1001 = vmatmul.mubr.bf16.gmra.mxu0 %v912
  %v1002 = vpop.f32.mrf.mxu0
  %v1003 = vadd.f32 0.0, %v1002
  %v1004 = vpop.f32.mrf.mxu0
  %v1005 = vpop.f32.mrf.mxu0
  %v1006 = vadd.f32 0.0, %v1005
  %v1007 = vpop.f32.mrf.mxu0
  %1008 = vmatprep.mubr.bf16.mxu0 %v916
  %1009 = vmatmul.mubr.bf16.gmra.mxu0 %v915
  %v1010 = vpop.f32.mrf.mxu0
  %v1011 = vadd.f32 0.0, %v1010
  %v1012 = vpop.f32.mrf.mxu0
  %v1013 = vpop.f32.mrf.mxu0
  %v1014 = vadd.f32 0.0, %v1013
  %v1015 = vpop.f32.mrf.mxu0
  %1016 = vmatprep.mubr.bf16.mxu0 %v919
  %1017 = vmatmul.mubr.bf16.gmra.mxu0 %v918
  %v1018 = vpop.f32.mrf.mxu0
  %v1019 = vadd.f32 0.0, %v1018
  %v1020 = vpop.f32.mrf.mxu0
  %v1021 = vpop.f32.mrf.mxu0
  %v1022 = vadd.f32 0.0, %v1021
  %v1023 = vpop.f32.mrf.mxu0
  %1024 = vmatprep.mubr.bf16.mxu0 %v922
  %1025 = vmatmul.mubr.bf16.gmra.mxu0 %v921
  %v1026 = vpop.f32.mrf.mxu0
  %v1027 = vadd.f32 0.0, %v1026
  %v1028 = vpop.f32.mrf.mxu0
  %v1029 = vpop.f32.mrf.mxu0
  %v1030 = vadd.f32 0.0, %v1029
  %v1031 = vpop.f32.mrf.mxu0
  %1032 = vmatprep.mubr.bf16.mxu0 %v925
  %1033 = vmatmul.mubr.bf16.gmra.mxu0 %v924
  %v1034 = vpop.f32.mrf.mxu0
  %v1035 = vadd.f32 0.0, %v1034
  %v1036 = vpop.f32.mrf.mxu0
  %v1037 = vpop.f32.mrf.mxu0
  %v1038 = vadd.f32 0.0, %v1037
  %v1039 = vpop.f32.mrf.mxu0
  %1040 = vmatprep.mubr.bf16.mxu0 %v928
  %1041 = vmatmul.mubr.bf16.gmra.mxu0 %v927
  %v1042 = vpop.f32.mrf.mxu0
  %v1043 = vadd.f32 0.0, %v1042
  %v1044 = vpop.f32.mrf.mxu0
  %v1045 = vpop.f32.mrf.mxu0
  %v1046 = vadd.f32 0.0, %v1045
  %v1047 = vpop.f32.mrf.mxu0
  %1048 = vmatprep.mubr.bf16.mxu0 %v931
  %1049 = vmatmul.mubr.bf16.gmra.mxu0 %v930
  %v1050 = vpop.f32.mrf.mxu0
  %v1051 = vadd.f32 0.0, %v1050
  %v1052 = vpop.f32.mrf.mxu0
  %v1053 = vpop.f32.mrf.mxu0
  %v1054 = vpop.f32.mrf.mxu0
  %1055 = vdwg.mxu0
  %1056 = vmatprep.subr.bf16.mxu0 0
  %1057 = vmatpush1.bf16.msra.mxu0 0
  %1058 = vmatprep.subr.bf16.mxu0 0
  %1059 = vmatpush1.bf16.msra.mxu0 0
  %1060 = vmatprep.subr.bf16.mxu0 0
  %1061 = vmatpush1.bf16.msra.mxu0 0
  %1062 = vmatprep.subr.bf16.mxu0 0
  %1063 = vmatpush1.bf16.msra.mxu0 0
  %1064 = vmatprep.subr.bf16.mxu0 0
  %1065 = vmatpush1.bf16.msra.mxu0 0
  %1066 = vmatprep.subr.bf16.mxu0 0
  %1067 = vmatpush1.bf16.msra.mxu0 0
  %1068 = vmatprep.subr.bf16.mxu0 0
  %1069 = vmatpush1.bf16.msra.mxu0 %v266
  %1070 = vmatprep.subr.bf16.mxu0 0
  %1071 = vmatpush1.bf16.msra.mxu0 %v265
  %1072 = vmatprep.subr.bf16.mxu0 0
  %1073 = vmatpush2.bf16.msra.mxu0 0
  %1074 = vmatprep.subr.bf16.mxu0 0
  %1075 = vmatpush2.bf16.msra.mxu0 0
  %1076 = vmatprep.subr.bf16.mxu0 0
  %1077 = vmatpush2.bf16.msra.mxu0 0
  %1078 = vmatprep.subr.bf16.mxu0 0
  %1079 = vmatpush2.bf16.msra.mxu0 0
  %1080 = vmatprep.subr.bf16.mxu0 0
  %1081 = vmatpush2.bf16.msra.mxu0 0
  %1082 = vmatprep.subr.bf16.mxu0 0
  %1083 = vmatpush2.bf16.msra.mxu0 0
  %1084 = vmatprep.subr.bf16.mxu0 0
  %1085 = vmatpush2.bf16.msra.mxu0 0
  %1086 = vmatprep.subr.bf16.mxu0 0
  %1087 = vmatpush2.bf16.msra.mxu0 0
  %1088 = vmatprep.mubr.bf16.mxu0 0
  %1089 = vmatmul.mubr.bf16.gmra.mxu0 %v948
  %v1090 = vpop.f32.mrf.mxu0
  %v1091 = vadd.f32 %v1003, %v1090
  %v1092 = vpop.f32.mrf.mxu0
  %v1093 = vpop.f32.mrf.mxu0
  %v1094 = vadd.f32 %v1006, %v1093
  %v1095 = vpop.f32.mrf.mxu0
  %1096 = vmatprep.mubr.bf16.mxu0 0
  %1097 = vmatmul.mubr.bf16.gmra.mxu0 %v951
  %v1098 = vpop.f32.mrf.mxu0
  %v1099 = vadd.f32 %v1011, %v1098
  %v1100 = vpop.f32.mrf.mxu0
  %v1101 = vpop.f32.mrf.mxu0
  %v1102 = vadd.f32 %v1014, %v1101
  %v1103 = vpop.f32.mrf.mxu0
  %1104 = vmatprep.mubr.bf16.mxu0 0
  %1105 = vmatmul.mubr.bf16.gmra.mxu0 %v954
  %v1106 = vpop.f32.mrf.mxu0
  %v1107 = vadd.f32 %v1019, %v1106
  %v1108 = vpop.f32.mrf.mxu0
  %v1109 = vpop.f32.mrf.mxu0
  %v1110 = vadd.f32 %v1022, %v1109
  %v1111 = vpop.f32.mrf.mxu0
  %1112 = vmatprep.mubr.bf16.mxu0 0
  %1113 = vmatmul.mubr.bf16.gmra.mxu0 %v957
  %v1114 = vpop.f32.mrf.mxu0
  %v1115 = vadd.f32 %v1027, %v1114
  %v1116 = vpop.f32.mrf.mxu0
  %v1117 = vpop.f32.mrf.mxu0
  %v1118 = vadd.f32 %v1030, %v1117
  %v1119 = vpop.f32.mrf.mxu0
  %1120 = vmatprep.mubr.bf16.mxu0 0
  %1121 = vmatmul.mubr.bf16.gmra.mxu0 %v960
  %v1122 = vpop.f32.mrf.mxu0
  %v1123 = vadd.f32 %v1035, %v1122
  %v1124 = vpop.f32.mrf.mxu0
  %v1125 = vpop.f32.mrf.mxu0
  %v1126 = vadd.f32 %v1038, %v1125
  %v1127 = vpop.f32.mrf.mxu0
  %1128 = vmatprep.mubr.bf16.mxu0 0
  %1129 = vmatmul.mubr.bf16.gmra.mxu0 %v963
  %v1130 = vpop.f32.mrf.mxu0
  %v1131 = vadd.f32 %v1043, %v1130
  %v1132 = vpop.f32.mrf.mxu0
  %v1133 = vpop.f32.mrf.mxu0
  %v1134 = vadd.f32 %v1046, %v1133
  %v1135 = vpop.f32.mrf.mxu0
  %1136 = vmatprep.mubr.bf16.mxu0 0
  %1137 = vmatmul.mubr.bf16.gmra.mxu0 %v966
  %v1138 = vpop.f32.mrf.mxu0
  %v1139 = vadd.f32 %v1051, %v1138
  %v1140 = vpop.f32.mrf.mxu0
  %v1141 = vpop.f32.mrf.mxu0
  %v1142 = vpop.f32.mrf.mxu0
  %1143 = vdwg.mxu0
  %v1144 = vmax.f32 %v807, %v1091
  %v1145 = vmax.f32 %v808, %v1094
  %v1146 = vmax.f32 %v809, %v1099
  %v1147 = vmax.f32 %v810, %v1102
  %v1148 = vmax.f32 %v811, %v1107
  %v1149 = vmax.f32 %v812, %v1110
  %v1150 = vmax.f32 %v813, %v1115
  %v1151 = vmax.f32 %v814, %v1118
  %v1152 = vmax.f32 %v815, %v1123
  %v1153 = vmax.f32 %v816, %v1126
  %v1154 = vmax.f32 %v817, %v1131
  %v1155 = vmax.f32 %v818, %v1134
  %v1156 = vmax.f32 %v819, %v1139
  %s1157 = scalar_lea.vmem %s0, 468
  %v1158 = vld [vmem:[%s1157] sm:$0xff]
  %v1159 = vld [vmem:[%s1157 + $0x8] sm:$0xf]
  %v1160 = vld [vmem:[%s1157 + $0xc] sm:$0xff]
  %v1161 = vld [vmem:[%s1157 + $0x14] sm:$0xf]
  %v1162 = vld [vmem:[%s1157 + $0x18] sm:$0xff]
  %v1163 = vld [vmem:[%s1157 + $0x20] sm:$0xf]
  %v1164 = vld [vmem:[%s1157 + $0x24] sm:$0xff]
  %v1165 = vld [vmem:[%s1157 + $0x2c] sm:$0xf]
  %v1166 = vld [vmem:[%s1157 + $0x30] sm:$0xff]
  %v1167 = vld [vmem:[%s1157 + $0x38] sm:$0xf]
  %v1168 = vld [vmem:[%s1157 + $0x3c] sm:$0xff]
  %v1169 = vld [vmem:[%s1157 + $0x44] sm:$0xf]
  %v1170 = vld [vmem:[%s1157 + $0x48] sm:$0xff]
  %v1171 = vld [vmem:[%s1157 + $0x50] sm:$0xf]
  %v1172 = vld [vmem:[%s1157 + $0x54] sm:$0xff]
  %v1173 = vld [vmem:[%s1157 + $0x5c] sm:$0xf]
  %v1174 = vld [vmem:[%s1157 + $0x60] sm:$0xff]
  %v1175 = vld [vmem:[%s1157 + $0x68] sm:$0xf]
  %v1176 = vld [vmem:[%s1157 + $0x6c] sm:$0xff]
  %v1177 = vld [vmem:[%s1157 + $0x74] sm:$0xf]
  %v1178 = vld [vmem:[%s1157 + $0x78] sm:$0xff]
  %v1179 = vld [vmem:[%s1157 + $0x80] sm:$0xf]
  %v1180 = vld [vmem:[%s1157 + $0x84] sm:$0xff]
  %v1181 = vld [vmem:[%s1157 + $0x8c] sm:$0xf]
  %v1182 = vld [vmem:[%s1157 + $0x90] sm:$0xff]
  %v1183 = vld [vmem:[%s1157 + $0x98] sm:$0xf]
  %v1210 = vunpack.c.l.b16 %v1158
  %v1211 = vunpack.c.h.b16 %v1158
  %v1212 = vunpack.c.l.b16 %v1159
  %v1213 = vunpack.c.l.b16 %v1160
  %v1214 = vunpack.c.h.b16 %v1160
  %v1215 = vunpack.c.l.b16 %v1161
  %v1216 = vunpack.c.l.b16 %v1162
  %v1217 = vunpack.c.h.b16 %v1162
  %v1218 = vunpack.c.l.b16 %v1163
  %v1219 = vunpack.c.l.b16 %v1164
  %v1220 = vunpack.c.h.b16 %v1164
  %v1221 = vunpack.c.l.b16 %v1165
  %v1222 = vunpack.c.l.b16 %v1166
  %v1223 = vunpack.c.h.b16 %v1166
  %v1224 = vunpack.c.l.b16 %v1167
  %v1225 = vunpack.c.l.b16 %v1168
  %v1226 = vunpack.c.h.b16 %v1168
  %v1227 = vunpack.c.l.b16 %v1169
  %v1228 = vunpack.c.l.b16 %v1170
  %v1229 = vunpack.c.h.b16 %v1170
  %v1230 = vunpack.c.l.b16 %v1171
  %v1231 = vunpack.c.l.b16 %v1172
  %v1232 = vunpack.c.h.b16 %v1172
  %v1233 = vunpack.c.l.b16 %v1173
  %v1234 = vunpack.c.l.b16 %v1174
  %v1235 = vunpack.c.h.b16 %v1174
  %v1236 = vunpack.c.l.b16 %v1175
  %v1237 = vunpack.c.l.b16 %v1176
  %v1238 = vunpack.c.h.b16 %v1176
  %v1239 = vunpack.c.l.b16 %v1177
  %v1240 = vunpack.c.l.b16 %v1178
  %v1241 = vunpack.c.h.b16 %v1178
  %v1242 = vunpack.c.l.b16 %v1179
  %v1243 = vunpack.c.l.b16 %v1180
  %v1244 = vunpack.c.h.b16 %v1180
  %v1245 = vunpack.c.l.b16 %v1181
  %v1246 = vunpack.c.l.b16 %v1182
  %v1247 = vunpack.c.h.b16 %v1182
  %v1248 = vunpack.c.l.b16 %v1183
  %v1249 = vpack.c.b16 %v1213, %v1210
  %v1250 = vpack.c.b16 %v1214, %v1211
  %v1251 = vpack.c.b16 %v1215, %v1212
  %v1252 = vpack.c.b16 %v1219, %v1216
  %v1253 = vpack.c.b16 %v1220, %v1217
  %v1254 = vpack.c.b16 %v1221, %v1218
  %v1255 = vpack.c.b16 %v1225, %v1222
  %v1256 = vpack.c.b16 %v1226, %v1223
  %v1257 = vpack.c.b16 %v1227, %v1224
  %v1258 = vpack.c.b16 %v1231, %v1228
  %v1259 = vpack.c.b16 %v1232, %v1229
  %v1260 = vpack.c.b16 %v1233, %v1230
  %v1261 = vpack.c.b16 %v1237, %v1234
  %v1262 = vpack.c.b16 %v1238, %v1235
  %v1263 = vpack.c.b16 %v1239, %v1236
  %v1264 = vpack.c.b16 %v1243, %v1240
  %v1265 = vpack.c.b16 %v1244, %v1241
  %v1266 = vpack.c.b16 %v1245, %v1242
  %v1267 = vpack.c.b16 %v1246, %v1246
  %v1268 = vpack.c.b16 %v1247, %v1247
  %v1269 = vpack.c.b16 %v1248, %v1248
  %v1285 = vsel %vm285, %v1251, 0
  %v1288 = vsel %vm285, %v1254, 0
  %v1291 = vsel %vm285, %v1257, 0
  %v1294 = vsel %vm285, %v1260, 0
  %v1297 = vsel %vm285, %v1263, 0
  %v1300 = vsel %vm285, %v1266, 0
  %v1303 = vsel %vm285, %v1269, 0
  %1305 = vmatprep.subr.bf16.mxu0 0
  %1306 = vmatpush1.bf16.msra.mxu0 %v256
  %1307 = vmatprep.subr.bf16.mxu0 0
  %1308 = vmatpush1.bf16.msra.mxu0 %v255
  %1309 = vmatprep.subr.bf16.mxu0 0
  %1310 = vmatpush1.bf16.msra.mxu0 %v254
  %1311 = vmatprep.subr.bf16.mxu0 0
  %1312 = vmatpush1.bf16.msra.mxu0 %v253
  %1313 = vmatprep.subr.bf16.mxu0 0
  %1314 = vmatpush1.bf16.msra.mxu0 %v252
  %1315 = vmatprep.subr.bf16.mxu0 0
  %1316 = vmatpush1.bf16.msra.mxu0 %v251
  %1317 = vmatprep.subr.bf16.mxu0 0
  %1318 = vmatpush1.bf16.msra.mxu0 %v250
  %1319 = vmatprep.subr.bf16.mxu0 0
  %1320 = vmatpush1.bf16.msra.mxu0 %v249
  %1321 = vmatprep.subr.bf16.mxu0 0
  %1322 = vmatpush2.bf16.msra.mxu0 %v264
  %1323 = vmatprep.subr.bf16.mxu0 0
  %1324 = vmatpush2.bf16.msra.mxu0 %v263
  %1325 = vmatprep.subr.bf16.mxu0 0
  %1326 = vmatpush2.bf16.msra.mxu0 %v262
  %1327 = vmatprep.subr.bf16.mxu0 0
  %1328 = vmatpush2.bf16.msra.mxu0 %v261
  %1329 = vmatprep.subr.bf16.mxu0 0
  %1330 = vmatpush2.bf16.msra.mxu0 %v260
  %1331 = vmatprep.subr.bf16.mxu0 0
  %1332 = vmatpush2.bf16.msra.mxu0 %v259
  %1333 = vmatprep.subr.bf16.mxu0 0
  %1334 = vmatpush2.bf16.msra.mxu0 %v258
  %1335 = vmatprep.subr.bf16.mxu0 0
  %1336 = vmatpush2.bf16.msra.mxu0 %v257
  %1337 = vmatprep.mubr.bf16.mxu0 %v1250
  %1338 = vmatmul.mubr.bf16.gmra.mxu0 %v1249
  %v1339 = vpop.f32.mrf.mxu0
  %v1340 = vadd.f32 0.0, %v1339
  %v1341 = vpop.f32.mrf.mxu0
  %v1342 = vpop.f32.mrf.mxu0
  %v1343 = vadd.f32 0.0, %v1342
  %v1344 = vpop.f32.mrf.mxu0
  %1345 = vmatprep.mubr.bf16.mxu0 %v1253
  %1346 = vmatmul.mubr.bf16.gmra.mxu0 %v1252
  %v1347 = vpop.f32.mrf.mxu0
  %v1348 = vadd.f32 0.0, %v1347
  %v1349 = vpop.f32.mrf.mxu0
  %v1350 = vpop.f32.mrf.mxu0
  %v1351 = vadd.f32 0.0, %v1350
  %v1352 = vpop.f32.mrf.mxu0
  %1353 = vmatprep.mubr.bf16.mxu0 %v1256
  %1354 = vmatmul.mubr.bf16.gmra.mxu0 %v1255
  %v1355 = vpop.f32.mrf.mxu0
  %v1356 = vadd.f32 0.0, %v1355
  %v1357 = vpop.f32.mrf.mxu0
  %v1358 = vpop.f32.mrf.mxu0
  %v1359 = vadd.f32 0.0, %v1358
  %v1360 = vpop.f32.mrf.mxu0
  %1361 = vmatprep.mubr.bf16.mxu0 %v1259
  %1362 = vmatmul.mubr.bf16.gmra.mxu0 %v1258
  %v1363 = vpop.f32.mrf.mxu0
  %v1364 = vadd.f32 0.0, %v1363
  %v1365 = vpop.f32.mrf.mxu0
  %v1366 = vpop.f32.mrf.mxu0
  %v1367 = vadd.f32 0.0, %v1366
  %v1368 = vpop.f32.mrf.mxu0
  %1369 = vmatprep.mubr.bf16.mxu0 %v1262
  %1370 = vmatmul.mubr.bf16.gmra.mxu0 %v1261
  %v1371 = vpop.f32.mrf.mxu0
  %v1372 = vadd.f32 0.0, %v1371
  %v1373 = vpop.f32.mrf.mxu0
  %v1374 = vpop.f32.mrf.mxu0
  %v1375 = vadd.f32 0.0, %v1374
  %v1376 = vpop.f32.mrf.mxu0
  %1377 = vmatprep.mubr.bf16.mxu0 %v1265
  %1378 = vmatmul.mubr.bf16.gmra.mxu0 %v1264
  %v1379 = vpop.f32.mrf.mxu0
  %v1380 = vadd.f32 0.0, %v1379
  %v1381 = vpop.f32.mrf.mxu0
  %v1382 = vpop.f32.mrf.mxu0
  %v1383 = vadd.f32 0.0, %v1382
  %v1384 = vpop.f32.mrf.mxu0
  %1385 = vmatprep.mubr.bf16.mxu0 %v1268
  %1386 = vmatmul.mubr.bf16.gmra.mxu0 %v1267
  %v1387 = vpop.f32.mrf.mxu0
  %v1388 = vadd.f32 0.0, %v1387
  %v1389 = vpop.f32.mrf.mxu0
  %v1390 = vpop.f32.mrf.mxu0
  %v1391 = vpop.f32.mrf.mxu0
  %1392 = vdwg.mxu0
  %1393 = vmatprep.subr.bf16.mxu0 0
  %1394 = vmatpush1.bf16.msra.mxu0 0
  %1395 = vmatprep.subr.bf16.mxu0 0
  %1396 = vmatpush1.bf16.msra.mxu0 0
  %1397 = vmatprep.subr.bf16.mxu0 0
  %1398 = vmatpush1.bf16.msra.mxu0 0
  %1399 = vmatprep.subr.bf16.mxu0 0
  %1400 = vmatpush1.bf16.msra.mxu0 0
  %1401 = vmatprep.subr.bf16.mxu0 0
  %1402 = vmatpush1.bf16.msra.mxu0 0
  %1403 = vmatprep.subr.bf16.mxu0 0
  %1404 = vmatpush1.bf16.msra.mxu0 0
  %1405 = vmatprep.subr.bf16.mxu0 0
  %1406 = vmatpush1.bf16.msra.mxu0 %v266
  %1407 = vmatprep.subr.bf16.mxu0 0
  %1408 = vmatpush1.bf16.msra.mxu0 %v265
  %1409 = vmatprep.subr.bf16.mxu0 0
  %1410 = vmatpush2.bf16.msra.mxu0 0
  %1411 = vmatprep.subr.bf16.mxu0 0
  %1412 = vmatpush2.bf16.msra.mxu0 0
  %1413 = vmatprep.subr.bf16.mxu0 0
  %1414 = vmatpush2.bf16.msra.mxu0 0
  %1415 = vmatprep.subr.bf16.mxu0 0
  %1416 = vmatpush2.bf16.msra.mxu0 0
  %1417 = vmatprep.subr.bf16.mxu0 0
  %1418 = vmatpush2.bf16.msra.mxu0 0
  %1419 = vmatprep.subr.bf16.mxu0 0
  %1420 = vmatpush2.bf16.msra.mxu0 0
  %1421 = vmatprep.subr.bf16.mxu0 0
  %1422 = vmatpush2.bf16.msra.mxu0 0
  %1423 = vmatprep.subr.bf16.mxu0 0
  %1424 = vmatpush2.bf16.msra.mxu0 0
  %1425 = vmatprep.mubr.bf16.mxu0 0
  %1426 = vmatmul.mubr.bf16.gmra.mxu0 %v1285
  %v1427 = vpop.f32.mrf.mxu0
  %v1428 = vadd.f32 %v1340, %v1427
  %v1429 = vpop.f32.mrf.mxu0
  %v1430 = vpop.f32.mrf.mxu0
  %v1431 = vadd.f32 %v1343, %v1430
  %v1432 = vpop.f32.mrf.mxu0
  %1433 = vmatprep.mubr.bf16.mxu0 0
  %1434 = vmatmul.mubr.bf16.gmra.mxu0 %v1288
  %v1435 = vpop.f32.mrf.mxu0
  %v1436 = vadd.f32 %v1348, %v1435
  %v1437 = vpop.f32.mrf.mxu0
  %v1438 = vpop.f32.mrf.mxu0
  %v1439 = vadd.f32 %v1351, %v1438
  %v1440 = vpop.f32.mrf.mxu0
  %1441 = vmatprep.mubr.bf16.mxu0 0
  %1442 = vmatmul.mubr.bf16.gmra.mxu0 %v1291
  %v1443 = vpop.f32.mrf.mxu0
  %v1444 = vadd.f32 %v1356, %v1443
  %v1445 = vpop.f32.mrf.mxu0
  %v1446 = vpop.f32.mrf.mxu0
  %v1447 = vadd.f32 %v1359, %v1446
  %v1448 = vpop.f32.mrf.mxu0
  %1449 = vmatprep.mubr.bf16.mxu0 0
  %1450 = vmatmul.mubr.bf16.gmra.mxu0 %v1294
  %v1451 = vpop.f32.mrf.mxu0
  %v1452 = vadd.f32 %v1364, %v1451
  %v1453 = vpop.f32.mrf.mxu0
  %v1454 = vpop.f32.mrf.mxu0
  %v1455 = vadd.f32 %v1367, %v1454
  %v1456 = vpop.f32.mrf.mxu0
  %1457 = vmatprep.mubr.bf16.mxu0 0
  %1458 = vmatmul.mubr.bf16.gmra.mxu0 %v1297
  %v1459 = vpop.f32.mrf.mxu0
  %v1460 = vadd.f32 %v1372, %v1459
  %v1461 = vpop.f32.mrf.mxu0
  %v1462 = vpop.f32.mrf.mxu0
  %v1463 = vadd.f32 %v1375, %v1462
  %v1464 = vpop.f32.mrf.mxu0
  %1465 = vmatprep.mubr.bf16.mxu0 0
  %1466 = vmatmul.mubr.bf16.gmra.mxu0 %v1300
  %v1467 = vpop.f32.mrf.mxu0
  %v1468 = vadd.f32 %v1380, %v1467
  %v1469 = vpop.f32.mrf.mxu0
  %v1470 = vpop.f32.mrf.mxu0
  %v1471 = vadd.f32 %v1383, %v1470
  %v1472 = vpop.f32.mrf.mxu0
  %1473 = vmatprep.mubr.bf16.mxu0 0
  %1474 = vmatmul.mubr.bf16.gmra.mxu0 %v1303
  %v1475 = vpop.f32.mrf.mxu0
  %v1476 = vadd.f32 %v1388, %v1475
  %v1477 = vpop.f32.mrf.mxu0
  %v1478 = vpop.f32.mrf.mxu0
  %v1479 = vpop.f32.mrf.mxu0
  %1480 = vdwg.mxu0
  %v1481 = vmax.f32 %v1144, %v1428
  %v1482 = vmax.f32 %v1145, %v1431
  %v1483 = vmax.f32 %v1146, %v1436
  %v1484 = vmax.f32 %v1147, %v1439
  %v1485 = vmax.f32 %v1148, %v1444
  %v1486 = vmax.f32 %v1149, %v1447
  %v1487 = vmax.f32 %v1150, %v1452
  %v1488 = vmax.f32 %v1151, %v1455
  %v1489 = vmax.f32 %v1152, %v1460
  %v1490 = vmax.f32 %v1153, %v1463
  %v1491 = vmax.f32 %v1154, %v1468
  %v1492 = vmax.f32 %v1155, %v1471
  %v1493 = vmax.f32 %v1156, %v1476
  %v1494 = vld [vmem:[%s2] sm:$0x1]
  %v1496 = vlaneseq
  %v1497 = vshrl.u32 %v1496, 7
  %v1498 = vsub.s32 0, %v1497
  %v1499 = vrot.slane %v1494, %v1498
  %v1501 = vadd.f32 %v1481, %v1499
  %v1502 = vadd.f32 %v1482, %v1499
  %v1503 = vadd.f32 %v1483, %v1499
  %v1504 = vadd.f32 %v1484, %v1499
  %v1505 = vadd.f32 %v1485, %v1499
  %v1506 = vadd.f32 %v1486, %v1499
  %v1507 = vadd.f32 %v1487, %v1499
  %v1508 = vadd.f32 %v1488, %v1499
  %v1509 = vadd.f32 %v1489, %v1499
  %v1510 = vadd.f32 %v1490, %v1499
  %v1511 = vadd.f32 %v1491, %v1499
  %v1512 = vadd.f32 %v1492, %v1499
  %v1513 = vadd.f32 %v1493, %v1499
  %v1514 = vmax.f32 %v1501, 0.0
  %v1515 = vmax.f32 %v1502, 0.0
  %v1516 = vmax.f32 %v1503, 0.0
  %v1517 = vmax.f32 %v1504, 0.0
  %v1518 = vmax.f32 %v1505, 0.0
  %v1519 = vmax.f32 %v1506, 0.0
  %v1520 = vmax.f32 %v1507, 0.0
  %v1521 = vmax.f32 %v1508, 0.0
  %v1522 = vmax.f32 %v1509, 0.0
  %v1523 = vmax.f32 %v1510, 0.0
  %v1524 = vmax.f32 %v1511, 0.0
  %v1525 = vmax.f32 %v1512, 0.0
  %v1526 = vmax.f32 %v1513, 0.0
  %v1527 = vpack.c.bf16 %v1515, %v1514
  %v1528 = vpack.c.bf16 %v1517, %v1516
  %v1529 = vpack.c.bf16 %v1519, %v1518
  %v1530 = vpack.c.bf16 %v1521, %v1520
  %v1531 = vpack.c.bf16 %v1523, %v1522
  %v1532 = vpack.c.bf16 %v1525, %v1524
  %v1533 = vpack.c.bf16 %v1526, %v1526
  %v1541 = vunpack.c.l.b16 %v1527
  %v1542 = vunpack.c.h.b16 %v1527
  %v1543 = vunpack.c.l.b16 %v1528
  %v1544 = vunpack.c.h.b16 %v1528
  %v1545 = vunpack.c.l.b16 %v1529
  %v1546 = vunpack.c.h.b16 %v1529
  %v1547 = vunpack.c.l.b16 %v1530
  %v1548 = vunpack.c.h.b16 %v1530
  %v1549 = vunpack.c.l.b16 %v1531
  %v1550 = vunpack.c.h.b16 %v1531
  %v1551 = vunpack.c.l.b16 %v1532
  %v1552 = vunpack.c.h.b16 %v1532
  %v1553 = vunpack.c.l.b16 %v1533
  %v1554 = vpack.c.b16 %v1541, %v1541
  %v1555 = vpack.c.b16 %v1542, %v1542
  %v1556 = vpack.c.b16 %v1543, %v1543
  %v1557 = vpack.c.b16 %v1544, %v1544
  %v1558 = vpack.c.b16 %v1545, %v1545
  %v1559 = vpack.c.b16 %v1546, %v1546
  %v1560 = vpack.c.b16 %v1547, %v1547
  %v1561 = vpack.c.b16 %v1548, %v1548
  %v1562 = vpack.c.b16 %v1549, %v1549
  %v1563 = vpack.c.b16 %v1550, %v1550
  %v1564 = vpack.c.b16 %v1551, %v1551
  %v1565 = vpack.c.b16 %v1552, %v1552
  %v1566 = vpack.c.b16 %v1553, %v1553
  %vm1580 = vcmask 519168
  %1581 = vst.msk [vmem:[%s3] sm:$0xf] %vm1580, %v1554
  %1582 = vst.msk [vmem:[%s3 + $0x4] sm:$0xf] %vm1580, %v1555
  %1583 = vst.msk [vmem:[%s3 + $0x8] sm:$0xf] %vm1580, %v1556
  %1584 = vst.msk [vmem:[%s3 + $0xc] sm:$0xf] %vm1580, %v1557
  %1585 = vst.msk [vmem:[%s3 + $0x10] sm:$0xf] %vm1580, %v1558
  %1586 = vst.msk [vmem:[%s3 + $0x14] sm:$0xf] %vm1580, %v1559
  %1587 = vst.msk [vmem:[%s3 + $0x18] sm:$0xf] %vm1580, %v1560
  %1588 = vst.msk [vmem:[%s3 + $0x1c] sm:$0xf] %vm1580, %v1561
  %1589 = vst.msk [vmem:[%s3 + $0x20] sm:$0xf] %vm1580, %v1562
  %1590 = vst.msk [vmem:[%s3 + $0x24] sm:$0xf] %vm1580, %v1563
  %1591 = vst.msk [vmem:[%s3 + $0x28] sm:$0xf] %vm1580, %v1564
  %1592 = vst.msk [vmem:[%s3 + $0x2c] sm:$0xf] %vm1580, %v1565
  %1593 = vst.msk [vmem:[%s3 + $0x30] sm:$0xf] %vm1580, %v1566
  // Predicated region
  $region14: #{car_model_forward.4} parent=0 // pred_check
    _
  $region15: #{car_model_forward.4} parent=0 // pred_check_branch
    %1595 = sbr.rel (0) target = $region17
  $region16: #{car_model_forward.4} parent=0 // pred_region
    _
  $region17: #{car_model_forward.4} parent=0 // pred_fallthru
    _
  // Predicated region
  $region18: #{car_model_forward.4} parent=0 // pred_check
    _
  $region19: #{car_model_forward.4} parent=0 // pred_check_branch
    %1597 = sbr.rel (0) target = $region21
  $region20: #{car_model_forward.4} parent=0 // pred_region
    _
  $region21: #{car_model_forward.4} parent=0 // pred_fallthru
    _

// kernel: car_model_forward.5
$region0: #{car_model_forward.5}
  #allocation0 [shape = 'u32[]', space=smem, size = 0x4, offset = 0x4, fixed_abs, tag = 'smem constant byte address 0x4 - core index']
  #allocation1 [shape = 'u32[144,128]{1,0:T(1,128)}', space=vmem, size = 0x12000, scoped, tag = 'internal scratch']
  %s0 = inlined_call_operand.vmem [shape: bf16[8,3136], index: 0, kind: input, shape index: {}]
  %s1 = inlined_call_operand.vmem [shape: bf16[3136,256], index: 1, kind: input, shape index: {}]
  %s2 = inlined_call_operand.vmem [shape: f32[1,256], index: 2, kind: input, shape index: {}]
  %s3 = inlined_call_operand.vmem [shape: bf16[256,128], index: 3, kind: input, shape index: {}]
  %s4 = inlined_call_operand.vmem [shape: f32[1,128], index: 4, kind: input, shape index: {}]
  %s5 = inlined_call_operand.vmem [shape: f32[8,128], index: 5, kind: output, shape index: {}]
  %s6 = sld [smem:[#allocation0]]
  $region30: #{car_model_forward.5} parent=0
    _
  %s8 = ssub.s32 1, %s6
  %s9 = scalar_select 0, %s8, %s6
  // Predicated region
  $region2: #{car_model_forward.5} parent=0 // pred_check
    _
  $region3: #{car_model_forward.5} parent=0 // pred_check_branch
    %11 = sbr.rel (0) target = $region5
  $region4: #{car_model_forward.5} parent=0 // pred_region
    _
  $region5: #{car_model_forward.5} parent=0 // pred_fallthru
    _
  // Predicated region
  $region6: #{car_model_forward.5} parent=0 // pred_check
    _
  $region7: #{car_model_forward.5} parent=0 // pred_check_branch
    %13 = sbr.rel (0) target = $region9
  $region8: #{car_model_forward.5} parent=0 // pred_region
    _
  $region9: #{car_model_forward.5} parent=0 // pred_fallthru
    _
  // Predicated region
  $region10: #{car_model_forward.5} parent=0 // pred_check
    _
  $region11: #{car_model_forward.5} parent=0 // pred_check_branch
    %15 = sbr.rel (0) target = $region13
  $region12: #{car_model_forward.5} parent=0 // pred_region
    _
  $region13: #{car_model_forward.5} parent=0 // pred_fallthru
    _
  // Predicated region
  $region14: #{car_model_forward.5} parent=0 // pred_check
    _
  $region15: #{car_model_forward.5} parent=0 // pred_check_branch
    %17 = sbr.rel (0) target = $region17
  $region16: #{car_model_forward.5} parent=0 // pred_region
    _
  $region17: #{car_model_forward.5} parent=0 // pred_fallthru
    _
  // Predicated region
  $region18: #{car_model_forward.5} parent=0 // pred_check
    _
  $region19: #{car_model_forward.5} parent=0 // pred_check_branch
    %19 = sbr.rel (0) target = $region21
  $region20: #{car_model_forward.5} parent=0 // pred_region
    _
  $region21: #{car_model_forward.5} parent=0 // pred_fallthru
    _
  %v21 = vld [vmem:[%s0] sm:$0xff]
  %v22 = vld [vmem:[%s0 + $0x8] sm:$0xff]
  %v23 = vld [vmem:[%s0 + $0x10] sm:$0xff]
  %v24 = vld [vmem:[%s0 + $0x18] sm:$0xff]
  %v25 = vld [vmem:[%s0 + $0x20] sm:$0xff]
  %v26 = vld [vmem:[%s0 + $0x28] sm:$0xff]
  %v27 = vld [vmem:[%s0 + $0x30] sm:$0xff]
  %v28 = vld [vmem:[%s0 + $0x38] sm:$0xff]
  %v29 = vld [vmem:[%s0 + $0x40] sm:$0xff]
  %v30 = vld [vmem:[%s0 + $0x48] sm:$0xff]
  %v31 = vld [vmem:[%s0 + $0x50] sm:$0xff]
  %v32 = vld [vmem:[%s0 + $0x58] sm:$0xff]
  %v33 = vld [vmem:[%s0 + $0x60] sm:$0xf]
  %v34 = vld [vmem:[%s1] sm:$0xff]
  %v35 = vld [vmem:[%s1 + $0x8] sm:$0xff]
  %v36 = vld [vmem:[%s1 + $0x10] sm:$0xff]
  %v37 = vld [vmem:[%s1 + $0x18] sm:$0xff]
  %v38 = vld [vmem:[%s1 + $0x20] sm:$0xff]
  %v39 = vld [vmem:[%s1 + $0x28] sm:$0xff]
  %v40 = vld [vmem:[%s1 + $0x30] sm:$0xff]
  %v41 = vld [vmem:[%s1 + $0x38] sm:$0xff]
  %v42 = vld [vmem:[%s1 + $0x40] sm:$0xff]
  %v43 = vld [vmem:[%s1 + $0x48] sm:$0xff]
  %v44 = vld [vmem:[%s1 + $0x50] sm:$0xff]
  %v45 = vld [vmem:[%s1 + $0x58] sm:$0xff]
  %v46 = vld [vmem:[%s1 + $0x60] sm:$0xff]
  %v47 = vld [vmem:[%s1 + $0x68] sm:$0xff]
  %v48 = vld [vmem:[%s1 + $0x70] sm:$0xff]
  %v49 = vld [vmem:[%s1 + $0x78] sm:$0xff]
  %v50 = vld [vmem:[%s1 + $0x80] sm:$0xff]
  %v51 = vld [vmem:[%s1 + $0x88] sm:$0xff]
  %v52 = vld [vmem:[%s1 + $0x90] sm:$0xff]
  %v53 = vld [vmem:[%s1 + $0x98] sm:$0xff]
  %v54 = vld [vmem:[%s1 + $0xa0] sm:$0xff]
  %v55 = vld [vmem:[%s1 + $0xa8] sm:$0xff]
  %v56 = vld [vmem:[%s1 + $0xb0] sm:$0xff]
  %v57 = vld [vmem:[%s1 + $0xb8] sm:$0xff]
  %v58 = vld [vmem:[%s1 + $0xc0] sm:$0xff]
  %v59 = vld [vmem:[%s1 + $0xc8] sm:$0xff]
  %v60 = vld [vmem:[%s1 + $0xd0] sm:$0xff]
  %v61 = vld [vmem:[%s1 + $0xd8] sm:$0xff]
  %v62 = vld [vmem:[%s1 + $0xe0] sm:$0xff]
  %v63 = vld [vmem:[%s1 + $0xe8] sm:$0xff]
  %v64 = vld [vmem:[%s1 + $0xf0] sm:$0xff]
  %v65 = vld [vmem:[%s1 + $0xf8] sm:$0xff]
  %v66 = vld [vmem:[%s1 + $0x100] sm:$0xff]
  %v67 = vld [vmem:[%s1 + $0x108] sm:$0xff]
  %v68 = vld [vmem:[%s1 + $0x110] sm:$0xff]
  %v69 = vld [vmem:[%s1 + $0x118] sm:$0xff]
  %v70 = vld [vmem:[%s1 + $0x120] sm:$0xff]
  %v71 = vld [vmem:[%s1 + $0x128] sm:$0xff]
  %v72 = vld [vmem:[%s1 + $0x130] sm:$0xff]
  %v73 = vld [vmem:[%s1 + $0x138] sm:$0xff]
  %v74 = vld [vmem:[%s1 + $0x140] sm:$0xff]
  %v75 = vld [vmem:[%s1 + $0x148] sm:$0xff]
  %v76 = vld [vmem:[%s1 + $0x150] sm:$0xff]
  %v77 = vld [vmem:[%s1 + $0x158] sm:$0xff]
  %v78 = vld [vmem:[%s1 + $0x160] sm:$0xff]
  %v79 = vld [vmem:[%s1 + $0x168] sm:$0xff]
  %v80 = vld [vmem:[%s1 + $0x170] sm:$0xff]
  %v81 = vld [vmem:[%s1 + $0x178] sm:$0xff]
  %v82 = vld [vmem:[%s1 + $0x180] sm:$0xff]
  %v83 = vld [vmem:[%s1 + $0x188] sm:$0xff]
  %v84 = vld [vmem:[%s1 + $0x190] sm:$0xff]
  %v85 = vld [vmem:[%s1 + $0x198] sm:$0xff]
  %v86 = vld [vmem:[%s1 + $0x1a0] sm:$0xff]
  %v87 = vld [vmem:[%s1 + $0x1a8] sm:$0xff]
  %v88 = vld [vmem:[%s1 + $0x1b0] sm:$0xff]
  %v89 = vld [vmem:[%s1 + $0x1b8] sm:$0xff]
  %v90 = vld [vmem:[%s1 + $0x1c0] sm:$0xff]
  %v91 = vld [vmem:[%s1 + $0x1c8] sm:$0xff]
  %v92 = vld [vmem:[%s1 + $0x1d0] sm:$0xff]
  %v93 = vld [vmem:[%s1 + $0x1d8] sm:$0xff]
  %v94 = vld [vmem:[%s1 + $0x1e0] sm:$0xff]
  %v95 = vld [vmem:[%s1 + $0x1e8] sm:$0xff]
  %v96 = vld [vmem:[%s1 + $0x1f0] sm:$0xff]
  %v97 = vld [vmem:[%s1 + $0x1f8] sm:$0xff]
  %v98 = vld [vmem:[%s1 + $0x200] sm:$0xff]
  %v99 = vld [vmem:[%s1 + $0x208] sm:$0xff]
  %v100 = vld [vmem:[%s1 + $0x210] sm:$0xff]
  %v101 = vld [vmem:[%s1 + $0x218] sm:$0xff]
  %v102 = vld [vmem:[%s1 + $0x220] sm:$0xff]
  %v103 = vld [vmem:[%s1 + $0x228] sm:$0xff]
  %v104 = vld [vmem:[%s1 + $0x230] sm:$0xff]
  %v105 = vld [vmem:[%s1 + $0x238] sm:$0xff]
  %v106 = vld [vmem:[%s1 + $0x240] sm:$0xff]
  %v107 = vld [vmem:[%s1 + $0x248] sm:$0xff]
  %v108 = vld [vmem:[%s1 + $0x250] sm:$0xff]
  %v109 = vld [vmem:[%s1 + $0x258] sm:$0xff]
  %v110 = vld [vmem:[%s1 + $0x260] sm:$0xff]
  %v111 = vld [vmem:[%s1 + $0x268] sm:$0xff]
  %v112 = vld [vmem:[%s1 + $0x270] sm:$0xff]
  %v113 = vld [vmem:[%s1 + $0x278] sm:$0xff]
  %v114 = vld [vmem:[%s1 + $0x280] sm:$0xff]
  %v115 = vld [vmem:[%s1 + $0x288] sm:$0xff]
  %v116 = vld [vmem:[%s1 + $0x290] sm:$0xff]
  %v117 = vld [vmem:[%s1 + $0x298] sm:$0xff]
  %v118 = vld [vmem:[%s1 + $0x2a0] sm:$0xff]
  %v119 = vld [vmem:[%s1 + $0x2a8] sm:$0xff]
  %v120 = vld [vmem:[%s1 + $0x2b0] sm:$0xff]
  %v121 = vld [vmem:[%s1 + $0x2b8] sm:$0xff]
  %v122 = vld [vmem:[%s1 + $0x2c0] sm:$0xff]
  %v123 = vld [vmem:[%s1 + $0x2c8] sm:$0xff]
  %v124 = vld [vmem:[%s1 + $0x2d0] sm:$0xff]
  %v125 = vld [vmem:[%s1 + $0x2d8] sm:$0xff]
  %v126 = vld [vmem:[%s1 + $0x2e0] sm:$0xff]
  %v127 = vld [vmem:[%s1 + $0x2e8] sm:$0xff]
  %v128 = vld [vmem:[%s1 + $0x2f0] sm:$0xff]
  %v129 = vld [vmem:[%s1 + $0x2f8] sm:$0xff]
  %v130 = vld [vmem:[%s1 + $0x300] sm:$0xff]
  %v131 = vld [vmem:[%s1 + $0x308] sm:$0xff]
  %v132 = vld [vmem:[%s1 + $0x310] sm:$0xff]
  %v133 = vld [vmem:[%s1 + $0x318] sm:$0xff]
  %v134 = vld [vmem:[%s1 + $0x320] sm:$0xff]
  %v135 = vld [vmem:[%s1 + $0x328] sm:$0xff]
  %v136 = vld [vmem:[%s1 + $0x330] sm:$0xff]
  %v137 = vld [vmem:[%s1 + $0x338] sm:$0xff]
  %v138 = vld [vmem:[%s1 + $0x340] sm:$0xff]
  %v139 = vld [vmem:[%s1 + $0x348] sm:$0xff]
  %v140 = vld [vmem:[%s1 + $0x350] sm:$0xff]
  %v141 = vld [vmem:[%s1 + $0x358] sm:$0xff]
  %v142 = vld [vmem:[%s1 + $0x360] sm:$0xff]
  %v143 = vld [vmem:[%s1 + $0x368] sm:$0xff]
  %v144 = vld [vmem:[%s1 + $0x370] sm:$0xff]
  %v145 = vld [vmem:[%s1 + $0x378] sm:$0xff]
  %v146 = vld [vmem:[%s1 + $0x380] sm:$0xff]
  %v147 = vld [vmem:[%s1 + $0x388] sm:$0xff]
  %v148 = vld [vmem:[%s1 + $0x390] sm:$0xff]
  %v149 = vld [vmem:[%s1 + $0x398] sm:$0xff]
  %v150 = vld [vmem:[%s1 + $0x3a0] sm:$0xff]
  %v151 = vld [vmem:[%s1 + $0x3a8] sm:$0xff]
  %v152 = vld [vmem:[%s1 + $0x3b0] sm:$0xff]
  %v153 = vld [vmem:[%s1 + $0x3b8] sm:$0xff]
  %v154 = vld [vmem:[%s1 + $0x3c0] sm:$0xff]
  %v155 = vld [vmem:[%s1 + $0x3c8] sm:$0xff]
  %v156 = vld [vmem:[%s1 + $0x3d0] sm:$0xff]
  %v157 = vld [vmem:[%s1 + $0x3d8] sm:$0xff]
  %v158 = vld [vmem:[%s1 + $0x3e0] sm:$0xff]
  %v159 = vld [vmem:[%s1 + $0x3e8] sm:$0xff]
  %v160 = vld [vmem:[%s1 + $0x3f0] sm:$0xff]
  %v161 = vld [vmem:[%s1 + $0x3f8] sm:$0xff]
  %v162 = vld [vmem:[%s1 + $0x400] sm:$0xff]
  %v163 = vld [vmem:[%s1 + $0x408] sm:$0xff]
  %v164 = vld [vmem:[%s1 + $0x410] sm:$0xff]
  %v165 = vld [vmem:[%s1 + $0x418] sm:$0xff]
  %v166 = vld [vmem:[%s1 + $0x420] sm:$0xff]
  %v167 = vld [vmem:[%s1 + $0x428] sm:$0xff]
  %v168 = vld [vmem:[%s1 + $0x430] sm:$0xff]
  %v169 = vld [vmem:[%s1 + $0x438] sm:$0xff]
  %v170 = vld [vmem:[%s1 + $0x440] sm:$0xff]
  %v171 = vld [vmem:[%s1 + $0x448] sm:$0xff]
  %v172 = vld [vmem:[%s1 + $0x450] sm:$0xff]
  %v173 = vld [vmem:[%s1 + $0x458] sm:$0xff]
  %v174 = vld [vmem:[%s1 + $0x460] sm:$0xff]
  %v175 = vld [vmem:[%s1 + $0x468] sm:$0xff]
  %v176 = vld [vmem:[%s1 + $0x470] sm:$0xff]
  %v177 = vld [vmem:[%s1 + $0x478] sm:$0xff]
  %v178 = vld [vmem:[%s1 + $0x480] sm:$0xff]
  %v179 = vld [vmem:[%s1 + $0x488] sm:$0xff]
  %v180 = vld [vmem:[%s1 + $0x490] sm:$0xff]
  %v181 = vld [vmem:[%s1 + $0x498] sm:$0xff]
  %v182 = vld [vmem:[%s1 + $0x4a0] sm:$0xff]
  %v183 = vld [vmem:[%s1 + $0x4a8] sm:$0xff]
  %v184 = vld [vmem:[%s1 + $0x4b0] sm:$0xff]
  %v185 = vld [vmem:[%s1 + $0x4b8] sm:$0xff]
  %v186 = vld [vmem:[%s1 + $0x4c0] sm:$0xff]
  %v187 = vld [vmem:[%s1 + $0x4c8] sm:$0xff]
  %v188 = vld [vmem:[%s1 + $0x4d0] sm:$0xff]
  %v189 = vld [vmem:[%s1 + $0x4d8] sm:$0xff]
  %v190 = vld [vmem:[%s1 + $0x4e0] sm:$0xff]
  %v191 = vld [vmem:[%s1 + $0x4e8] sm:$0xff]
  %v192 = vld [vmem:[%s1 + $0x4f0] sm:$0xff]
  %v193 = vld [vmem:[%s1 + $0x4f8] sm:$0xff]
  %v194 = vld [vmem:[%s1 + $0x500] sm:$0xff]
  %v195 = vld [vmem:[%s1 + $0x508] sm:$0xff]
  %v196 = vld [vmem:[%s1 + $0x510] sm:$0xff]
  %v197 = vld [vmem:[%s1 + $0x518] sm:$0xff]
  %v198 = vld [vmem:[%s1 + $0x520] sm:$0xff]
  %v199 = vld [vmem:[%s1 + $0x528] sm:$0xff]
  %v200 = vld [vmem:[%s1 + $0x530] sm:$0xff]
  %v201 = vld [vmem:[%s1 + $0x538] sm:$0xff]
  %v202 = vld [vmem:[%s1 + $0x540] sm:$0xff]
  %v203 = vld [vmem:[%s1 + $0x548] sm:$0xff]
  %v204 = vld [vmem:[%s1 + $0x550] sm:$0xff]
  %v205 = vld [vmem:[%s1 + $0x558] sm:$0xff]
  %v206 = vld [vmem:[%s1 + $0x560] sm:$0xff]
  %v207 = vld [vmem:[%s1 + $0x568] sm:$0xff]
  %v208 = vld [vmem:[%s1 + $0x570] sm:$0xff]
  %v209 = vld [vmem:[%s1 + $0x578] sm:$0xff]
  %v210 = vld [vmem:[%s1 + $0x580] sm:$0xff]
  %v211 = vld [vmem:[%s1 + $0x588] sm:$0xff]
  %v212 = vld [vmem:[%s1 + $0x590] sm:$0xff]
  %v213 = vld [vmem:[%s1 + $0x598] sm:$0xff]
  %v214 = vld [vmem:[%s1 + $0x5a0] sm:$0xff]
  %v215 = vld [vmem:[%s1 + $0x5a8] sm:$0xff]
  %v216 = vld [vmem:[%s1 + $0x5b0] sm:$0xff]
  %v217 = vld [vmem:[%s1 + $0x5b8] sm:$0xff]
  %v218 = vld [vmem:[%s1 + $0x5c0] sm:$0xff]
  %v219 = vld [vmem:[%s1 + $0x5c8] sm:$0xff]
  %v220 = vld [vmem:[%s1 + $0x5d0] sm:$0xff]
  %v221 = vld [vmem:[%s1 + $0x5d8] sm:$0xff]
  %v222 = vld [vmem:[%s1 + $0x5e0] sm:$0xff]
  %v223 = vld [vmem:[%s1 + $0x5e8] sm:$0xff]
  %v224 = vld [vmem:[%s1 + $0x5f0] sm:$0xff]
  %v225 = vld [vmem:[%s1 + $0x5f8] sm:$0xff]
  %v226 = vld [vmem:[%s1 + $0x600] sm:$0xff]
  %v227 = vld [vmem:[%s1 + $0x608] sm:$0xff]
  %v228 = vld [vmem:[%s1 + $0x610] sm:$0xff]
  %v229 = vld [vmem:[%s1 + $0x618] sm:$0xff]
  %v230 = vld [vmem:[%s1 + $0x620] sm:$0xff]
  %v231 = vld [vmem:[%s1 + $0x628] sm:$0xff]
  %v232 = vld [vmem:[%s1 + $0x630] sm:$0xff]
  %v233 = vld [vmem:[%s1 + $0x638] sm:$0xff]
  %v234 = vld [vmem:[%s1 + $0x640] sm:$0xff]
  %v235 = vld [vmem:[%s1 + $0x648] sm:$0xff]
  %v236 = vld [vmem:[%s1 + $0x650] sm:$0xff]
  %v237 = vld [vmem:[%s1 + $0x658] sm:$0xff]
  %v238 = vld [vmem:[%s1 + $0x660] sm:$0xff]
  %v239 = vld [vmem:[%s1 + $0x668] sm:$0xff]
  %v240 = vld [vmem:[%s1 + $0x670] sm:$0xff]
  %v241 = vld [vmem:[%s1 + $0x678] sm:$0xff]
  %v242 = vld [vmem:[%s1 + $0x680] sm:$0xff]
  %v243 = vld [vmem:[%s1 + $0x688] sm:$0xff]
  %v244 = vld [vmem:[%s1 + $0x690] sm:$0xff]
  %v245 = vld [vmem:[%s1 + $0x698] sm:$0xff]
  %v246 = vld [vmem:[%s1 + $0x6a0] sm:$0xff]
  %v247 = vld [vmem:[%s1 + $0x6a8] sm:$0xff]
  %v248 = vld [vmem:[%s1 + $0x6b0] sm:$0xff]
  %v249 = vld [vmem:[%s1 + $0x6b8] sm:$0xff]
  %v250 = vld [vmem:[%s1 + $0x6c0] sm:$0xff]
  %v251 = vld [vmem:[%s1 + $0x6c8] sm:$0xff]
  %v252 = vld [vmem:[%s1 + $0x6d0] sm:$0xff]
  %v253 = vld [vmem:[%s1 + $0x6d8] sm:$0xff]
  %v254 = vld [vmem:[%s1 + $0x6e0] sm:$0xff]
  %v255 = vld [vmem:[%s1 + $0x6e8] sm:$0xff]
  %v256 = vld [vmem:[%s1 + $0x6f0] sm:$0xff]
  %v257 = vld [vmem:[%s1 + $0x6f8] sm:$0xff]
  %v258 = vld [vmem:[%s1 + $0x700] sm:$0xff]
  %v259 = vld [vmem:[%s1 + $0x708] sm:$0xff]
  %v260 = vld [vmem:[%s1 + $0x710] sm:$0xff]
  %v261 = vld [vmem:[%s1 + $0x718] sm:$0xff]
  %v262 = vld [vmem:[%s1 + $0x720] sm:$0xff]
  %v263 = vld [vmem:[%s1 + $0x728] sm:$0xff]
  %v264 = vld [vmem:[%s1 + $0x730] sm:$0xff]
  %v265 = vld [vmem:[%s1 + $0x738] sm:$0xff]
  %v266 = vld [vmem:[%s1 + $0x740] sm:$0xff]
  %v267 = vld [vmem:[%s1 + $0x748] sm:$0xff]
  %v268 = vld [vmem:[%s1 + $0x750] sm:$0xff]
  %v269 = vld [vmem:[%s1 + $0x758] sm:$0xff]
  %v270 = vld [vmem:[%s1 + $0x760] sm:$0xff]
  %v271 = vld [vmem:[%s1 + $0x768] sm:$0xff]
  %v272 = vld [vmem:[%s1 + $0x770] sm:$0xff]
  %v273 = vld [vmem:[%s1 + $0x778] sm:$0xff]
  %v274 = vld [vmem:[%s1 + $0x780] sm:$0xff]
  %v275 = vld [vmem:[%s1 + $0x788] sm:$0xff]
  %v276 = vld [vmem:[%s1 + $0x790] sm:$0xff]
  %v277 = vld [vmem:[%s1 + $0x798] sm:$0xff]
  %v278 = vld [vmem:[%s1 + $0x7a0] sm:$0xff]
  %v279 = vld [vmem:[%s1 + $0x7a8] sm:$0xff]
  %v280 = vld [vmem:[%s1 + $0x7b0] sm:$0xff]
  %v281 = vld [vmem:[%s1 + $0x7b8] sm:$0xff]
  %v282 = vld [vmem:[%s1 + $0x7c0] sm:$0xff]
  %v283 = vld [vmem:[%s1 + $0x7c8] sm:$0xff]
  %v284 = vld [vmem:[%s1 + $0x7d0] sm:$0xff]
  %v285 = vld [vmem:[%s1 + $0x7d8] sm:$0xff]
  %v286 = vld [vmem:[%s1 + $0x7e0] sm:$0xff]
  %v287 = vld [vmem:[%s1 + $0x7e8] sm:$0xff]
  %v288 = vld [vmem:[%s1 + $0x7f0] sm:$0xff]
  %v289 = vld [vmem:[%s1 + $0x7f8] sm:$0xff]
  %v290 = vld [vmem:[%s1 + $0x800] sm:$0xff]
  %v291 = vld [vmem:[%s1 + $0x808] sm:$0xff]
  %v292 = vld [vmem:[%s1 + $0x810] sm:$0xff]
  %v293 = vld [vmem:[%s1 + $0x818] sm:$0xff]
  %v294 = vld [vmem:[%s1 + $0x820] sm:$0xff]
  %v295 = vld [vmem:[%s1 + $0x828] sm:$0xff]
  %v296 = vld [vmem:[%s1 + $0x830] sm:$0xff]
  %v297 = vld [vmem:[%s1 + $0x838] sm:$0xff]
  %v298 = vld [vmem:[%s1 + $0x840] sm:$0xff]
  %v299 = vld [vmem:[%s1 + $0x848] sm:$0xff]
  %v300 = vld [vmem:[%s1 + $0x850] sm:$0xff]
  %v301 = vld [vmem:[%s1 + $0x858] sm:$0xff]
  %v302 = vld [vmem:[%s1 + $0x860] sm:$0xff]
  %v303 = vld [vmem:[%s1 + $0x868] sm:$0xff]
  %v304 = vld [vmem:[%s1 + $0x870] sm:$0xff]
  %v305 = vld [vmem:[%s1 + $0x878] sm:$0xff]
  %v306 = vld [vmem:[%s1 + $0x880] sm:$0xff]
  %v307 = vld [vmem:[%s1 + $0x888] sm:$0xff]
  %v308 = vld [vmem:[%s1 + $0x890] sm:$0xff]
  %v309 = vld [vmem:[%s1 + $0x898] sm:$0xff]
  %v310 = vld [vmem:[%s1 + $0x8a0] sm:$0xff]
  %v311 = vld [vmem:[%s1 + $0x8a8] sm:$0xff]
  %v312 = vld [vmem:[%s1 + $0x8b0] sm:$0xff]
  %v313 = vld [vmem:[%s1 + $0x8b8] sm:$0xff]
  %v314 = vld [vmem:[%s1 + $0x8c0] sm:$0xff]
  %v315 = vld [vmem:[%s1 + $0x8c8] sm:$0xff]
  %v316 = vld [vmem:[%s1 + $0x8d0] sm:$0xff]
  %v317 = vld [vmem:[%s1 + $0x8d8] sm:$0xff]
  %v318 = vld [vmem:[%s1 + $0x8e0] sm:$0xff]
  %v319 = vld [vmem:[%s1 + $0x8e8] sm:$0xff]
  %v320 = vld [vmem:[%s1 + $0x8f0] sm:$0xff]
  %v321 = vld [vmem:[%s1 + $0x8f8] sm:$0xff]
  %v322 = vld [vmem:[%s1 + $0x900] sm:$0xff]
  %v323 = vld [vmem:[%s1 + $0x908] sm:$0xff]
  %v324 = vld [vmem:[%s1 + $0x910] sm:$0xff]
  %v325 = vld [vmem:[%s1 + $0x918] sm:$0xff]
  %v326 = vld [vmem:[%s1 + $0x920] sm:$0xff]
  %v327 = vld [vmem:[%s1 + $0x928] sm:$0xff]
  %v328 = vld [vmem:[%s1 + $0x930] sm:$0xff]
  %v329 = vld [vmem:[%s1 + $0x938] sm:$0xff]
  %v330 = vld [vmem:[%s1 + $0x940] sm:$0xff]
  %v331 = vld [vmem:[%s1 + $0x948] sm:$0xff]
  %v332 = vld [vmem:[%s1 + $0x950] sm:$0xff]
  %v333 = vld [vmem:[%s1 + $0x958] sm:$0xff]
  %v334 = vld [vmem:[%s1 + $0x960] sm:$0xff]
  %v335 = vld [vmem:[%s1 + $0x968] sm:$0xff]
  %v336 = vld [vmem:[%s1 + $0x970] sm:$0xff]
  %v337 = vld [vmem:[%s1 + $0x978] sm:$0xff]
  %v338 = vld [vmem:[%s1 + $0x980] sm:$0xff]
  %v339 = vld [vmem:[%s1 + $0x988] sm:$0xff]
  %v340 = vld [vmem:[%s1 + $0x990] sm:$0xff]
  %v341 = vld [vmem:[%s1 + $0x998] sm:$0xff]
  %v342 = vld [vmem:[%s1 + $0x9a0] sm:$0xff]
  %v343 = vld [vmem:[%s1 + $0x9a8] sm:$0xff]
  %v344 = vld [vmem:[%s1 + $0x9b0] sm:$0xff]
  %v345 = vld [vmem:[%s1 + $0x9b8] sm:$0xff]
  %v346 = vld [vmem:[%s1 + $0x9c0] sm:$0xff]
  %v347 = vld [vmem:[%s1 + $0x9c8] sm:$0xff]
  %v348 = vld [vmem:[%s1 + $0x9d0] sm:$0xff]
  %v349 = vld [vmem:[%s1 + $0x9d8] sm:$0xff]
  %v350 = vld [vmem:[%s1 + $0x9e0] sm:$0xff]
  %v351 = vld [vmem:[%s1 + $0x9e8] sm:$0xff]
  %v352 = vld [vmem:[%s1 + $0x9f0] sm:$0xff]
  %v353 = vld [vmem:[%s1 + $0x9f8] sm:$0xff]
  %v354 = vld [vmem:[%s1 + $0xa00] sm:$0xff]
  %v355 = vld [vmem:[%s1 + $0xa08] sm:$0xff]
  %v356 = vld [vmem:[%s1 + $0xa10] sm:$0xff]
  %v357 = vld [vmem:[%s1 + $0xa18] sm:$0xff]
  %v358 = vld [vmem:[%s1 + $0xa20] sm:$0xff]
  %v359 = vld [vmem:[%s1 + $0xa28] sm:$0xff]
  %v360 = vld [vmem:[%s1 + $0xa30] sm:$0xff]
  %v361 = vld [vmem:[%s1 + $0xa38] sm:$0xff]
  %v362 = vld [vmem:[%s1 + $0xa40] sm:$0xff]
  %v363 = vld [vmem:[%s1 + $0xa48] sm:$0xff]
  %v364 = vld [vmem:[%s1 + $0xa50] sm:$0xff]
  %v365 = vld [vmem:[%s1 + $0xa58] sm:$0xff]
  %v366 = vld [vmem:[%s1 + $0xa60] sm:$0xff]
  %v367 = vld [vmem:[%s1 + $0xa68] sm:$0xff]
  %v368 = vld [vmem:[%s1 + $0xa70] sm:$0xff]
  %v369 = vld [vmem:[%s1 + $0xa78] sm:$0xff]
  %v370 = vld [vmem:[%s1 + $0xa80] sm:$0xff]
  %v371 = vld [vmem:[%s1 + $0xa88] sm:$0xff]
  %v372 = vld [vmem:[%s1 + $0xa90] sm:$0xff]
  %v373 = vld [vmem:[%s1 + $0xa98] sm:$0xff]
  %v374 = vld [vmem:[%s1 + $0xaa0] sm:$0xff]
  %v375 = vld [vmem:[%s1 + $0xaa8] sm:$0xff]
  %v376 = vld [vmem:[%s1 + $0xab0] sm:$0xff]
  %v377 = vld [vmem:[%s1 + $0xab8] sm:$0xff]
  %v378 = vld [vmem:[%s1 + $0xac0] sm:$0xff]
  %v379 = vld [vmem:[%s1 + $0xac8] sm:$0xff]
  %v380 = vld [vmem:[%s1 + $0xad0] sm:$0xff]
  %v381 = vld [vmem:[%s1 + $0xad8] sm:$0xff]
  %v382 = vld [vmem:[%s1 + $0xae0] sm:$0xff]
  %v383 = vld [vmem:[%s1 + $0xae8] sm:$0xff]
  %v384 = vld [vmem:[%s1 + $0xaf0] sm:$0xff]
  %v385 = vld [vmem:[%s1 + $0xaf8] sm:$0xff]
  %v386 = vld [vmem:[%s1 + $0xb00] sm:$0xff]
  %v387 = vld [vmem:[%s1 + $0xb08] sm:$0xff]
  %v388 = vld [vmem:[%s1 + $0xb10] sm:$0xff]
  %v389 = vld [vmem:[%s1 + $0xb18] sm:$0xff]
  %v390 = vld [vmem:[%s1 + $0xb20] sm:$0xff]
  %v391 = vld [vmem:[%s1 + $0xb28] sm:$0xff]
  %v392 = vld [vmem:[%s1 + $0xb30] sm:$0xff]
  %v393 = vld [vmem:[%s1 + $0xb38] sm:$0xff]
  %v394 = vld [vmem:[%s1 + $0xb40] sm:$0xff]
  %v395 = vld [vmem:[%s1 + $0xb48] sm:$0xff]
  %v396 = vld [vmem:[%s1 + $0xb50] sm:$0xff]
  %v397 = vld [vmem:[%s1 + $0xb58] sm:$0xff]
  %v398 = vld [vmem:[%s1 + $0xb60] sm:$0xff]
  %v399 = vld [vmem:[%s1 + $0xb68] sm:$0xff]
  %v400 = vld [vmem:[%s1 + $0xb70] sm:$0xff]
  %v401 = vld [vmem:[%s1 + $0xb78] sm:$0xff]
  %v402 = vld [vmem:[%s1 + $0xb80] sm:$0xff]
  %v403 = vld [vmem:[%s1 + $0xb88] sm:$0xff]
  %v404 = vld [vmem:[%s1 + $0xb90] sm:$0xff]
  %v405 = vld [vmem:[%s1 + $0xb98] sm:$0xff]
  %v406 = vld [vmem:[%s1 + $0xba0] sm:$0xff]
  %v407 = vld [vmem:[%s1 + $0xba8] sm:$0xff]
  %v408 = vld [vmem:[%s1 + $0xbb0] sm:$0xff]
  %v409 = vld [vmem:[%s1 + $0xbb8] sm:$0xff]
  %v410 = vld [vmem:[%s1 + $0xbc0] sm:$0xff]
  %v411 = vld [vmem:[%s1 + $0xbc8] sm:$0xff]
  %v412 = vld [vmem:[%s1 + $0xbd0] sm:$0xff]
  %v413 = vld [vmem:[%s1 + $0xbd8] sm:$0xff]
  %v414 = vld [vmem:[%s1 + $0xbe0] sm:$0xff]
  %v415 = vld [vmem:[%s1 + $0xbe8] sm:$0xff]
  %v416 = vld [vmem:[%s1 + $0xbf0] sm:$0xff]
  %v417 = vld [vmem:[%s1 + $0xbf8] sm:$0xff]
  %v418 = vld [vmem:[%s1 + $0xc00] sm:$0xff]
  %v419 = vld [vmem:[%s1 + $0xc08] sm:$0xff]
  %v420 = vld [vmem:[%s1 + $0xc10] sm:$0xff]
  %v421 = vld [vmem:[%s1 + $0xc18] sm:$0xff]
  %v422 = vld [vmem:[%s1 + $0xc20] sm:$0xff]
  %v423 = vld [vmem:[%s1 + $0xc28] sm:$0xff]
  %v424 = vld [vmem:[%s1 + $0xc30] sm:$0xff]
  %v425 = vld [vmem:[%s1 + $0xc38] sm:$0xff]
  %v426 = vld [vmem:[%s2] sm:$0x3]
  %v428 = vlaneseq
  %v429 = vshrl.u32 %v428, 7
  %v430 = vsub.s32 0, %v429
  %v431 = vrot.slane %v426, %v430
  %v432 = vlaneseq
  %v433 = vshrl.u32 %v432, 7
  %v434 = vsub.s32 1, %v433
  %v435 = vrot.slane %v426, %v434
  %v451 = vunpack.c.l.b16 %v21
  %v452 = vunpack.c.h.b16 %v21
  %v453 = vunpack.c.l.b16 %v22
  %v454 = vunpack.c.h.b16 %v22
  %v455 = vunpack.c.l.b16 %v23
  %v456 = vunpack.c.h.b16 %v23
  %v457 = vunpack.c.l.b16 %v24
  %v458 = vunpack.c.h.b16 %v24
  %v459 = vunpack.c.l.b16 %v25
  %v460 = vunpack.c.h.b16 %v25
  %v461 = vunpack.c.l.b16 %v26
  %v462 = vunpack.c.h.b16 %v26
  %v463 = vunpack.c.l.b16 %v27
  %v464 = vunpack.c.h.b16 %v27
  %v465 = vunpack.c.l.b16 %v28
  %v466 = vunpack.c.h.b16 %v28
  %v467 = vunpack.c.l.b16 %v29
  %v468 = vunpack.c.h.b16 %v29
  %v469 = vunpack.c.l.b16 %v30
  %v470 = vunpack.c.h.b16 %v30
  %v471 = vunpack.c.l.b16 %v31
  %v472 = vunpack.c.h.b16 %v31
  %v473 = vunpack.c.l.b16 %v32
  %v474 = vunpack.c.h.b16 %v32
  %v475 = vunpack.c.l.b16 %v33
  %v476 = vpack.c.b16 %v451, %v451
  %v477 = vpack.c.b16 %v452, %v452
  %v478 = vpack.c.b16 %v453, %v453
  %v479 = vpack.c.b16 %v454, %v454
  %v480 = vpack.c.b16 %v455, %v455
  %v481 = vpack.c.b16 %v456, %v456
  %v482 = vpack.c.b16 %v457, %v457
  %v483 = vpack.c.b16 %v458, %v458
  %v484 = vpack.c.b16 %v459, %v459
  %v485 = vpack.c.b16 %v460, %v460
  %v486 = vpack.c.b16 %v461, %v461
  %v487 = vpack.c.b16 %v462, %v462
  %v488 = vpack.c.b16 %v463, %v463
  %v489 = vpack.c.b16 %v464, %v464
  %v490 = vpack.c.b16 %v465, %v465
  %v491 = vpack.c.b16 %v466, %v466
  %v492 = vpack.c.b16 %v467, %v467
  %v493 = vpack.c.b16 %v468, %v468
  %v494 = vpack.c.b16 %v469, %v469
  %v495 = vpack.c.b16 %v470, %v470
  %v496 = vpack.c.b16 %v471, %v471
  %v497 = vpack.c.b16 %v472, %v472
  %v498 = vpack.c.b16 %v473, %v473
  %v499 = vpack.c.b16 %v474, %v474
  %v500 = vpack.c.b16 %v475, %v475
  %v917 = vunpack.c.l.b16 %v34
  %v918 = vunpack.c.h.b16 %v34
  %v919 = vunpack.c.l.b16 %v35
  %v920 = vunpack.c.h.b16 %v35
  %v921 = vunpack.c.l.b16 %v36
  %v922 = vunpack.c.h.b16 %v36
  %v923 = vunpack.c.l.b16 %v37
  %v924 = vunpack.c.h.b16 %v37
  %v925 = vunpack.c.l.b16 %v38
  %v926 = vunpack.c.h.b16 %v38
  %v927 = vunpack.c.l.b16 %v39
  %v928 = vunpack.c.h.b16 %v39
  %v929 = vunpack.c.l.b16 %v40
  %v930 = vunpack.c.h.b16 %v40
  %v931 = vunpack.c.l.b16 %v41
  %v932 = vunpack.c.h.b16 %v41
  %v933 = vunpack.c.l.b16 %v42
  %v934 = vunpack.c.h.b16 %v42
  %v935 = vunpack.c.l.b16 %v43
  %v936 = vunpack.c.h.b16 %v43
  %v937 = vunpack.c.l.b16 %v44
  %v938 = vunpack.c.h.b16 %v44
  %v939 = vunpack.c.l.b16 %v45
  %v940 = vunpack.c.h.b16 %v45
  %v941 = vunpack.c.l.b16 %v46
  %v942 = vunpack.c.h.b16 %v46
  %v943 = vunpack.c.l.b16 %v47
  %v944 = vunpack.c.h.b16 %v47
  %v945 = vunpack.c.l.b16 %v48
  %v946 = vunpack.c.h.b16 %v48
  %v947 = vunpack.c.l.b16 %v49
  %v948 = vunpack.c.h.b16 %v49
  %v949 = vunpack.c.l.b16 %v50
  %v950 = vunpack.c.h.b16 %v50
  %v951 = vunpack.c.l.b16 %v51
  %v952 = vunpack.c.h.b16 %v51
  %v953 = vunpack.c.l.b16 %v52
  %v954 = vunpack.c.h.b16 %v52
  %v955 = vunpack.c.l.b16 %v53
  %v956 = vunpack.c.h.b16 %v53
  %v957 = vunpack.c.l.b16 %v54
  %v958 = vunpack.c.h.b16 %v54
  %v959 = vunpack.c.l.b16 %v55
  %v960 = vunpack.c.h.b16 %v55
  %v961 = vunpack.c.l.b16 %v56
  %v962 = vunpack.c.h.b16 %v56
  %v963 = vunpack.c.l.b16 %v57
  %v964 = vunpack.c.h.b16 %v57
  %v965 = vunpack.c.l.b16 %v58
  %v966 = vunpack.c.h.b16 %v58
  %v967 = vunpack.c.l.b16 %v59
  %v968 = vunpack.c.h.b16 %v59
  %v969 = vunpack.c.l.b16 %v60
  %v970 = vunpack.c.h.b16 %v60
  %v971 = vunpack.c.l.b16 %v61
  %v972 = vunpack.c.h.b16 %v61
  %v973 = vunpack.c.l.b16 %v62
  %v974 = vunpack.c.h.b16 %v62
  %v975 = vunpack.c.l.b16 %v63
  %v976 = vunpack.c.h.b16 %v63
  %v977 = vunpack.c.l.b16 %v64
  %v978 = vunpack.c.h.b16 %v64
  %v979 = vunpack.c.l.b16 %v65
  %v980 = vunpack.c.h.b16 %v65
  %v981 = vunpack.c.l.b16 %v66
  %v982 = vunpack.c.h.b16 %v66
  %v983 = vunpack.c.l.b16 %v67
  %v984 = vunpack.c.h.b16 %v67
  %v985 = vunpack.c.l.b16 %v68
  %v986 = vunpack.c.h.b16 %v68
  %v987 = vunpack.c.l.b16 %v69
  %v988 = vunpack.c.h.b16 %v69
  %v989 = vunpack.c.l.b16 %v70
  %v990 = vunpack.c.h.b16 %v70
  %v991 = vunpack.c.l.b16 %v71
  %v992 = vunpack.c.h.b16 %v71
  %v993 = vunpack.c.l.b16 %v72
  %v994 = vunpack.c.h.b16 %v72
  %v995 = vunpack.c.l.b16 %v73
  %v996 = vunpack.c.h.b16 %v73
  %v997 = vunpack.c.l.b16 %v74
  %v998 = vunpack.c.h.b16 %v74
  %v999 = vunpack.c.l.b16 %v75
  %v1000 = vunpack.c.h.b16 %v75
  %v1001 = vunpack.c.l.b16 %v76
  %v1002 = vunpack.c.h.b16 %v76
  %v1003 = vunpack.c.l.b16 %v77
  %v1004 = vunpack.c.h.b16 %v77
  %v1005 = vunpack.c.l.b16 %v78
  %v1006 = vunpack.c.h.b16 %v78
  %v1007 = vunpack.c.l.b16 %v79
  %v1008 = vunpack.c.h.b16 %v79
  %v1009 = vunpack.c.l.b16 %v80
  %v1010 = vunpack.c.h.b16 %v80
  %v1011 = vunpack.c.l.b16 %v81
  %v1012 = vunpack.c.h.b16 %v81
  %v1013 = vunpack.c.l.b16 %v82
  %v1014 = vunpack.c.h.b16 %v82
  %v1015 = vunpack.c.l.b16 %v83
  %v1016 = vunpack.c.h.b16 %v83
  %v1017 = vunpack.c.l.b16 %v84
  %v1018 = vunpack.c.h.b16 %v84
  %v1019 = vunpack.c.l.b16 %v85
  %v1020 = vunpack.c.h.b16 %v85
  %v1021 = vunpack.c.l.b16 %v86
  %v1022 = vunpack.c.h.b16 %v86
  %v1023 = vunpack.c.l.b16 %v87
  %v1024 = vunpack.c.h.b16 %v87
  %v1025 = vunpack.c.l.b16 %v88
  %v1026 = vunpack.c.h.b16 %v88
  %v1027 = vunpack.c.l.b16 %v89
  %v1028 = vunpack.c.h.b16 %v89
  %v1029 = vunpack.c.l.b16 %v90
  %v1030 = vunpack.c.h.b16 %v90
  %v1031 = vunpack.c.l.b16 %v91
  %v1032 = vunpack.c.h.b16 %v91
  %v1033 = vunpack.c.l.b16 %v92
  %v1034 = vunpack.c.h.b16 %v92
  %v1035 = vunpack.c.l.b16 %v93
  %v1036 = vunpack.c.h.b16 %v93
  %v1037 = vunpack.c.l.b16 %v94
  %v1038 = vunpack.c.h.b16 %v94
  %v1039 = vunpack.c.l.b16 %v95
  %v1040 = vunpack.c.h.b16 %v95
  %v1041 = vunpack.c.l.b16 %v96
  %v1042 = vunpack.c.h.b16 %v96
  %v1043 = vunpack.c.l.b16 %v97
  %v1044 = vunpack.c.h.b16 %v97
  %v1045 = vunpack.c.l.b16 %v98
  %v1046 = vunpack.c.h.b16 %v98
  %v1047 = vunpack.c.l.b16 %v99
  %v1048 = vunpack.c.h.b16 %v99
  %v1049 = vunpack.c.l.b16 %v100
  %v1050 = vunpack.c.h.b16 %v100
  %v1051 = vunpack.c.l.b16 %v101
  %v1052 = vunpack.c.h.b16 %v101
  %v1053 = vunpack.c.l.b16 %v102
  %v1054 = vunpack.c.h.b16 %v102
  %v1055 = vunpack.c.l.b16 %v103
  %v1056 = vunpack.c.h.b16 %v103
  %v1057 = vunpack.c.l.b16 %v104
  %v1058 = vunpack.c.h.b16 %v104
  %v1059 = vunpack.c.l.b16 %v105
  %v1060 = vunpack.c.h.b16 %v105
  %v1061 = vunpack.c.l.b16 %v106
  %v1062 = vunpack.c.h.b16 %v106
  %v1063 = vunpack.c.l.b16 %v107
  %v1064 = vunpack.c.h.b16 %v107
  %v1065 = vunpack.c.l.b16 %v108
  %v1066 = vunpack.c.h.b16 %v108
  %v1067 = vunpack.c.l.b16 %v109
  %v1068 = vunpack.c.h.b16 %v109
  %v1069 = vunpack.c.l.b16 %v110
  %v1070 = vunpack.c.h.b16 %v110
  %v1071 = vunpack.c.l.b16 %v111
  %v1072 = vunpack.c.h.b16 %v111
  %v1073 = vunpack.c.l.b16 %v112
  %v1074 = vunpack.c.h.b16 %v112
  %v1075 = vunpack.c.l.b16 %v113
  %v1076 = vunpack.c.h.b16 %v113
  %v1077 = vunpack.c.l.b16 %v114
  %v1078 = vunpack.c.h.b16 %v114
  %v1079 = vunpack.c.l.b16 %v115
  %v1080 = vunpack.c.h.b16 %v115
  %v1081 = vunpack.c.l.b16 %v116
  %v1082 = vunpack.c.h.b16 %v116
  %v1083 = vunpack.c.l.b16 %v117
  %v1084 = vunpack.c.h.b16 %v117
  %v1085 = vunpack.c.l.b16 %v118
  %v1086 = vunpack.c.h.b16 %v118
  %v1087 = vunpack.c.l.b16 %v119
  %v1088 = vunpack.c.h.b16 %v119
  %v1089 = vunpack.c.l.b16 %v120
  %v1090 = vunpack.c.h.b16 %v120
  %v1091 = vunpack.c.l.b16 %v121
  %v1092 = vunpack.c.h.b16 %v121
  %v1093 = vunpack.c.l.b16 %v122
  %v1094 = vunpack.c.h.b16 %v122
  %v1095 = vunpack.c.l.b16 %v123
  %v1096 = vunpack.c.h.b16 %v123
  %v1097 = vunpack.c.l.b16 %v124
  %v1098 = vunpack.c.h.b16 %v124
  %v1099 = vunpack.c.l.b16 %v125
  %v1100 = vunpack.c.h.b16 %v125
  %v1101 = vunpack.c.l.b16 %v126
  %v1102 = vunpack.c.h.b16 %v126
  %v1103 = vunpack.c.l.b16 %v127
  %v1104 = vunpack.c.h.b16 %v127
  %v1105 = vunpack.c.l.b16 %v128
  %v1106 = vunpack.c.h.b16 %v128
  %v1107 = vunpack.c.l.b16 %v129
  %v1108 = vunpack.c.h.b16 %v129
  %v1109 = vunpack.c.l.b16 %v130
  %v1110 = vunpack.c.h.b16 %v130
  %v1111 = vunpack.c.l.b16 %v131
  %v1112 = vunpack.c.h.b16 %v131
  %v1113 = vunpack.c.l.b16 %v132
  %v1114 = vunpack.c.h.b16 %v132
  %v1115 = vunpack.c.l.b16 %v133
  %v1116 = vunpack.c.h.b16 %v133
  %v1117 = vunpack.c.l.b16 %v134
  %v1118 = vunpack.c.h.b16 %v134
  %v1119 = vunpack.c.l.b16 %v135
  %v1120 = vunpack.c.h.b16 %v135
  %v1121 = vunpack.c.l.b16 %v136
  %v1122 = vunpack.c.h.b16 %v136
  %v1123 = vunpack.c.l.b16 %v137
  %v1124 = vunpack.c.h.b16 %v137
  %v1125 = vunpack.c.l.b16 %v138
  %v1126 = vunpack.c.h.b16 %v138
  %v1127 = vunpack.c.l.b16 %v139
  %v1128 = vunpack.c.h.b16 %v139
  %v1129 = vunpack.c.l.b16 %v140
  %v1130 = vunpack.c.h.b16 %v140
  %v1131 = vunpack.c.l.b16 %v141
  %v1132 = vunpack.c.h.b16 %v141
  %v1133 = vunpack.c.l.b16 %v142
  %v1134 = vunpack.c.h.b16 %v142
  %v1135 = vunpack.c.l.b16 %v143
  %v1136 = vunpack.c.h.b16 %v143
  %v1137 = vunpack.c.l.b16 %v144
  %v1138 = vunpack.c.h.b16 %v144
  %v1139 = vunpack.c.l.b16 %v145
  %v1140 = vunpack.c.h.b16 %v145
  %v1141 = vunpack.c.l.b16 %v146
  %v1142 = vunpack.c.h.b16 %v146
  %v1143 = vunpack.c.l.b16 %v147
  %v1144 = vunpack.c.h.b16 %v147
  %v1145 = vunpack.c.l.b16 %v148
  %v1146 = vunpack.c.h.b16 %v148
  %v1147 = vunpack.c.l.b16 %v149
  %v1148 = vunpack.c.h.b16 %v149
  %v1149 = vunpack.c.l.b16 %v150
  %v1150 = vunpack.c.h.b16 %v150
  %v1151 = vunpack.c.l.b16 %v151
  %v1152 = vunpack.c.h.b16 %v151
  %v1153 = vunpack.c.l.b16 %v152
  %v1154 = vunpack.c.h.b16 %v152
  %v1155 = vunpack.c.l.b16 %v153
  %v1156 = vunpack.c.h.b16 %v153
  %v1157 = vunpack.c.l.b16 %v154
  %v1158 = vunpack.c.h.b16 %v154
  %v1159 = vunpack.c.l.b16 %v155
  %v1160 = vunpack.c.h.b16 %v155
  %v1161 = vunpack.c.l.b16 %v156
  %v1162 = vunpack.c.h.b16 %v156
  %v1163 = vunpack.c.l.b16 %v157
  %v1164 = vunpack.c.h.b16 %v157
  %v1165 = vunpack.c.l.b16 %v158
  %v1166 = vunpack.c.h.b16 %v158
  %v1167 = vunpack.c.l.b16 %v159
  %v1168 = vunpack.c.h.b16 %v159
  %v1169 = vunpack.c.l.b16 %v160
  %v1170 = vunpack.c.h.b16 %v160
  %v1171 = vunpack.c.l.b16 %v161
  %v1172 = vunpack.c.h.b16 %v161
  %v1173 = vunpack.c.l.b16 %v162
  %v1174 = vunpack.c.h.b16 %v162
  %v1175 = vunpack.c.l.b16 %v163
  %v1176 = vunpack.c.h.b16 %v163
  %v1177 = vunpack.c.l.b16 %v164
  %v1178 = vunpack.c.h.b16 %v164
  %v1179 = vunpack.c.l.b16 %v165
  %v1180 = vunpack.c.h.b16 %v165
  %v1181 = vunpack.c.l.b16 %v166
  %v1182 = vunpack.c.h.b16 %v166
  %v1183 = vunpack.c.l.b16 %v167
  %v1184 = vunpack.c.h.b16 %v167
  %v1185 = vunpack.c.l.b16 %v168
  %v1186 = vunpack.c.h.b16 %v168
  %v1187 = vunpack.c.l.b16 %v169
  %v1188 = vunpack.c.h.b16 %v169
  %v1189 = vunpack.c.l.b16 %v170
  %v1190 = vunpack.c.h.b16 %v170
  %v1191 = vunpack.c.l.b16 %v171
  %v1192 = vunpack.c.h.b16 %v171
  %v1193 = vunpack.c.l.b16 %v172
  %v1194 = vunpack.c.h.b16 %v172
  %v1195 = vunpack.c.l.b16 %v173
  %v1196 = vunpack.c.h.b16 %v173
  %v1197 = vunpack.c.l.b16 %v174
  %v1198 = vunpack.c.h.b16 %v174
  %v1199 = vunpack.c.l.b16 %v175
  %v1200 = vunpack.c.h.b16 %v175
  %v1201 = vunpack.c.l.b16 %v176
  %v1202 = vunpack.c.h.b16 %v176
  %v1203 = vunpack.c.l.b16 %v177
  %v1204 = vunpack.c.h.b16 %v177
  %v1205 = vunpack.c.l.b16 %v178
  %v1206 = vunpack.c.h.b16 %v178
  %v1207 = vunpack.c.l.b16 %v179
  %v1208 = vunpack.c.h.b16 %v179
  %v1209 = vunpack.c.l.b16 %v180
  %v1210 = vunpack.c.h.b16 %v180
  %v1211 = vunpack.c.l.b16 %v181
  %v1212 = vunpack.c.h.b16 %v181
  %v1213 = vunpack.c.l.b16 %v182
  %v1214 = vunpack.c.h.b16 %v182
  %v1215 = vunpack.c.l.b16 %v183
  %v1216 = vunpack.c.h.b16 %v183
  %v1217 = vunpack.c.l.b16 %v184
  %v1218 = vunpack.c.h.b16 %v184
  %v1219 = vunpack.c.l.b16 %v185
  %v1220 = vunpack.c.h.b16 %v185
  %v1221 = vunpack.c.l.b16 %v186
  %v1222 = vunpack.c.h.b16 %v186
  %v1223 = vunpack.c.l.b16 %v187
  %v1224 = vunpack.c.h.b16 %v187
  %v1225 = vunpack.c.l.b16 %v188
  %v1226 = vunpack.c.h.b16 %v188
  %v1227 = vunpack.c.l.b16 %v189
  %v1228 = vunpack.c.h.b16 %v189
  %v1229 = vunpack.c.l.b16 %v190
  %v1230 = vunpack.c.h.b16 %v190
  %v1231 = vunpack.c.l.b16 %v191
  %v1232 = vunpack.c.h.b16 %v191
  %v1233 = vunpack.c.l.b16 %v192
  %v1234 = vunpack.c.h.b16 %v192
  %v1235 = vunpack.c.l.b16 %v193
  %v1236 = vunpack.c.h.b16 %v193
  %v1237 = vunpack.c.l.b16 %v194
  %v1238 = vunpack.c.h.b16 %v194
  %v1239 = vunpack.c.l.b16 %v195
  %v1240 = vunpack.c.h.b16 %v195
  %v1241 = vunpack.c.l.b16 %v196
  %v1242 = vunpack.c.h.b16 %v196
  %v1243 = vunpack.c.l.b16 %v197
  %v1244 = vunpack.c.h.b16 %v197
  %v1245 = vunpack.c.l.b16 %v198
  %v1246 = vunpack.c.h.b16 %v198
  %v1247 = vunpack.c.l.b16 %v199
  %v1248 = vunpack.c.h.b16 %v199
  %v1249 = vunpack.c.l.b16 %v200
  %v1250 = vunpack.c.h.b16 %v200
  %v1251 = vunpack.c.l.b16 %v201
  %v1252 = vunpack.c.h.b16 %v201
  %v1253 = vunpack.c.l.b16 %v202
  %v1254 = vunpack.c.h.b16 %v202
  %v1255 = vunpack.c.l.b16 %v203
  %v1256 = vunpack.c.h.b16 %v203
  %v1257 = vunpack.c.l.b16 %v204
  %v1258 = vunpack.c.h.b16 %v204
  %v1259 = vunpack.c.l.b16 %v205
  %v1260 = vunpack.c.h.b16 %v205
  %v1261 = vunpack.c.l.b16 %v206
  %v1262 = vunpack.c.h.b16 %v206
  %v1263 = vunpack.c.l.b16 %v207
  %v1264 = vunpack.c.h.b16 %v207
  %v1265 = vunpack.c.l.b16 %v208
  %v1266 = vunpack.c.h.b16 %v208
  %v1267 = vunpack.c.l.b16 %v209
  %v1268 = vunpack.c.h.b16 %v209
  %v1269 = vunpack.c.l.b16 %v210
  %v1270 = vunpack.c.h.b16 %v210
  %v1271 = vunpack.c.l.b16 %v211
  %v1272 = vunpack.c.h.b16 %v211
  %v1273 = vunpack.c.l.b16 %v212
  %v1274 = vunpack.c.h.b16 %v212
  %v1275 = vunpack.c.l.b16 %v213
  %v1276 = vunpack.c.h.b16 %v213
  %v1277 = vunpack.c.l.b16 %v214
  %v1278 = vunpack.c.h.b16 %v214
  %v1279 = vunpack.c.l.b16 %v215
  %v1280 = vunpack.c.h.b16 %v215
  %v1281 = vunpack.c.l.b16 %v216
  %v1282 = vunpack.c.h.b16 %v216
  %v1283 = vunpack.c.l.b16 %v217
  %v1284 = vunpack.c.h.b16 %v217
  %v1285 = vunpack.c.l.b16 %v218
  %v1286 = vunpack.c.h.b16 %v218
  %v1287 = vunpack.c.l.b16 %v219
  %v1288 = vunpack.c.h.b16 %v219
  %v1289 = vunpack.c.l.b16 %v220
  %v1290 = vunpack.c.h.b16 %v220
  %v1291 = vunpack.c.l.b16 %v221
  %v1292 = vunpack.c.h.b16 %v221
  %v1293 = vunpack.c.l.b16 %v222
  %v1294 = vunpack.c.h.b16 %v222
  %v1295 = vunpack.c.l.b16 %v223
  %v1296 = vunpack.c.h.b16 %v223
  %v1297 = vunpack.c.l.b16 %v224
  %v1298 = vunpack.c.h.b16 %v224
  %v1299 = vunpack.c.l.b16 %v225
  %v1300 = vunpack.c.h.b16 %v225
  %v1301 = vunpack.c.l.b16 %v226
  %v1302 = vunpack.c.h.b16 %v226
  %v1303 = vunpack.c.l.b16 %v227
  %v1304 = vunpack.c.h.b16 %v227
  %v1305 = vunpack.c.l.b16 %v228
  %v1306 = vunpack.c.h.b16 %v228
  %v1307 = vunpack.c.l.b16 %v229
  %v1308 = vunpack.c.h.b16 %v229
  %v1309 = vunpack.c.l.b16 %v230
  %v1310 = vunpack.c.h.b16 %v230
  %v1311 = vunpack.c.l.b16 %v231
  %v1312 = vunpack.c.h.b16 %v231
  %v1313 = vunpack.c.l.b16 %v232
  %v1314 = vunpack.c.h.b16 %v232
  %v1315 = vunpack.c.l.b16 %v233
  %v1316 = vunpack.c.h.b16 %v233
  %v1317 = vunpack.c.l.b16 %v234
  %v1318 = vunpack.c.h.b16 %v234
  %v1319 = vunpack.c.l.b16 %v235
  %v1320 = vunpack.c.h.b16 %v235
  %v1321 = vunpack.c.l.b16 %v236
  %v1322 = vunpack.c.h.b16 %v236
  %v1323 = vunpack.c.l.b16 %v237
  %v1324 = vunpack.c.h.b16 %v237
  %v1325 = vunpack.c.l.b16 %v238
  %v1326 = vunpack.c.h.b16 %v238
  %v1327 = vunpack.c.l.b16 %v239
  %v1328 = vunpack.c.h.b16 %v239
  %v1329 = vunpack.c.l.b16 %v240
  %v1330 = vunpack.c.h.b16 %v240
  %v1331 = vunpack.c.l.b16 %v241
  %v1332 = vunpack.c.h.b16 %v241
  %v1333 = vunpack.c.l.b16 %v242
  %v1334 = vunpack.c.h.b16 %v242
  %v1335 = vunpack.c.l.b16 %v243
  %v1336 = vunpack.c.h.b16 %v243
  %v1337 = vunpack.c.l.b16 %v244
  %v1338 = vunpack.c.h.b16 %v244
  %v1339 = vunpack.c.l.b16 %v245
  %v1340 = vunpack.c.h.b16 %v245
  %v1341 = vunpack.c.l.b16 %v246
  %v1342 = vunpack.c.h.b16 %v246
  %v1343 = vunpack.c.l.b16 %v247
  %v1344 = vunpack.c.h.b16 %v247
  %v1345 = vunpack.c.l.b16 %v248
  %v1346 = vunpack.c.h.b16 %v248
  %v1347 = vunpack.c.l.b16 %v249
  %v1348 = vunpack.c.h.b16 %v249
  %v1349 = vunpack.c.l.b16 %v250
  %v1350 = vunpack.c.h.b16 %v250
  %v1351 = vunpack.c.l.b16 %v251
  %v1352 = vunpack.c.h.b16 %v251
  %v1353 = vunpack.c.l.b16 %v252
  %v1354 = vunpack.c.h.b16 %v252
  %v1355 = vunpack.c.l.b16 %v253
  %v1356 = vunpack.c.h.b16 %v253
  %v1357 = vunpack.c.l.b16 %v254
  %v1358 = vunpack.c.h.b16 %v254
  %v1359 = vunpack.c.l.b16 %v255
  %v1360 = vunpack.c.h.b16 %v255
  %v1361 = vunpack.c.l.b16 %v256
  %v1362 = vunpack.c.h.b16 %v256
  %v1363 = vunpack.c.l.b16 %v257
  %v1364 = vunpack.c.h.b16 %v257
  %v1365 = vunpack.c.l.b16 %v258
  %v1366 = vunpack.c.h.b16 %v258
  %v1367 = vunpack.c.l.b16 %v259
  %v1368 = vunpack.c.h.b16 %v259
  %v1369 = vunpack.c.l.b16 %v260
  %v1370 = vunpack.c.h.b16 %v260
  %v1371 = vunpack.c.l.b16 %v261
  %v1372 = vunpack.c.h.b16 %v261
  %v1373 = vunpack.c.l.b16 %v262
  %v1374 = vunpack.c.h.b16 %v262
  %v1375 = vunpack.c.l.b16 %v263
  %v1376 = vunpack.c.h.b16 %v263
  %v1377 = vunpack.c.l.b16 %v264
  %v1378 = vunpack.c.h.b16 %v264
  %v1379 = vunpack.c.l.b16 %v265
  %v1380 = vunpack.c.h.b16 %v265
  %v1381 = vunpack.c.l.b16 %v266
  %v1382 = vunpack.c.h.b16 %v266
  %v1383 = vunpack.c.l.b16 %v267
  %v1384 = vunpack.c.h.b16 %v267
  %v1385 = vunpack.c.l.b16 %v268
  %v1386 = vunpack.c.h.b16 %v268
  %v1387 = vunpack.c.l.b16 %v269
  %v1388 = vunpack.c.h.b16 %v269
  %v1389 = vunpack.c.l.b16 %v270
  %v1390 = vunpack.c.h.b16 %v270
  %v1391 = vunpack.c.l.b16 %v271
  %v1392 = vunpack.c.h.b16 %v271
  %v1393 = vunpack.c.l.b16 %v272
  %v1394 = vunpack.c.h.b16 %v272
  %v1395 = vunpack.c.l.b16 %v273
  %v1396 = vunpack.c.h.b16 %v273
  %v1397 = vunpack.c.l.b16 %v274
  %v1398 = vunpack.c.h.b16 %v274
  %v1399 = vunpack.c.l.b16 %v275
  %v1400 = vunpack.c.h.b16 %v275
  %v1401 = vunpack.c.l.b16 %v276
  %v1402 = vunpack.c.h.b16 %v276
  %v1403 = vunpack.c.l.b16 %v277
  %v1404 = vunpack.c.h.b16 %v277
  %v1405 = vunpack.c.l.b16 %v278
  %v1406 = vunpack.c.h.b16 %v278
  %v1407 = vunpack.c.l.b16 %v279
  %v1408 = vunpack.c.h.b16 %v279
  %v1409 = vunpack.c.l.b16 %v280
  %v1410 = vunpack.c.h.b16 %v280
  %v1411 = vunpack.c.l.b16 %v281
  %v1412 = vunpack.c.h.b16 %v281
  %v1413 = vunpack.c.l.b16 %v282
  %v1414 = vunpack.c.h.b16 %v282
  %v1415 = vunpack.c.l.b16 %v283
  %v1416 = vunpack.c.h.b16 %v283
  %v1417 = vunpack.c.l.b16 %v284
  %v1418 = vunpack.c.h.b16 %v284
  %v1419 = vunpack.c.l.b16 %v285
  %v1420 = vunpack.c.h.b16 %v285
  %v1421 = vunpack.c.l.b16 %v286
  %v1422 = vunpack.c.h.b16 %v286
  %v1423 = vunpack.c.l.b16 %v287
  %v1424 = vunpack.c.h.b16 %v287
  %v1425 = vunpack.c.l.b16 %v288
  %v1426 = vunpack.c.h.b16 %v288
  %v1427 = vunpack.c.l.b16 %v289
  %v1428 = vunpack.c.h.b16 %v289
  %v1429 = vunpack.c.l.b16 %v290
  %v1430 = vunpack.c.h.b16 %v290
  %v1431 = vunpack.c.l.b16 %v291
  %v1432 = vunpack.c.h.b16 %v291
  %v1433 = vunpack.c.l.b16 %v292
  %v1434 = vunpack.c.h.b16 %v292
  %v1435 = vunpack.c.l.b16 %v293
  %v1436 = vunpack.c.h.b16 %v293
  %v1437 = vunpack.c.l.b16 %v294
  %v1438 = vunpack.c.h.b16 %v294
  %v1439 = vunpack.c.l.b16 %v295
  %v1440 = vunpack.c.h.b16 %v295
  %v1441 = vunpack.c.l.b16 %v296
  %v1442 = vunpack.c.h.b16 %v296
  %v1443 = vunpack.c.l.b16 %v297
  %v1444 = vunpack.c.h.b16 %v297
  %v1445 = vunpack.c.l.b16 %v298
  %v1446 = vunpack.c.h.b16 %v298
  %v1447 = vunpack.c.l.b16 %v299
  %v1448 = vunpack.c.h.b16 %v299
  %v1449 = vunpack.c.l.b16 %v300
  %v1450 = vunpack.c.h.b16 %v300
  %v1451 = vunpack.c.l.b16 %v301
  %v1452 = vunpack.c.h.b16 %v301
  %v1453 = vunpack.c.l.b16 %v302
  %v1454 = vunpack.c.h.b16 %v302
  %v1455 = vunpack.c.l.b16 %v303
  %v1456 = vunpack.c.h.b16 %v303
  %v1457 = vunpack.c.l.b16 %v304
  %v1458 = vunpack.c.h.b16 %v304
  %v1459 = vunpack.c.l.b16 %v305
  %v1460 = vunpack.c.h.b16 %v305
  %v1461 = vunpack.c.l.b16 %v306
  %v1462 = vunpack.c.h.b16 %v306
  %v1463 = vunpack.c.l.b16 %v307
  %v1464 = vunpack.c.h.b16 %v307
  %v1465 = vunpack.c.l.b16 %v308
  %v1466 = vunpack.c.h.b16 %v308
  %v1467 = vunpack.c.l.b16 %v309
  %v1468 = vunpack.c.h.b16 %v309
  %v1469 = vunpack.c.l.b16 %v310
  %v1470 = vunpack.c.h.b16 %v310
  %v1471 = vunpack.c.l.b16 %v311
  %v1472 = vunpack.c.h.b16 %v311
  %v1473 = vunpack.c.l.b16 %v312
  %v1474 = vunpack.c.h.b16 %v312
  %v1475 = vunpack.c.l.b16 %v313
  %v1476 = vunpack.c.h.b16 %v313
  %v1477 = vunpack.c.l.b16 %v314
  %v1478 = vunpack.c.h.b16 %v314
  %v1479 = vunpack.c.l.b16 %v315
  %v1480 = vunpack.c.h.b16 %v315
  %v1481 = vunpack.c.l.b16 %v316
  %v1482 = vunpack.c.h.b16 %v316
  %v1483 = vunpack.c.l.b16 %v317
  %v1484 = vunpack.c.h.b16 %v317
  %v1485 = vunpack.c.l.b16 %v318
  %v1486 = vunpack.c.h.b16 %v318
  %v1487 = vunpack.c.l.b16 %v319
  %v1488 = vunpack.c.h.b16 %v319
  %v1489 = vunpack.c.l.b16 %v320
  %v1490 = vunpack.c.h.b16 %v320
  %v1491 = vunpack.c.l.b16 %v321
  %v1492 = vunpack.c.h.b16 %v321
  %v1493 = vunpack.c.l.b16 %v322
  %v1494 = vunpack.c.h.b16 %v322
  %v1495 = vunpack.c.l.b16 %v323
  %v1496 = vunpack.c.h.b16 %v323
  %v1497 = vunpack.c.l.b16 %v324
  %v1498 = vunpack.c.h.b16 %v324
  %v1499 = vunpack.c.l.b16 %v325
  %v1500 = vunpack.c.h.b16 %v325
  %v1501 = vunpack.c.l.b16 %v326
  %v1502 = vunpack.c.h.b16 %v326
  %v1503 = vunpack.c.l.b16 %v327
  %v1504 = vunpack.c.h.b16 %v327
  %v1505 = vunpack.c.l.b16 %v328
  %v1506 = vunpack.c.h.b16 %v328
  %v1507 = vunpack.c.l.b16 %v329
  %v1508 = vunpack.c.h.b16 %v329
  %v1509 = vunpack.c.l.b16 %v330
  %v1510 = vunpack.c.h.b16 %v330
  %v1511 = vunpack.c.l.b16 %v331
  %v1512 = vunpack.c.h.b16 %v331
  %v1513 = vunpack.c.l.b16 %v332
  %v1514 = vunpack.c.h.b16 %v332
  %v1515 = vunpack.c.l.b16 %v333
  %v1516 = vunpack.c.h.b16 %v333
  %v1517 = vunpack.c.l.b16 %v334
  %v1518 = vunpack.c.h.b16 %v334
  %v1519 = vunpack.c.l.b16 %v335
  %v1520 = vunpack.c.h.b16 %v335
  %v1521 = vunpack.c.l.b16 %v336
  %v1522 = vunpack.c.h.b16 %v336
  %v1523 = vunpack.c.l.b16 %v337
  %v1524 = vunpack.c.h.b16 %v337
  %v1525 = vunpack.c.l.b16 %v338
  %v1526 = vunpack.c.h.b16 %v338
  %v1527 = vunpack.c.l.b16 %v339
  %v1528 = vunpack.c.h.b16 %v339
  %v1529 = vunpack.c.l.b16 %v340
  %v1530 = vunpack.c.h.b16 %v340
  %v1531 = vunpack.c.l.b16 %v341
  %v1532 = vunpack.c.h.b16 %v341
  %v1533 = vunpack.c.l.b16 %v342
  %v1534 = vunpack.c.h.b16 %v342
  %v1535 = vunpack.c.l.b16 %v343
  %v1536 = vunpack.c.h.b16 %v343
  %v1537 = vunpack.c.l.b16 %v344
  %v1538 = vunpack.c.h.b16 %v344
  %v1539 = vunpack.c.l.b16 %v345
  %v1540 = vunpack.c.h.b16 %v345
  %v1541 = vunpack.c.l.b16 %v346
  %v1542 = vunpack.c.h.b16 %v346
  %v1543 = vunpack.c.l.b16 %v347
  %v1544 = vunpack.c.h.b16 %v347
  %v1545 = vunpack.c.l.b16 %v348
  %v1546 = vunpack.c.h.b16 %v348
  %v1547 = vunpack.c.l.b16 %v349
  %v1548 = vunpack.c.h.b16 %v349
  %v1549 = vunpack.c.l.b16 %v350
  %v1550 = vunpack.c.h.b16 %v350
  %v1551 = vunpack.c.l.b16 %v351
  %v1552 = vunpack.c.h.b16 %v351
  %v1553 = vunpack.c.l.b16 %v352
  %v1554 = vunpack.c.h.b16 %v352
  %v1555 = vunpack.c.l.b16 %v353
  %v1556 = vunpack.c.h.b16 %v353
  %v1557 = vunpack.c.l.b16 %v354
  %v1558 = vunpack.c.h.b16 %v354
  %v1559 = vunpack.c.l.b16 %v355
  %v1560 = vunpack.c.h.b16 %v355
  %v1561 = vunpack.c.l.b16 %v356
  %v1562 = vunpack.c.h.b16 %v356
  %v1563 = vunpack.c.l.b16 %v357
  %v1564 = vunpack.c.h.b16 %v357
  %v1565 = vunpack.c.l.b16 %v358
  %v1566 = vunpack.c.h.b16 %v358
  %v1567 = vunpack.c.l.b16 %v359
  %v1568 = vunpack.c.h.b16 %v359
  %v1569 = vunpack.c.l.b16 %v360
  %v1570 = vunpack.c.h.b16 %v360
  %v1571 = vunpack.c.l.b16 %v361
  %v1572 = vunpack.c.h.b16 %v361
  %v1573 = vunpack.c.l.b16 %v362
  %v1574 = vunpack.c.h.b16 %v362
  %v1575 = vunpack.c.l.b16 %v363
  %v1576 = vunpack.c.h.b16 %v363
  %v1577 = vunpack.c.l.b16 %v364
  %v1578 = vunpack.c.h.b16 %v364
  %v1579 = vunpack.c.l.b16 %v365
  %v1580 = vunpack.c.h.b16 %v365
  %v1581 = vunpack.c.l.b16 %v366
  %v1582 = vunpack.c.h.b16 %v366
  %v1583 = vunpack.c.l.b16 %v367
  %v1584 = vunpack.c.h.b16 %v367
  %v1585 = vunpack.c.l.b16 %v368
  %v1586 = vunpack.c.h.b16 %v368
  %v1587 = vunpack.c.l.b16 %v369
  %v1588 = vunpack.c.h.b16 %v369
  %v1589 = vunpack.c.l.b16 %v370
  %v1590 = vunpack.c.h.b16 %v370
  %v1591 = vunpack.c.l.b16 %v371
  %v1592 = vunpack.c.h.b16 %v371
  %v1593 = vunpack.c.l.b16 %v372
  %v1594 = vunpack.c.h.b16 %v372
  %v1595 = vunpack.c.l.b16 %v373
  %v1596 = vunpack.c.h.b16 %v373
  %v1597 = vunpack.c.l.b16 %v374
  %v1598 = vunpack.c.h.b16 %v374
  %v1599 = vunpack.c.l.b16 %v375
  %v1600 = vunpack.c.h.b16 %v375
  %v1601 = vunpack.c.l.b16 %v376
  %v1602 = vunpack.c.h.b16 %v376
  %v1603 = vunpack.c.l.b16 %v377
  %v1604 = vunpack.c.h.b16 %v377
  %v1605 = vunpack.c.l.b16 %v378
  %v1606 = vunpack.c.h.b16 %v378
  %v1607 = vunpack.c.l.b16 %v379
  %v1608 = vunpack.c.h.b16 %v379
  %v1609 = vunpack.c.l.b16 %v380
  %v1610 = vunpack.c.h.b16 %v380
  %v1611 = vunpack.c.l.b16 %v381
  %v1612 = vunpack.c.h.b16 %v381
  %v1613 = vunpack.c.l.b16 %v382
  %v1614 = vunpack.c.h.b16 %v382
  %v1615 = vunpack.c.l.b16 %v383
  %v1616 = vunpack.c.h.b16 %v383
  %v1617 = vunpack.c.l.b16 %v384
  %v1618 = vunpack.c.h.b16 %v384
  %v1619 = vunpack.c.l.b16 %v385
  %v1620 = vunpack.c.h.b16 %v385
  %v1621 = vunpack.c.l.b16 %v386
  %v1622 = vunpack.c.h.b16 %v386
  %v1623 = vunpack.c.l.b16 %v387
  %v1624 = vunpack.c.h.b16 %v387
  %v1625 = vunpack.c.l.b16 %v388
  %v1626 = vunpack.c.h.b16 %v388
  %v1627 = vunpack.c.l.b16 %v389
  %v1628 = vunpack.c.h.b16 %v389
  %v1629 = vunpack.c.l.b16 %v390
  %v1630 = vunpack.c.h.b16 %v390
  %v1631 = vunpack.c.l.b16 %v391
  %v1632 = vunpack.c.h.b16 %v391
  %v1633 = vunpack.c.l.b16 %v392
  %v1634 = vunpack.c.h.b16 %v392
  %v1635 = vunpack.c.l.b16 %v393
  %v1636 = vunpack.c.h.b16 %v393
  %v1637 = vunpack.c.l.b16 %v394
  %v1638 = vunpack.c.h.b16 %v394
  %v1639 = vunpack.c.l.b16 %v395
  %v1640 = vunpack.c.h.b16 %v395
  %v1641 = vunpack.c.l.b16 %v396
  %v1642 = vunpack.c.h.b16 %v396
  %v1643 = vunpack.c.l.b16 %v397
  %v1644 = vunpack.c.h.b16 %v397
  %v1645 = vunpack.c.l.b16 %v398
  %v1646 = vunpack.c.h.b16 %v398
  %v1647 = vunpack.c.l.b16 %v399
  %v1648 = vunpack.c.h.b16 %v399
  %v1649 = vunpack.c.l.b16 %v400
  %v1650 = vunpack.c.h.b16 %v400
  %v1651 = vunpack.c.l.b16 %v401
  %v1652 = vunpack.c.h.b16 %v401
  %v1653 = vunpack.c.l.b16 %v402
  %v1654 = vunpack.c.h.b16 %v402
  %v1655 = vunpack.c.l.b16 %v403
  %v1656 = vunpack.c.h.b16 %v403
  %v1657 = vunpack.c.l.b16 %v404
  %v1658 = vunpack.c.h.b16 %v404
  %v1659 = vunpack.c.l.b16 %v405
  %v1660 = vunpack.c.h.b16 %v405
  %v1661 = vunpack.c.l.b16 %v406
  %v1662 = vunpack.c.h.b16 %v406
  %v1663 = vunpack.c.l.b16 %v407
  %v1664 = vunpack.c.h.b16 %v407
  %v1665 = vunpack.c.l.b16 %v408
  %v1666 = vunpack.c.h.b16 %v408
  %v1667 = vunpack.c.l.b16 %v409
  %v1668 = vunpack.c.h.b16 %v409
  %v1669 = vunpack.c.l.b16 %v410
  %v1670 = vunpack.c.h.b16 %v410
  %v1671 = vunpack.c.l.b16 %v411
  %v1672 = vunpack.c.h.b16 %v411
  %v1673 = vunpack.c.l.b16 %v412
  %v1674 = vunpack.c.h.b16 %v412
  %v1675 = vunpack.c.l.b16 %v413
  %v1676 = vunpack.c.h.b16 %v413
  %v1677 = vunpack.c.l.b16 %v414
  %v1678 = vunpack.c.h.b16 %v414
  %v1679 = vunpack.c.l.b16 %v415
  %v1680 = vunpack.c.h.b16 %v415
  %v1681 = vunpack.c.l.b16 %v416
  %v1682 = vunpack.c.h.b16 %v416
  %v1683 = vunpack.c.l.b16 %v417
  %v1684 = vunpack.c.h.b16 %v417
  %v1685 = vunpack.c.l.b16 %v418
  %v1686 = vunpack.c.h.b16 %v418
  %v1687 = vunpack.c.l.b16 %v419
  %v1688 = vunpack.c.h.b16 %v419
  %v1689 = vunpack.c.l.b16 %v420
  %v1690 = vunpack.c.h.b16 %v420
  %v1691 = vunpack.c.l.b16 %v421
  %v1692 = vunpack.c.h.b16 %v421
  %v1693 = vunpack.c.l.b16 %v422
  %v1694 = vunpack.c.h.b16 %v422
  %v1695 = vunpack.c.l.b16 %v423
  %v1696 = vunpack.c.h.b16 %v423
  %v1697 = vunpack.c.l.b16 %v424
  %v1698 = vunpack.c.h.b16 %v424
  %v1699 = vunpack.c.l.b16 %v425
  %v1700 = vunpack.c.h.b16 %v425
  %v1701 = vpack.c.b16 %v919, %v917
  %v1702 = vpack.c.b16 %v920, %v918
  %v1703 = vpack.c.b16 %v923, %v921
  %v1704 = vpack.c.b16 %v924, %v922
  %v1705 = vpack.c.b16 %v927, %v925
  %v1706 = vpack.c.b16 %v928, %v926
  %v1707 = vpack.c.b16 %v931, %v929
  %v1708 = vpack.c.b16 %v932, %v930
  %v1709 = vpack.c.b16 %v935, %v933
  %v1710 = vpack.c.b16 %v936, %v934
  %v1711 = vpack.c.b16 %v939, %v937
  %v1712 = vpack.c.b16 %v940, %v938
  %v1713 = vpack.c.b16 %v943, %v941
  %v1714 = vpack.c.b16 %v944, %v942
  %v1715 = vpack.c.b16 %v947, %v945
  %v1716 = vpack.c.b16 %v948, %v946
  %v1717 = vpack.c.b16 %v951, %v949
  %v1718 = vpack.c.b16 %v952, %v950
  %v1719 = vpack.c.b16 %v955, %v953
  %v1720 = vpack.c.b16 %v956, %v954
  %v1721 = vpack.c.b16 %v959, %v957
  %v1722 = vpack.c.b16 %v960, %v958
  %v1723 = vpack.c.b16 %v963, %v961
  %v1724 = vpack.c.b16 %v964, %v962
  %v1725 = vpack.c.b16 %v967, %v965
  %v1726 = vpack.c.b16 %v968, %v966
  %v1727 = vpack.c.b16 %v971, %v969
  %v1728 = vpack.c.b16 %v972, %v970
  %v1729 = vpack.c.b16 %v975, %v973
  %v1730 = vpack.c.b16 %v976, %v974
  %v1731 = vpack.c.b16 %v979, %v977
  %v1732 = vpack.c.b16 %v980, %v978
  %v1733 = vpack.c.b16 %v983, %v981
  %v1734 = vpack.c.b16 %v984, %v982
  %v1735 = vpack.c.b16 %v987, %v985
  %v1736 = vpack.c.b16 %v988, %v986
  %v1737 = vpack.c.b16 %v991, %v989
  %v1738 = vpack.c.b16 %v992, %v990
  %v1739 = vpack.c.b16 %v995, %v993
  %v1740 = vpack.c.b16 %v996, %v994
  %v1741 = vpack.c.b16 %v999, %v997
  %v1742 = vpack.c.b16 %v1000, %v998
  %v1743 = vpack.c.b16 %v1003, %v1001
  %v1744 = vpack.c.b16 %v1004, %v1002
  %v1745 = vpack.c.b16 %v1007, %v1005
  %v1746 = vpack.c.b16 %v1008, %v1006
  %v1747 = vpack.c.b16 %v1011, %v1009
  %v1748 = vpack.c.b16 %v1012, %v1010
  %v1749 = vpack.c.b16 %v1015, %v1013
  %v1750 = vpack.c.b16 %v1016, %v1014
  %v1751 = vpack.c.b16 %v1019, %v1017
  %v1752 = vpack.c.b16 %v1020, %v1018
  %v1753 = vpack.c.b16 %v1023, %v1021
  %v1754 = vpack.c.b16 %v1024, %v1022
  %v1755 = vpack.c.b16 %v1027, %v1025
  %v1756 = vpack.c.b16 %v1028, %v1026
  %v1757 = vpack.c.b16 %v1031, %v1029
  %v1758 = vpack.c.b16 %v1032, %v1030
  %v1759 = vpack.c.b16 %v1035, %v1033
  %v1760 = vpack.c.b16 %v1036, %v1034
  %v1761 = vpack.c.b16 %v1039, %v1037
  %v1762 = vpack.c.b16 %v1040, %v1038
  %v1763 = vpack.c.b16 %v1043, %v1041
  %v1764 = vpack.c.b16 %v1044, %v1042
  %v1765 = vpack.c.b16 %v1047, %v1045
  %v1766 = vpack.c.b16 %v1048, %v1046
  %v1767 = vpack.c.b16 %v1051, %v1049
  %v1768 = vpack.c.b16 %v1052, %v1050
  %v1769 = vpack.c.b16 %v1055, %v1053
  %v1770 = vpack.c.b16 %v1056, %v1054
  %v1771 = vpack.c.b16 %v1059, %v1057
  %v1772 = vpack.c.b16 %v1060, %v1058
  %v1773 = vpack.c.b16 %v1063, %v1061
  %v1774 = vpack.c.b16 %v1064, %v1062
  %v1775 = vpack.c.b16 %v1067, %v1065
  %v1776 = vpack.c.b16 %v1068, %v1066
  %v1777 = vpack.c.b16 %v1071, %v1069
  %v1778 = vpack.c.b16 %v1072, %v1070
  %v1779 = vpack.c.b16 %v1075, %v1073
  %v1780 = vpack.c.b16 %v1076, %v1074
  %v1781 = vpack.c.b16 %v1079, %v1077
  %v1782 = vpack.c.b16 %v1080, %v1078
  %v1783 = vpack.c.b16 %v1083, %v1081
  %v1784 = vpack.c.b16 %v1084, %v1082
  %v1785 = vpack.c.b16 %v1087, %v1085
  %v1786 = vpack.c.b16 %v1088, %v1086
  %v1787 = vpack.c.b16 %v1091, %v1089
  %v1788 = vpack.c.b16 %v1092, %v1090
  %v1789 = vpack.c.b16 %v1095, %v1093
  %v1790 = vpack.c.b16 %v1096, %v1094
  %v1791 = vpack.c.b16 %v1099, %v1097
  %v1792 = vpack.c.b16 %v1100, %v1098
  %v1793 = vpack.c.b16 %v1103, %v1101
  %v1794 = vpack.c.b16 %v1104, %v1102
  %v1795 = vpack.c.b16 %v1107, %v1105
  %v1796 = vpack.c.b16 %v1108, %v1106
  %v1797 = vpack.c.b16 %v1111, %v1109
  %v1798 = vpack.c.b16 %v1112, %v1110
  %v1799 = vpack.c.b16 %v1115, %v1113
  %v1800 = vpack.c.b16 %v1116, %v1114
  %v1801 = vpack.c.b16 %v1119, %v1117
  %v1802 = vpack.c.b16 %v1120, %v1118
  %v1803 = vpack.c.b16 %v1123, %v1121
  %v1804 = vpack.c.b16 %v1124, %v1122
  %v1805 = vpack.c.b16 %v1127, %v1125
  %v1806 = vpack.c.b16 %v1128, %v1126
  %v1807 = vpack.c.b16 %v1131, %v1129
  %v1808 = vpack.c.b16 %v1132, %v1130
  %v1809 = vpack.c.b16 %v1135, %v1133
  %v1810 = vpack.c.b16 %v1136, %v1134
  %v1811 = vpack.c.b16 %v1139, %v1137
  %v1812 = vpack.c.b16 %v1140, %v1138
  %v1813 = vpack.c.b16 %v1143, %v1141
  %v1814 = vpack.c.b16 %v1144, %v1142
  %v1815 = vpack.c.b16 %v1147, %v1145
  %v1816 = vpack.c.b16 %v1148, %v1146
  %v1817 = vpack.c.b16 %v1151, %v1149
  %v1818 = vpack.c.b16 %v1152, %v1150
  %v1819 = vpack.c.b16 %v1155, %v1153
  %v1820 = vpack.c.b16 %v1156, %v1154
  %v1821 = vpack.c.b16 %v1159, %v1157
  %v1822 = vpack.c.b16 %v1160, %v1158
  %v1823 = vpack.c.b16 %v1163, %v1161
  %v1824 = vpack.c.b16 %v1164, %v1162
  %v1825 = vpack.c.b16 %v1167, %v1165
  %v1826 = vpack.c.b16 %v1168, %v1166
  %v1827 = vpack.c.b16 %v1171, %v1169
  %v1828 = vpack.c.b16 %v1172, %v1170
  %v1829 = vpack.c.b16 %v1175, %v1173
  %v1830 = vpack.c.b16 %v1176, %v1174
  %v1831 = vpack.c.b16 %v1179, %v1177
  %v1832 = vpack.c.b16 %v1180, %v1178
  %v1833 = vpack.c.b16 %v1183, %v1181
  %v1834 = vpack.c.b16 %v1184, %v1182
  %v1835 = vpack.c.b16 %v1187, %v1185
  %v1836 = vpack.c.b16 %v1188, %v1186
  %v1837 = vpack.c.b16 %v1191, %v1189
  %v1838 = vpack.c.b16 %v1192, %v1190
  %v1839 = vpack.c.b16 %v1195, %v1193
  %v1840 = vpack.c.b16 %v1196, %v1194
  %v1841 = vpack.c.b16 %v1199, %v1197
  %v1842 = vpack.c.b16 %v1200, %v1198
  %v1843 = vpack.c.b16 %v1203, %v1201
  %v1844 = vpack.c.b16 %v1204, %v1202
  %v1845 = vpack.c.b16 %v1207, %v1205
  %v1846 = vpack.c.b16 %v1208, %v1206
  %v1847 = vpack.c.b16 %v1211, %v1209
  %v1848 = vpack.c.b16 %v1212, %v1210
  %v1849 = vpack.c.b16 %v1215, %v1213
  %v1850 = vpack.c.b16 %v1216, %v1214
  %v1851 = vpack.c.b16 %v1219, %v1217
  %v1852 = vpack.c.b16 %v1220, %v1218
  %v1853 = vpack.c.b16 %v1223, %v1221
  %v1854 = vpack.c.b16 %v1224, %v1222
  %v1855 = vpack.c.b16 %v1227, %v1225
  %v1856 = vpack.c.b16 %v1228, %v1226
  %v1857 = vpack.c.b16 %v1231, %v1229
  %v1858 = vpack.c.b16 %v1232, %v1230
  %v1859 = vpack.c.b16 %v1235, %v1233
  %v1860 = vpack.c.b16 %v1236, %v1234
  %v1861 = vpack.c.b16 %v1239, %v1237
  %v1862 = vpack.c.b16 %v1240, %v1238
  %v1863 = vpack.c.b16 %v1243, %v1241
  %v1864 = vpack.c.b16 %v1244, %v1242
  %v1865 = vpack.c.b16 %v1247, %v1245
  %v1866 = vpack.c.b16 %v1248, %v1246
  %v1867 = vpack.c.b16 %v1251, %v1249
  %v1868 = vpack.c.b16 %v1252, %v1250
  %v1869 = vpack.c.b16 %v1255, %v1253
  %v1870 = vpack.c.b16 %v1256, %v1254
  %v1871 = vpack.c.b16 %v1259, %v1257
  %v1872 = vpack.c.b16 %v1260, %v1258
  %v1873 = vpack.c.b16 %v1263, %v1261
  %v1874 = vpack.c.b16 %v1264, %v1262
  %v1875 = vpack.c.b16 %v1267, %v1265
  %v1876 = vpack.c.b16 %v1268, %v1266
  %v1877 = vpack.c.b16 %v1271, %v1269
  %v1878 = vpack.c.b16 %v1272, %v1270
  %v1879 = vpack.c.b16 %v1275, %v1273
  %v1880 = vpack.c.b16 %v1276, %v1274
  %v1881 = vpack.c.b16 %v1279, %v1277
  %v1882 = vpack.c.b16 %v1280, %v1278
  %v1883 = vpack.c.b16 %v1283, %v1281
  %v1884 = vpack.c.b16 %v1284, %v1282
  %v1885 = vpack.c.b16 %v1287, %v1285
  %v1886 = vpack.c.b16 %v1288, %v1286
  %v1887 = vpack.c.b16 %v1291, %v1289
  %v1888 = vpack.c.b16 %v1292, %v1290
  %v1889 = vpack.c.b16 %v1295, %v1293
  %v1890 = vpack.c.b16 %v1296, %v1294
  %v1891 = vpack.c.b16 %v1299, %v1297
  %v1892 = vpack.c.b16 %v1300, %v1298
  %v1893 = vpack.c.b16 %v1303, %v1301
  %v1894 = vpack.c.b16 %v1304, %v1302
  %v1895 = vpack.c.b16 %v1307, %v1305
  %v1896 = vpack.c.b16 %v1308, %v1306
  %v1897 = vpack.c.b16 %v1311, %v1309
  %v1898 = vpack.c.b16 %v1312, %v1310
  %v1899 = vpack.c.b16 %v1315, %v1313
  %v1900 = vpack.c.b16 %v1316, %v1314
  %v1901 = vpack.c.b16 %v1319, %v1317
  %v1902 = vpack.c.b16 %v1320, %v1318
  %v1903 = vpack.c.b16 %v1323, %v1321
  %v1904 = vpack.c.b16 %v1324, %v1322
  %v1905 = vpack.c.b16 %v1327, %v1325
  %v1906 = vpack.c.b16 %v1328, %v1326
  %v1907 = vpack.c.b16 %v1331, %v1329
  %v1908 = vpack.c.b16 %v1332, %v1330
  %v1909 = vpack.c.b16 %v1335, %v1333
  %v1910 = vpack.c.b16 %v1336, %v1334
  %v1911 = vpack.c.b16 %v1339, %v1337
  %v1912 = vpack.c.b16 %v1340, %v1338
  %v1913 = vpack.c.b16 %v1343, %v1341
  %v1914 = vpack.c.b16 %v1344, %v1342
  %v1915 = vpack.c.b16 %v1347, %v1345
  %v1916 = vpack.c.b16 %v1348, %v1346
  %v1917 = vpack.c.b16 %v1351, %v1349
  %v1918 = vpack.c.b16 %v1352, %v1350
  %v1919 = vpack.c.b16 %v1355, %v1353
  %v1920 = vpack.c.b16 %v1356, %v1354
  %v1921 = vpack.c.b16 %v1359, %v1357
  %v1922 = vpack.c.b16 %v1360, %v1358
  %v1923 = vpack.c.b16 %v1363, %v1361
  %v1924 = vpack.c.b16 %v1364, %v1362
  %v1925 = vpack.c.b16 %v1367, %v1365
  %v1926 = vpack.c.b16 %v1368, %v1366
  %v1927 = vpack.c.b16 %v1371, %v1369
  %v1928 = vpack.c.b16 %v1372, %v1370
  %v1929 = vpack.c.b16 %v1375, %v1373
  %v1930 = vpack.c.b16 %v1376, %v1374
  %v1931 = vpack.c.b16 %v1379, %v1377
  %v1932 = vpack.c.b16 %v1380, %v1378
  %v1933 = vpack.c.b16 %v1383, %v1381
  %v1934 = vpack.c.b16 %v1384, %v1382
  %v1935 = vpack.c.b16 %v1387, %v1385
  %v1936 = vpack.c.b16 %v1388, %v1386
  %v1937 = vpack.c.b16 %v1391, %v1389
  %v1938 = vpack.c.b16 %v1392, %v1390
  %v1939 = vpack.c.b16 %v1395, %v1393
  %v1940 = vpack.c.b16 %v1396, %v1394
  %v1941 = vpack.c.b16 %v1399, %v1397
  %v1942 = vpack.c.b16 %v1400, %v1398
  %v1943 = vpack.c.b16 %v1403, %v1401
  %v1944 = vpack.c.b16 %v1404, %v1402
  %v1945 = vpack.c.b16 %v1407, %v1405
  %v1946 = vpack.c.b16 %v1408, %v1406
  %v1947 = vpack.c.b16 %v1411, %v1409
  %v1948 = vpack.c.b16 %v1412, %v1410
  %v1949 = vpack.c.b16 %v1415, %v1413
  %v1950 = vpack.c.b16 %v1416, %v1414
  %v1951 = vpack.c.b16 %v1419, %v1417
  %v1952 = vpack.c.b16 %v1420, %v1418
  %v1953 = vpack.c.b16 %v1423, %v1421
  %v1954 = vpack.c.b16 %v1424, %v1422
  %v1955 = vpack.c.b16 %v1427, %v1425
  %v1956 = vpack.c.b16 %v1428, %v1426
  %v1957 = vpack.c.b16 %v1431, %v1429
  %v1958 = vpack.c.b16 %v1432, %v1430
  %v1959 = vpack.c.b16 %v1435, %v1433
  %v1960 = vpack.c.b16 %v1436, %v1434
  %v1961 = vpack.c.b16 %v1439, %v1437
  %v1962 = vpack.c.b16 %v1440, %v1438
  %v1963 = vpack.c.b16 %v1443, %v1441
  %v1964 = vpack.c.b16 %v1444, %v1442
  %v1965 = vpack.c.b16 %v1447, %v1445
  %v1966 = vpack.c.b16 %v1448, %v1446
  %v1967 = vpack.c.b16 %v1451, %v1449
  %v1968 = vpack.c.b16 %v1452, %v1450
  %v1969 = vpack.c.b16 %v1455, %v1453
  %v1970 = vpack.c.b16 %v1456, %v1454
  %v1971 = vpack.c.b16 %v1459, %v1457
  %v1972 = vpack.c.b16 %v1460, %v1458
  %v1973 = vpack.c.b16 %v1463, %v1461
  %v1974 = vpack.c.b16 %v1464, %v1462
  %v1975 = vpack.c.b16 %v1467, %v1465
  %v1976 = vpack.c.b16 %v1468, %v1466
  %v1977 = vpack.c.b16 %v1471, %v1469
  %v1978 = vpack.c.b16 %v1472, %v1470
  %v1979 = vpack.c.b16 %v1475, %v1473
  %v1980 = vpack.c.b16 %v1476, %v1474
  %v1981 = vpack.c.b16 %v1479, %v1477
  %v1982 = vpack.c.b16 %v1480, %v1478
  %v1983 = vpack.c.b16 %v1483, %v1481
  %v1984 = vpack.c.b16 %v1484, %v1482
  %v1985 = vpack.c.b16 %v1487, %v1485
  %v1986 = vpack.c.b16 %v1488, %v1486
  %v1987 = vpack.c.b16 %v1491, %v1489
  %v1988 = vpack.c.b16 %v1492, %v1490
  %v1989 = vpack.c.b16 %v1495, %v1493
  %v1990 = vpack.c.b16 %v1496, %v1494
  %v1991 = vpack.c.b16 %v1499, %v1497
  %v1992 = vpack.c.b16 %v1500, %v1498
  %v1993 = vpack.c.b16 %v1503, %v1501
  %v1994 = vpack.c.b16 %v1504, %v1502
  %v1995 = vpack.c.b16 %v1507, %v1505
  %v1996 = vpack.c.b16 %v1508, %v1506
  %v1997 = vpack.c.b16 %v1511, %v1509
  %v1998 = vpack.c.b16 %v1512, %v1510
  %v1999 = vpack.c.b16 %v1515, %v1513
  %v2000 = vpack.c.b16 %v1516, %v1514
  %v2001 = vpack.c.b16 %v1519, %v1517
  %v2002 = vpack.c.b16 %v1520, %v1518
  %v2003 = vpack.c.b16 %v1523, %v1521
  %v2004 = vpack.c.b16 %v1524, %v1522
  %v2005 = vpack.c.b16 %v1527, %v1525
  %v2006 = vpack.c.b16 %v1528, %v1526
  %v2007 = vpack.c.b16 %v1531, %v1529
  %v2008 = vpack.c.b16 %v1532, %v1530
  %v2009 = vpack.c.b16 %v1535, %v1533
  %v2010 = vpack.c.b16 %v1536, %v1534
  %v2011 = vpack.c.b16 %v1539, %v1537
  %v2012 = vpack.c.b16 %v1540, %v1538
  %v2013 = vpack.c.b16 %v1543, %v1541
  %v2014 = vpack.c.b16 %v1544, %v1542
  %v2015 = vpack.c.b16 %v1547, %v1545
  %v2016 = vpack.c.b16 %v1548, %v1546
  %v2017 = vpack.c.b16 %v1551, %v1549
  %v2018 = vpack.c.b16 %v1552, %v1550
  %v2019 = vpack.c.b16 %v1555, %v1553
  %v2020 = vpack.c.b16 %v1556, %v1554
  %v2021 = vpack.c.b16 %v1559, %v1557
  %v2022 = vpack.c.b16 %v1560, %v1558
  %v2023 = vpack.c.b16 %v1563, %v1561
  %v2024 = vpack.c.b16 %v1564, %v1562
  %v2025 = vpack.c.b16 %v1567, %v1565
  %v2026 = vpack.c.b16 %v1568, %v1566
  %v2027 = vpack.c.b16 %v1571, %v1569
  %v2028 = vpack.c.b16 %v1572, %v1570
  %v2029 = vpack.c.b16 %v1575, %v1573
  %v2030 = vpack.c.b16 %v1576, %v1574
  %v2031 = vpack.c.b16 %v1579, %v1577
  %v2032 = vpack.c.b16 %v1580, %v1578
  %v2033 = vpack.c.b16 %v1583, %v1581
  %v2034 = vpack.c.b16 %v1584, %v1582
  %v2035 = vpack.c.b16 %v1587, %v1585
  %v2036 = vpack.c.b16 %v1588, %v1586
  %v2037 = vpack.c.b16 %v1591, %v1589
  %v2038 = vpack.c.b16 %v1592, %v1590
  %v2039 = vpack.c.b16 %v1595, %v1593
  %v2040 = vpack.c.b16 %v1596, %v1594
  %v2041 = vpack.c.b16 %v1599, %v1597
  %v2042 = vpack.c.b16 %v1600, %v1598
  %v2043 = vpack.c.b16 %v1603, %v1601
  %v2044 = vpack.c.b16 %v1604, %v1602
  %v2045 = vpack.c.b16 %v1607, %v1605
  %v2046 = vpack.c.b16 %v1608, %v1606
  %v2047 = vpack.c.b16 %v1611, %v1609
  %v2048 = vpack.c.b16 %v1612, %v1610
  %v2049 = vpack.c.b16 %v1615, %v1613
  %v2050 = vpack.c.b16 %v1616, %v1614
  %v2051 = vpack.c.b16 %v1619, %v1617
  %v2052 = vpack.c.b16 %v1620, %v1618
  %v2053 = vpack.c.b16 %v1623, %v1621
  %v2054 = vpack.c.b16 %v1624, %v1622
  %v2055 = vpack.c.b16 %v1627, %v1625
  %v2056 = vpack.c.b16 %v1628, %v1626
  %v2057 = vpack.c.b16 %v1631, %v1629
  %v2058 = vpack.c.b16 %v1632, %v1630
  %v2059 = vpack.c.b16 %v1635, %v1633
  %v2060 = vpack.c.b16 %v1636, %v1634
  %v2061 = vpack.c.b16 %v1639, %v1637
  %v2062 = vpack.c.b16 %v1640, %v1638
  %v2063 = vpack.c.b16 %v1643, %v1641
  %v2064 = vpack.c.b16 %v1644, %v1642
  %v2065 = vpack.c.b16 %v1647, %v1645
  %v2066 = vpack.c.b16 %v1648, %v1646
  %v2067 = vpack.c.b16 %v1651, %v1649
  %v2068 = vpack.c.b16 %v1652, %v1650
  %v2069 = vpack.c.b16 %v1655, %v1653
  %v2070 = vpack.c.b16 %v1656, %v1654
  %v2071 = vpack.c.b16 %v1659, %v1657
  %v2072 = vpack.c.b16 %v1660, %v1658
  %v2073 = vpack.c.b16 %v1663, %v1661
  %v2074 = vpack.c.b16 %v1664, %v1662
  %v2075 = vpack.c.b16 %v1667, %v1665
  %v2076 = vpack.c.b16 %v1668, %v1666
  %v2077 = vpack.c.b16 %v1671, %v1669
  %v2078 = vpack.c.b16 %v1672, %v1670
  %v2079 = vpack.c.b16 %v1675, %v1673
  %v2080 = vpack.c.b16 %v1676, %v1674
  %v2081 = vpack.c.b16 %v1679, %v1677
  %v2082 = vpack.c.b16 %v1680, %v1678
  %v2083 = vpack.c.b16 %v1683, %v1681
  %v2084 = vpack.c.b16 %v1684, %v1682
  %v2085 = vpack.c.b16 %v1687, %v1685
  %v2086 = vpack.c.b16 %v1688, %v1686
  %v2087 = vpack.c.b16 %v1691, %v1689
  %v2088 = vpack.c.b16 %v1692, %v1690
  %v2089 = vpack.c.b16 %v1695, %v1693
  %v2090 = vpack.c.b16 %v1696, %v1694
  %v2091 = vpack.c.b16 %v1699, %v1697
  %v2092 = vpack.c.b16 %v1700, %v1698
  %vm2485 = vcmask 523264
  %v2487 = vsel %vm2485, %v500, 0
  %2489 = vmatprep.subr.bf16.mxu0 %v1716
  %2490 = vmatpush1.bf16.msra.mxu0 %v1715
  %2491 = vmatprep.subr.bf16.mxu0 %v1714
  %2492 = vmatpush1.bf16.msra.mxu0 %v1713
  %2493 = vmatprep.subr.bf16.mxu0 %v1712
  %2494 = vmatpush1.bf16.msra.mxu0 %v1711
  %2495 = vmatprep.subr.bf16.mxu0 %v1710
  %2496 = vmatpush1.bf16.msra.mxu0 %v1709
  %2497 = vmatprep.subr.bf16.mxu0 %v1708
  %2498 = vmatpush1.bf16.msra.mxu0 %v1707
  %2499 = vmatprep.subr.bf16.mxu0 %v1706
  %2500 = vmatpush1.bf16.msra.mxu0 %v1705
  %2501 = vmatprep.subr.bf16.mxu0 %v1704
  %2502 = vmatpush1.bf16.msra.mxu0 %v1703
  %2503 = vmatprep.subr.bf16.mxu0 %v1702
  %2504 = vmatpush1.bf16.msra.mxu0 %v1701
  %2505 = vmatprep.subr.bf16.mxu0 %v1732
  %2506 = vmatpush2.bf16.msra.mxu0 %v1731
  %2507 = vmatprep.subr.bf16.mxu0 %v1730
  %2508 = vmatpush2.bf16.msra.mxu0 %v1729
  %2509 = vmatprep.subr.bf16.mxu0 %v1728
  %2510 = vmatpush2.bf16.msra.mxu0 %v1727
  %2511 = vmatprep.subr.bf16.mxu0 %v1726
  %2512 = vmatpush2.bf16.msra.mxu0 %v1725
  %2513 = vmatprep.subr.bf16.mxu0 %v1724
  %2514 = vmatpush2.bf16.msra.mxu0 %v1723
  %2515 = vmatprep.subr.bf16.mxu0 %v1722
  %2516 = vmatpush2.bf16.msra.mxu0 %v1721
  %2517 = vmatprep.subr.bf16.mxu0 %v1720
  %2518 = vmatpush2.bf16.msra.mxu0 %v1719
  %2519 = vmatprep.subr.bf16.mxu0 %v1718
  %2520 = vmatpush2.bf16.msra.mxu0 %v1717
  %2521 = vmatprep.mubr.bf16.mxu0 %v477
  %2522 = vmatmul.mubr.bf16.gmra.mxu0 %v476
  %v2523 = vpop.f32.mrf.mxu0
  %v2524 = vadd.f32 %v431, %v2523
  %v2525 = vpop.f32.mrf.mxu0
  %v2526 = vadd.f32 %v435, %v2525
  %v2527 = vpop.f32.mrf.mxu0
  %v2528 = vpop.f32.mrf.mxu0
  %2529 = vdwg.mxu0
  %2530 = vmatprep.subr.bf16.mxu0 %v1748
  %2531 = vmatpush1.bf16.msra.mxu0 %v1747
  %2532 = vmatprep.subr.bf16.mxu0 %v1746
  %2533 = vmatpush1.bf16.msra.mxu0 %v1745
  %2534 = vmatprep.subr.bf16.mxu0 %v1744
  %2535 = vmatpush1.bf16.msra.mxu0 %v1743
  %2536 = vmatprep.subr.bf16.mxu0 %v1742
  %2537 = vmatpush1.bf16.msra.mxu0 %v1741
  %2538 = vmatprep.subr.bf16.mxu0 %v1740
  %2539 = vmatpush1.bf16.msra.mxu0 %v1739
  %2540 = vmatprep.subr.bf16.mxu0 %v1738
  %2541 = vmatpush1.bf16.msra.mxu0 %v1737
  %2542 = vmatprep.subr.bf16.mxu0 %v1736
  %2543 = vmatpush1.bf16.msra.mxu0 %v1735
  %2544 = vmatprep.subr.bf16.mxu0 %v1734
  %2545 = vmatpush1.bf16.msra.mxu0 %v1733
  %2546 = vmatprep.subr.bf16.mxu0 %v1764
  %2547 = vmatpush2.bf16.msra.mxu0 %v1763
  %2548 = vmatprep.subr.bf16.mxu0 %v1762
  %2549 = vmatpush2.bf16.msra.mxu0 %v1761
  %2550 = vmatprep.subr.bf16.mxu0 %v1760
  %2551 = vmatpush2.bf16.msra.mxu0 %v1759
  %2552 = vmatprep.subr.bf16.mxu0 %v1758
  %2553 = vmatpush2.bf16.msra.mxu0 %v1757
  %2554 = vmatprep.subr.bf16.mxu0 %v1756
  %2555 = vmatpush2.bf16.msra.mxu0 %v1755
  %2556 = vmatprep.subr.bf16.mxu0 %v1754
  %2557 = vmatpush2.bf16.msra.mxu0 %v1753
  %2558 = vmatprep.subr.bf16.mxu0 %v1752
  %2559 = vmatpush2.bf16.msra.mxu0 %v1751
  %2560 = vmatprep.subr.bf16.mxu0 %v1750
  %2561 = vmatpush2.bf16.msra.mxu0 %v1749
  %2562 = vmatprep.mubr.bf16.mxu0 %v479
  %2563 = vmatmul.mubr.bf16.gmra.mxu0 %v478
  %v2564 = vpop.f32.mrf.mxu0
  %v2565 = vadd.f32 %v2524, %v2564
  %v2566 = vpop.f32.mrf.mxu0
  %v2567 = vadd.f32 %v2526, %v2566
  %v2568 = vpop.f32.mrf.mxu0
  %v2569 = vpop.f32.mrf.mxu0
  %2570 = vdwg.mxu0
  %2571 = vmatprep.subr.bf16.mxu0 %v1780
  %2572 = vmatpush1.bf16.msra.mxu0 %v1779
  %2573 = vmatprep.subr.bf16.mxu0 %v1778
  %2574 = vmatpush1.bf16.msra.mxu0 %v1777
  %2575 = vmatprep.subr.bf16.mxu0 %v1776
  %2576 = vmatpush1.bf16.msra.mxu0 %v1775
  %2577 = vmatprep.subr.bf16.mxu0 %v1774
  %2578 = vmatpush1.bf16.msra.mxu0 %v1773
  %2579 = vmatprep.subr.bf16.mxu0 %v1772
  %2580 = vmatpush1.bf16.msra.mxu0 %v1771
  %2581 = vmatprep.subr.bf16.mxu0 %v1770
  %2582 = vmatpush1.bf16.msra.mxu0 %v1769
  %2583 = vmatprep.subr.bf16.mxu0 %v1768
  %2584 = vmatpush1.bf16.msra.mxu0 %v1767
  %2585 = vmatprep.subr.bf16.mxu0 %v1766
  %2586 = vmatpush1.bf16.msra.mxu0 %v1765
  %2587 = vmatprep.subr.bf16.mxu0 %v1796
  %2588 = vmatpush2.bf16.msra.mxu0 %v1795
  %2589 = vmatprep.subr.bf16.mxu0 %v1794
  %2590 = vmatpush2.bf16.msra.mxu0 %v1793
  %2591 = vmatprep.subr.bf16.mxu0 %v1792
  %2592 = vmatpush2.bf16.msra.mxu0 %v1791
  %2593 = vmatprep.subr.bf16.mxu0 %v1790
  %2594 = vmatpush2.bf16.msra.mxu0 %v1789
  %2595 = vmatprep.subr.bf16.mxu0 %v1788
  %2596 = vmatpush2.bf16.msra.mxu0 %v1787
  %2597 = vmatprep.subr.bf16.mxu0 %v1786
  %2598 = vmatpush2.bf16.msra.mxu0 %v1785
  %2599 = vmatprep.subr.bf16.mxu0 %v1784
  %2600 = vmatpush2.bf16.msra.mxu0 %v1783
  %2601 = vmatprep.subr.bf16.mxu0 %v1782
  %2602 = vmatpush2.bf16.msra.mxu0 %v1781
  %2603 = vmatprep.mubr.bf16.mxu0 %v481
  %2604 = vmatmul.mubr.bf16.gmra.mxu0 %v480
  %v2605 = vpop.f32.mrf.mxu0
  %v2606 = vadd.f32 %v2565, %v2605
  %v2607 = vpop.f32.mrf.mxu0
  %v2608 = vadd.f32 %v2567, %v2607
  %v2609 = vpop.f32.mrf.mxu0
  %v2610 = vpop.f32.mrf.mxu0
  %2611 = vdwg.mxu0
  %2612 = vmatprep.subr.bf16.mxu0 %v1812
  %2613 = vmatpush1.bf16.msra.mxu0 %v1811
  %2614 = vmatprep.subr.bf16.mxu0 %v1810
  %2615 = vmatpush1.bf16.msra.mxu0 %v1809
  %2616 = vmatprep.subr.bf16.mxu0 %v1808
  %2617 = vmatpush1.bf16.msra.mxu0 %v1807
  %2618 = vmatprep.subr.bf16.mxu0 %v1806
  %2619 = vmatpush1.bf16.msra.mxu0 %v1805
  %2620 = vmatprep.subr.bf16.mxu0 %v1804
  %2621 = vmatpush1.bf16.msra.mxu0 %v1803
  %2622 = vmatprep.subr.bf16.mxu0 %v1802
  %2623 = vmatpush1.bf16.msra.mxu0 %v1801
  %2624 = vmatprep.subr.bf16.mxu0 %v1800
  %2625 = vmatpush1.bf16.msra.mxu0 %v1799
  %2626 = vmatprep.subr.bf16.mxu0 %v1798
  %2627 = vmatpush1.bf16.msra.mxu0 %v1797
  %2628 = vmatprep.subr.bf16.mxu0 %v1828
  %2629 = vmatpush2.bf16.msra.mxu0 %v1827
  %2630 = vmatprep.subr.bf16.mxu0 %v1826
  %2631 = vmatpush2.bf16.msra.mxu0 %v1825
  %2632 = vmatprep.subr.bf16.mxu0 %v1824
  %2633 = vmatpush2.bf16.msra.mxu0 %v1823
  %2634 = vmatprep.subr.bf16.mxu0 %v1822
  %2635 = vmatpush2.bf16.msra.mxu0 %v1821
  %2636 = vmatprep.subr.bf16.mxu0 %v1820
  %2637 = vmatpush2.bf16.msra.mxu0 %v1819
  %2638 = vmatprep.subr.bf16.mxu0 %v1818
  %2639 = vmatpush2.bf16.msra.mxu0 %v1817
  %2640 = vmatprep.subr.bf16.mxu0 %v1816
  %2641 = vmatpush2.bf16.msra.mxu0 %v1815
  %2642 = vmatprep.subr.bf16.mxu0 %v1814
  %2643 = vmatpush2.bf16.msra.mxu0 %v1813
  %2644 = vmatprep.mubr.bf16.mxu0 %v483
  %2645 = vmatmul.mubr.bf16.gmra.mxu0 %v482
  %v2646 = vpop.f32.mrf.mxu0
  %v2647 = vadd.f32 %v2606, %v2646
  %v2648 = vpop.f32.mrf.mxu0
  %v2649 = vadd.f32 %v2608, %v2648
  %v2650 = vpop.f32.mrf.mxu0
  %v2651 = vpop.f32.mrf.mxu0
  %2652 = vdwg.mxu0
  %2653 = vmatprep.subr.bf16.mxu0 %v1844
  %2654 = vmatpush1.bf16.msra.mxu0 %v1843
  %2655 = vmatprep.subr.bf16.mxu0 %v1842
  %2656 = vmatpush1.bf16.msra.mxu0 %v1841
  %2657 = vmatprep.subr.bf16.mxu0 %v1840
  %2658 = vmatpush1.bf16.msra.mxu0 %v1839
  %2659 = vmatprep.subr.bf16.mxu0 %v1838
  %2660 = vmatpush1.bf16.msra.mxu0 %v1837
  %2661 = vmatprep.subr.bf16.mxu0 %v1836
  %2662 = vmatpush1.bf16.msra.mxu0 %v1835
  %2663 = vmatprep.subr.bf16.mxu0 %v1834
  %2664 = vmatpush1.bf16.msra.mxu0 %v1833
  %2665 = vmatprep.subr.bf16.mxu0 %v1832
  %2666 = vmatpush1.bf16.msra.mxu0 %v1831
  %2667 = vmatprep.subr.bf16.mxu0 %v1830
  %2668 = vmatpush1.bf16.msra.mxu0 %v1829
  %2669 = vmatprep.subr.bf16.mxu0 %v1860
  %2670 = vmatpush2.bf16.msra.mxu0 %v1859
  %2671 = vmatprep.subr.bf16.mxu0 %v1858
  %2672 = vmatpush2.bf16.msra.mxu0 %v1857
  %2673 = vmatprep.subr.bf16.mxu0 %v1856
  %2674 = vmatpush2.bf16.msra.mxu0 %v1855
  %2675 = vmatprep.subr.bf16.mxu0 %v1854
  %2676 = vmatpush2.bf16.msra.mxu0 %v1853
  %2677 = vmatprep.subr.bf16.mxu0 %v1852
  %2678 = vmatpush2.bf16.msra.mxu0 %v1851
  %2679 = vmatprep.subr.bf16.mxu0 %v1850
  %2680 = vmatpush2.bf16.msra.mxu0 %v1849
  %2681 = vmatprep.subr.bf16.mxu0 %v1848
  %2682 = vmatpush2.bf16.msra.mxu0 %v1847
  %2683 = vmatprep.subr.bf16.mxu0 %v1846
  %2684 = vmatpush2.bf16.msra.mxu0 %v1845
  %2685 = vmatprep.mubr.bf16.mxu0 %v485
  %2686 = vmatmul.mubr.bf16.gmra.mxu0 %v484
  %v2687 = vpop.f32.mrf.mxu0
  %v2688 = vadd.f32 %v2647, %v2687
  %v2689 = vpop.f32.mrf.mxu0
  %v2690 = vadd.f32 %v2649, %v2689
  %v2691 = vpop.f32.mrf.mxu0
  %v2692 = vpop.f32.mrf.mxu0
  %2693 = vdwg.mxu0
  %2694 = vmatprep.subr.bf16.mxu0 %v1876
  %2695 = vmatpush1.bf16.msra.mxu0 %v1875
  %2696 = vmatprep.subr.bf16.mxu0 %v1874
  %2697 = vmatpush1.bf16.msra.mxu0 %v1873
  %2698 = vmatprep.subr.bf16.mxu0 %v1872
  %2699 = vmatpush1.bf16.msra.mxu0 %v1871
  %2700 = vmatprep.subr.bf16.mxu0 %v1870
  %2701 = vmatpush1.bf16.msra.mxu0 %v1869
  %2702 = vmatprep.subr.bf16.mxu0 %v1868
  %2703 = vmatpush1.bf16.msra.mxu0 %v1867
  %2704 = vmatprep.subr.bf16.mxu0 %v1866
  %2705 = vmatpush1.bf16.msra.mxu0 %v1865
  %2706 = vmatprep.subr.bf16.mxu0 %v1864
  %2707 = vmatpush1.bf16.msra.mxu0 %v1863
  %2708 = vmatprep.subr.bf16.mxu0 %v1862
  %2709 = vmatpush1.bf16.msra.mxu0 %v1861
  %2710 = vmatprep.subr.bf16.mxu0 %v1892
  %2711 = vmatpush2.bf16.msra.mxu0 %v1891
  %2712 = vmatprep.subr.bf16.mxu0 %v1890
  %2713 = vmatpush2.bf16.msra.mxu0 %v1889
  %2714 = vmatprep.subr.bf16.mxu0 %v1888
  %2715 = vmatpush2.bf16.msra.mxu0 %v1887
  %2716 = vmatprep.subr.bf16.mxu0 %v1886
  %2717 = vmatpush2.bf16.msra.mxu0 %v1885
  %2718 = vmatprep.subr.bf16.mxu0 %v1884
  %2719 = vmatpush2.bf16.msra.mxu0 %v1883
  %2720 = vmatprep.subr.bf16.mxu0 %v1882
  %2721 = vmatpush2.bf16.msra.mxu0 %v1881
  %2722 = vmatprep.subr.bf16.mxu0 %v1880
  %2723 = vmatpush2.bf16.msra.mxu0 %v1879
  %2724 = vmatprep.subr.bf16.mxu0 %v1878
  %2725 = vmatpush2.bf16.msra.mxu0 %v1877
  %2726 = vmatprep.mubr.bf16.mxu0 %v487
  %2727 = vmatmul.mubr.bf16.gmra.mxu0 %v486
  %v2728 = vpop.f32.mrf.mxu0
  %v2729 = vadd.f32 %v2688, %v2728
  %v2730 = vpop.f32.mrf.mxu0
  %v2731 = vadd.f32 %v2690, %v2730
  %v2732 = vpop.f32.mrf.mxu0
  %v2733 = vpop.f32.mrf.mxu0
  %2734 = vdwg.mxu0
  %2735 = vmatprep.subr.bf16.mxu0 %v1908
  %2736 = vmatpush1.bf16.msra.mxu0 %v1907
  %2737 = vmatprep.subr.bf16.mxu0 %v1906
  %2738 = vmatpush1.bf16.msra.mxu0 %v1905
  %2739 = vmatprep.subr.bf16.mxu0 %v1904
  %2740 = vmatpush1.bf16.msra.mxu0 %v1903
  %2741 = vmatprep.subr.bf16.mxu0 %v1902
  %2742 = vmatpush1.bf16.msra.mxu0 %v1901
  %2743 = vmatprep.subr.bf16.mxu0 %v1900
  %2744 = vmatpush1.bf16.msra.mxu0 %v1899
  %2745 = vmatprep.subr.bf16.mxu0 %v1898
  %2746 = vmatpush1.bf16.msra.mxu0 %v1897
  %2747 = vmatprep.subr.bf16.mxu0 %v1896
  %2748 = vmatpush1.bf16.msra.mxu0 %v1895
  %2749 = vmatprep.subr.bf16.mxu0 %v1894
  %2750 = vmatpush1.bf16.msra.mxu0 %v1893
  %2751 = vmatprep.subr.bf16.mxu0 %v1924
  %2752 = vmatpush2.bf16.msra.mxu0 %v1923
  %2753 = vmatprep.subr.bf16.mxu0 %v1922
  %2754 = vmatpush2.bf16.msra.mxu0 %v1921
  %2755 = vmatprep.subr.bf16.mxu0 %v1920
  %2756 = vmatpush2.bf16.msra.mxu0 %v1919
  %2757 = vmatprep.subr.bf16.mxu0 %v1918
  %2758 = vmatpush2.bf16.msra.mxu0 %v1917
  %2759 = vmatprep.subr.bf16.mxu0 %v1916
  %2760 = vmatpush2.bf16.msra.mxu0 %v1915
  %2761 = vmatprep.subr.bf16.mxu0 %v1914
  %2762 = vmatpush2.bf16.msra.mxu0 %v1913
  %2763 = vmatprep.subr.bf16.mxu0 %v1912
  %2764 = vmatpush2.bf16.msra.mxu0 %v1911
  %2765 = vmatprep.subr.bf16.mxu0 %v1910
  %2766 = vmatpush2.bf16.msra.mxu0 %v1909
  %2767 = vmatprep.mubr.bf16.mxu0 %v489
  %2768 = vmatmul.mubr.bf16.gmra.mxu0 %v488
  %v2769 = vpop.f32.mrf.mxu0
  %v2770 = vadd.f32 %v2729, %v2769
  %v2771 = vpop.f32.mrf.mxu0
  %v2772 = vadd.f32 %v2731, %v2771
  %v2773 = vpop.f32.mrf.mxu0
  %v2774 = vpop.f32.mrf.mxu0
  %2775 = vdwg.mxu0
  %2776 = vmatprep.subr.bf16.mxu0 %v1940
  %2777 = vmatpush1.bf16.msra.mxu0 %v1939
  %2778 = vmatprep.subr.bf16.mxu0 %v1938
  %2779 = vmatpush1.bf16.msra.mxu0 %v1937
  %2780 = vmatprep.subr.bf16.mxu0 %v1936
  %2781 = vmatpush1.bf16.msra.mxu0 %v1935
  %2782 = vmatprep.subr.bf16.mxu0 %v1934
  %2783 = vmatpush1.bf16.msra.mxu0 %v1933
  %2784 = vmatprep.subr.bf16.mxu0 %v1932
  %2785 = vmatpush1.bf16.msra.mxu0 %v1931
  %2786 = vmatprep.subr.bf16.mxu0 %v1930
  %2787 = vmatpush1.bf16.msra.mxu0 %v1929
  %2788 = vmatprep.subr.bf16.mxu0 %v1928
  %2789 = vmatpush1.bf16.msra.mxu0 %v1927
  %2790 = vmatprep.subr.bf16.mxu0 %v1926
  %2791 = vmatpush1.bf16.msra.mxu0 %v1925
  %2792 = vmatprep.subr.bf16.mxu0 %v1956
  %2793 = vmatpush2.bf16.msra.mxu0 %v1955
  %2794 = vmatprep.subr.bf16.mxu0 %v1954
  %2795 = vmatpush2.bf16.msra.mxu0 %v1953
  %2796 = vmatprep.subr.bf16.mxu0 %v1952
  %2797 = vmatpush2.bf16.msra.mxu0 %v1951
  %2798 = vmatprep.subr.bf16.mxu0 %v1950
  %2799 = vmatpush2.bf16.msra.mxu0 %v1949
  %2800 = vmatprep.subr.bf16.mxu0 %v1948
  %2801 = vmatpush2.bf16.msra.mxu0 %v1947
  %2802 = vmatprep.subr.bf16.mxu0 %v1946
  %2803 = vmatpush2.bf16.msra.mxu0 %v1945
  %2804 = vmatprep.subr.bf16.mxu0 %v1944
  %2805 = vmatpush2.bf16.msra.mxu0 %v1943
  %2806 = vmatprep.subr.bf16.mxu0 %v1942
  %2807 = vmatpush2.bf16.msra.mxu0 %v1941
  %2808 = vmatprep.mubr.bf16.mxu0 %v491
  %2809 = vmatmul.mubr.bf16.gmra.mxu0 %v490
  %v2810 = vpop.f32.mrf.mxu0
  %v2811 = vadd.f32 %v2770, %v2810
  %v2812 = vpop.f32.mrf.mxu0
  %v2813 = vadd.f32 %v2772, %v2812
  %v2814 = vpop.f32.mrf.mxu0
  %v2815 = vpop.f32.mrf.mxu0
  %2816 = vdwg.mxu0
  %2817 = vmatprep.subr.bf16.mxu0 %v1972
  %2818 = vmatpush1.bf16.msra.mxu0 %v1971
  %2819 = vmatprep.subr.bf16.mxu0 %v1970
  %2820 = vmatpush1.bf16.msra.mxu0 %v1969
  %2821 = vmatprep.subr.bf16.mxu0 %v1968
  %2822 = vmatpush1.bf16.msra.mxu0 %v1967
  %2823 = vmatprep.subr.bf16.mxu0 %v1966
  %2824 = vmatpush1.bf16.msra.mxu0 %v1965
  %2825 = vmatprep.subr.bf16.mxu0 %v1964
  %2826 = vmatpush1.bf16.msra.mxu0 %v1963
  %2827 = vmatprep.subr.bf16.mxu0 %v1962
  %2828 = vmatpush1.bf16.msra.mxu0 %v1961
  %2829 = vmatprep.subr.bf16.mxu0 %v1960
  %2830 = vmatpush1.bf16.msra.mxu0 %v1959
  %2831 = vmatprep.subr.bf16.mxu0 %v1958
  %2832 = vmatpush1.bf16.msra.mxu0 %v1957
  %2833 = vmatprep.subr.bf16.mxu0 %v1988
  %2834 = vmatpush2.bf16.msra.mxu0 %v1987
  %2835 = vmatprep.subr.bf16.mxu0 %v1986
  %2836 = vmatpush2.bf16.msra.mxu0 %v1985
  %2837 = vmatprep.subr.bf16.mxu0 %v1984
  %2838 = vmatpush2.bf16.msra.mxu0 %v1983
  %2839 = vmatprep.subr.bf16.mxu0 %v1982
  %2840 = vmatpush2.bf16.msra.mxu0 %v1981
  %2841 = vmatprep.subr.bf16.mxu0 %v1980
  %2842 = vmatpush2.bf16.msra.mxu0 %v1979
  %2843 = vmatprep.subr.bf16.mxu0 %v1978
  %2844 = vmatpush2.bf16.msra.mxu0 %v1977
  %2845 = vmatprep.subr.bf16.mxu0 %v1976
  %2846 = vmatpush2.bf16.msra.mxu0 %v1975
  %2847 = vmatprep.subr.bf16.mxu0 %v1974
  %2848 = vmatpush2.bf16.msra.mxu0 %v1973
  %2849 = vmatprep.mubr.bf16.mxu0 %v493
  %2850 = vmatmul.mubr.bf16.gmra.mxu0 %v492
  %v2851 = vpop.f32.mrf.mxu0
  %v2852 = vadd.f32 %v2811, %v2851
  %v2853 = vpop.f32.mrf.mxu0
  %v2854 = vadd.f32 %v2813, %v2853
  %v2855 = vpop.f32.mrf.mxu0
  %v2856 = vpop.f32.mrf.mxu0
  %2857 = vdwg.mxu0
  %2858 = vmatprep.subr.bf16.mxu0 %v2004
  %2859 = vmatpush1.bf16.msra.mxu0 %v2003
  %2860 = vmatprep.subr.bf16.mxu0 %v2002
  %2861 = vmatpush1.bf16.msra.mxu0 %v2001
  %2862 = vmatprep.subr.bf16.mxu0 %v2000
  %2863 = vmatpush1.bf16.msra.mxu0 %v1999
  %2864 = vmatprep.subr.bf16.mxu0 %v1998
  %2865 = vmatpush1.bf16.msra.mxu0 %v1997
  %2866 = vmatprep.subr.bf16.mxu0 %v1996
  %2867 = vmatpush1.bf16.msra.mxu0 %v1995
  %2868 = vmatprep.subr.bf16.mxu0 %v1994
  %2869 = vmatpush1.bf16.msra.mxu0 %v1993
  %2870 = vmatprep.subr.bf16.mxu0 %v1992
  %2871 = vmatpush1.bf16.msra.mxu0 %v1991
  %2872 = vmatprep.subr.bf16.mxu0 %v1990
  %2873 = vmatpush1.bf16.msra.mxu0 %v1989
  %2874 = vmatprep.subr.bf16.mxu0 %v2020
  %2875 = vmatpush2.bf16.msra.mxu0 %v2019
  %2876 = vmatprep.subr.bf16.mxu0 %v2018
  %2877 = vmatpush2.bf16.msra.mxu0 %v2017
  %2878 = vmatprep.subr.bf16.mxu0 %v2016
  %2879 = vmatpush2.bf16.msra.mxu0 %v2015
  %2880 = vmatprep.subr.bf16.mxu0 %v2014
  %2881 = vmatpush2.bf16.msra.mxu0 %v2013
  %2882 = vmatprep.subr.bf16.mxu0 %v2012
  %2883 = vmatpush2.bf16.msra.mxu0 %v2011
  %2884 = vmatprep.subr.bf16.mxu0 %v2010
  %2885 = vmatpush2.bf16.msra.mxu0 %v2009
  %2886 = vmatprep.subr.bf16.mxu0 %v2008
  %2887 = vmatpush2.bf16.msra.mxu0 %v2007
  %2888 = vmatprep.subr.bf16.mxu0 %v2006
  %2889 = vmatpush2.bf16.msra.mxu0 %v2005
  %2890 = vmatprep.mubr.bf16.mxu0 %v495
  %2891 = vmatmul.mubr.bf16.gmra.mxu0 %v494
  %v2892 = vpop.f32.mrf.mxu0
  %v2893 = vadd.f32 %v2852, %v2892
  %v2894 = vpop.f32.mrf.mxu0
  %v2895 = vadd.f32 %v2854, %v2894
  %v2896 = vpop.f32.mrf.mxu0
  %v2897 = vpop.f32.mrf.mxu0
  %2898 = vdwg.mxu0
  %2899 = vmatprep.subr.bf16.mxu0 %v2036
  %2900 = vmatpush1.bf16.msra.mxu0 %v2035
  %2901 = vmatprep.subr.bf16.mxu0 %v2034
  %2902 = vmatpush1.bf16.msra.mxu0 %v2033
  %2903 = vmatprep.subr.bf16.mxu0 %v2032
  %2904 = vmatpush1.bf16.msra.mxu0 %v2031
  %2905 = vmatprep.subr.bf16.mxu0 %v2030
  %2906 = vmatpush1.bf16.msra.mxu0 %v2029
  %2907 = vmatprep.subr.bf16.mxu0 %v2028
  %2908 = vmatpush1.bf16.msra.mxu0 %v2027
  %2909 = vmatprep.subr.bf16.mxu0 %v2026
  %2910 = vmatpush1.bf16.msra.mxu0 %v2025
  %2911 = vmatprep.subr.bf16.mxu0 %v2024
  %2912 = vmatpush1.bf16.msra.mxu0 %v2023
  %2913 = vmatprep.subr.bf16.mxu0 %v2022
  %2914 = vmatpush1.bf16.msra.mxu0 %v2021
  %2915 = vmatprep.subr.bf16.mxu0 %v2052
  %2916 = vmatpush2.bf16.msra.mxu0 %v2051
  %2917 = vmatprep.subr.bf16.mxu0 %v2050
  %2918 = vmatpush2.bf16.msra.mxu0 %v2049
  %2919 = vmatprep.subr.bf16.mxu0 %v2048
  %2920 = vmatpush2.bf16.msra.mxu0 %v2047
  %2921 = vmatprep.subr.bf16.mxu0 %v2046
  %2922 = vmatpush2.bf16.msra.mxu0 %v2045
  %2923 = vmatprep.subr.bf16.mxu0 %v2044
  %2924 = vmatpush2.bf16.msra.mxu0 %v2043
  %2925 = vmatprep.subr.bf16.mxu0 %v2042
  %2926 = vmatpush2.bf16.msra.mxu0 %v2041
  %2927 = vmatprep.subr.bf16.mxu0 %v2040
  %2928 = vmatpush2.bf16.msra.mxu0 %v2039
  %2929 = vmatprep.subr.bf16.mxu0 %v2038
  %2930 = vmatpush2.bf16.msra.mxu0 %v2037
  %2931 = vmatprep.mubr.bf16.mxu0 %v497
  %2932 = vmatmul.mubr.bf16.gmra.mxu0 %v496
  %v2933 = vpop.f32.mrf.mxu0
  %v2934 = vadd.f32 %v2893, %v2933
  %v2935 = vpop.f32.mrf.mxu0
  %v2936 = vadd.f32 %v2895, %v2935
  %v2937 = vpop.f32.mrf.mxu0
  %v2938 = vpop.f32.mrf.mxu0
  %2939 = vdwg.mxu0
  %2940 = vmatprep.subr.bf16.mxu0 %v2068
  %2941 = vmatpush1.bf16.msra.mxu0 %v2067
  %2942 = vmatprep.subr.bf16.mxu0 %v2066
  %2943 = vmatpush1.bf16.msra.mxu0 %v2065
  %2944 = vmatprep.subr.bf16.mxu0 %v2064
  %2945 = vmatpush1.bf16.msra.mxu0 %v2063
  %2946 = vmatprep.subr.bf16.mxu0 %v2062
  %2947 = vmatpush1.bf16.msra.mxu0 %v2061
  %2948 = vmatprep.subr.bf16.mxu0 %v2060
  %2949 = vmatpush1.bf16.msra.mxu0 %v2059
  %2950 = vmatprep.subr.bf16.mxu0 %v2058
  %2951 = vmatpush1.bf16.msra.mxu0 %v2057
  %2952 = vmatprep.subr.bf16.mxu0 %v2056
  %2953 = vmatpush1.bf16.msra.mxu0 %v2055
  %2954 = vmatprep.subr.bf16.mxu0 %v2054
  %2955 = vmatpush1.bf16.msra.mxu0 %v2053
  %2956 = vmatprep.subr.bf16.mxu0 %v2084
  %2957 = vmatpush2.bf16.msra.mxu0 %v2083
  %2958 = vmatprep.subr.bf16.mxu0 %v2082
  %2959 = vmatpush2.bf16.msra.mxu0 %v2081
  %2960 = vmatprep.subr.bf16.mxu0 %v2080
  %2961 = vmatpush2.bf16.msra.mxu0 %v2079
  %2962 = vmatprep.subr.bf16.mxu0 %v2078
  %2963 = vmatpush2.bf16.msra.mxu0 %v2077
  %2964 = vmatprep.subr.bf16.mxu0 %v2076
  %2965 = vmatpush2.bf16.msra.mxu0 %v2075
  %2966 = vmatprep.subr.bf16.mxu0 %v2074
  %2967 = vmatpush2.bf16.msra.mxu0 %v2073
  %2968 = vmatprep.subr.bf16.mxu0 %v2072
  %2969 = vmatpush2.bf16.msra.mxu0 %v2071
  %2970 = vmatprep.subr.bf16.mxu0 %v2070
  %2971 = vmatpush2.bf16.msra.mxu0 %v2069
  %2972 = vmatprep.mubr.bf16.mxu0 %v499
  %2973 = vmatmul.mubr.bf16.gmra.mxu0 %v498
  %v2974 = vpop.f32.mrf.mxu0
  %v2975 = vadd.f32 %v2934, %v2974
  %v2976 = vpop.f32.mrf.mxu0
  %v2977 = vadd.f32 %v2936, %v2976
  %v2978 = vpop.f32.mrf.mxu0
  %v2979 = vpop.f32.mrf.mxu0
  %2980 = vdwg.mxu0
  %2981 = vmatprep.subr.bf16.mxu0 0
  %2982 = vmatpush1.bf16.msra.mxu0 0
  %2983 = vmatprep.subr.bf16.mxu0 0
  %2984 = vmatpush1.bf16.msra.mxu0 0
  %2985 = vmatprep.subr.bf16.mxu0 0
  %2986 = vmatpush1.bf16.msra.mxu0 0
  %2987 = vmatprep.subr.bf16.mxu0 0
  %2988 = vmatpush1.bf16.msra.mxu0 0
  %2989 = vmatprep.subr.bf16.mxu0 %v2092
  %2990 = vmatpush1.bf16.msra.mxu0 %v2091
  %2991 = vmatprep.subr.bf16.mxu0 %v2090
  %2992 = vmatpush1.bf16.msra.mxu0 %v2089
  %2993 = vmatprep.subr.bf16.mxu0 %v2088
  %2994 = vmatpush1.bf16.msra.mxu0 %v2087
  %2995 = vmatprep.subr.bf16.mxu0 %v2086
  %2996 = vmatpush1.bf16.msra.mxu0 %v2085
  %2997 = vmatprep.subr.bf16.mxu0 0
  %2998 = vmatpush2.bf16.msra.mxu0 0
  %2999 = vmatprep.subr.bf16.mxu0 0
  %3000 = vmatpush2.bf16.msra.mxu0 0
  %3001 = vmatprep.subr.bf16.mxu0 0
  %3002 = vmatpush2.bf16.msra.mxu0 0
  %3003 = vmatprep.subr.bf16.mxu0 0
  %3004 = vmatpush2.bf16.msra.mxu0 0
  %3005 = vmatprep.subr.bf16.mxu0 0
  %3006 = vmatpush2.bf16.msra.mxu0 0
  %3007 = vmatprep.subr.bf16.mxu0 0
  %3008 = vmatpush2.bf16.msra.mxu0 0
  %3009 = vmatprep.subr.bf16.mxu0 0
  %3010 = vmatpush2.bf16.msra.mxu0 0
  %3011 = vmatprep.subr.bf16.mxu0 0
  %3012 = vmatpush2.bf16.msra.mxu0 0
  %3013 = vmatprep.mubr.bf16.mxu0 0
  %3014 = vmatmul.mubr.bf16.gmra.mxu0 %v2487
  %v3015 = vpop.f32.mrf.mxu0
  %v3016 = vadd.f32 %v2975, %v3015
  %v3017 = vpop.f32.mrf.mxu0
  %v3018 = vadd.f32 %v2977, %v3017
  %v3019 = vpop.f32.mrf.mxu0
  %v3020 = vpop.f32.mrf.mxu0
  %3021 = vdwg.mxu0
  %v3022 = vmax.f32 %v3016, 0.0
  %v3023 = vmax.f32 %v3018, 0.0
  %v3024 = vpack.c.bf16 %v3022, %v3022
  %v3025 = vpack.c.bf16 %v3023, %v3023
  %v3026 = vld [vmem:[%s3] sm:$0xf]
  %v3027 = vld [vmem:[%s3 + $0x4] sm:$0xf]
  %v3028 = vld [vmem:[%s3 + $0x8] sm:$0xf]
  %v3029 = vld [vmem:[%s3 + $0xc] sm:$0xf]
  %v3030 = vld [vmem:[%s3 + $0x10] sm:$0xf]
  %v3031 = vld [vmem:[%s3 + $0x14] sm:$0xf]
  %v3032 = vld [vmem:[%s3 + $0x18] sm:$0xf]
  %v3033 = vld [vmem:[%s3 + $0x1c] sm:$0xf]
  %v3034 = vld [vmem:[%s3 + $0x20] sm:$0xf]
  %v3035 = vld [vmem:[%s3 + $0x24] sm:$0xf]
  %v3036 = vld [vmem:[%s3 + $0x28] sm:$0xf]
  %v3037 = vld [vmem:[%s3 + $0x2c] sm:$0xf]
  %v3038 = vld [vmem:[%s3 + $0x30] sm:$0xf]
  %v3039 = vld [vmem:[%s3 + $0x34] sm:$0xf]
  %v3040 = vld [vmem:[%s3 + $0x38] sm:$0xf]
  %v3041 = vld [vmem:[%s3 + $0x3c] sm:$0xf]
  %v3042 = vld [vmem:[%s3 + $0x40] sm:$0xf]
  %v3043 = vld [vmem:[%s3 + $0x44] sm:$0xf]
  %v3044 = vld [vmem:[%s3 + $0x48] sm:$0xf]
  %v3045 = vld [vmem:[%s3 + $0x4c] sm:$0xf]
  %v3046 = vld [vmem:[%s3 + $0x50] sm:$0xf]
  %v3047 = vld [vmem:[%s3 + $0x54] sm:$0xf]
  %v3048 = vld [vmem:[%s3 + $0x58] sm:$0xf]
  %v3049 = vld [vmem:[%s3 + $0x5c] sm:$0xf]
  %v3050 = vld [vmem:[%s3 + $0x60] sm:$0xf]
  %v3051 = vld [vmem:[%s3 + $0x64] sm:$0xf]
  %v3052 = vld [vmem:[%s3 + $0x68] sm:$0xf]
  %v3053 = vld [vmem:[%s3 + $0x6c] sm:$0xf]
  %v3054 = vld [vmem:[%s3 + $0x70] sm:$0xf]
  %v3055 = vld [vmem:[%s3 + $0x74] sm:$0xf]
  %v3056 = vld [vmem:[%s3 + $0x78] sm:$0xf]
  %v3057 = vld [vmem:[%s3 + $0x7c] sm:$0xf]
  %v3058 = vld [vmem:[%s4] sm:$0x1]
  %v3060 = vlaneseq
  %v3061 = vshrl.u32 %v3060, 7
  %v3062 = vsub.s32 0, %v3061
  %v3063 = vrot.slane %v3058, %v3062
  %v3097 = vunpack.c.l.b16 %v3026
  %v3098 = vunpack.c.l.b16 %v3027
  %v3099 = vunpack.c.l.b16 %v3028
  %v3100 = vunpack.c.l.b16 %v3029
  %v3101 = vunpack.c.l.b16 %v3030
  %v3102 = vunpack.c.l.b16 %v3031
  %v3103 = vunpack.c.l.b16 %v3032
  %v3104 = vunpack.c.l.b16 %v3033
  %v3105 = vunpack.c.l.b16 %v3034
  %v3106 = vunpack.c.l.b16 %v3035
  %v3107 = vunpack.c.l.b16 %v3036
  %v3108 = vunpack.c.l.b16 %v3037
  %v3109 = vunpack.c.l.b16 %v3038
  %v3110 = vunpack.c.l.b16 %v3039
  %v3111 = vunpack.c.l.b16 %v3040
  %v3112 = vunpack.c.l.b16 %v3041
  %v3113 = vunpack.c.l.b16 %v3042
  %v3114 = vunpack.c.l.b16 %v3043
  %v3115 = vunpack.c.l.b16 %v3044
  %v3116 = vunpack.c.l.b16 %v3045
  %v3117 = vunpack.c.l.b16 %v3046
  %v3118 = vunpack.c.l.b16 %v3047
  %v3119 = vunpack.c.l.b16 %v3048
  %v3120 = vunpack.c.l.b16 %v3049
  %v3121 = vunpack.c.l.b16 %v3050
  %v3122 = vunpack.c.l.b16 %v3051
  %v3123 = vunpack.c.l.b16 %v3052
  %v3124 = vunpack.c.l.b16 %v3053
  %v3125 = vunpack.c.l.b16 %v3054
  %v3126 = vunpack.c.l.b16 %v3055
  %v3127 = vunpack.c.l.b16 %v3056
  %v3128 = vunpack.c.l.b16 %v3057
  %v3129 = vpack.c.b16 %v3098, %v3097
  %v3130 = vpack.c.b16 %v3100, %v3099
  %v3131 = vpack.c.b16 %v3102, %v3101
  %v3132 = vpack.c.b16 %v3104, %v3103
  %v3133 = vpack.c.b16 %v3106, %v3105
  %v3134 = vpack.c.b16 %v3108, %v3107
  %v3135 = vpack.c.b16 %v3110, %v3109
  %v3136 = vpack.c.b16 %v3112, %v3111
  %v3137 = vpack.c.b16 %v3114, %v3113
  %v3138 = vpack.c.b16 %v3116, %v3115
  %v3139 = vpack.c.b16 %v3118, %v3117
  %v3140 = vpack.c.b16 %v3120, %v3119
  %v3141 = vpack.c.b16 %v3122, %v3121
  %v3142 = vpack.c.b16 %v3124, %v3123
  %v3143 = vpack.c.b16 %v3126, %v3125
  %v3144 = vpack.c.b16 %v3128, %v3127
  %3161 = vmatprep.subr.bf16.mxu0 0
  %3162 = vmatpush1.bf16.msra.mxu0 %v3136
  %3163 = vmatprep.subr.bf16.mxu0 0
  %3164 = vmatpush1.bf16.msra.mxu0 %v3135
  %3165 = vmatprep.subr.bf16.mxu0 0
  %3166 = vmatpush1.bf16.msra.mxu0 %v3134
  %3167 = vmatprep.subr.bf16.mxu0 0
  %3168 = vmatpush1.bf16.msra.mxu0 %v3133
  %3169 = vmatprep.subr.bf16.mxu0 0
  %3170 = vmatpush1.bf16.msra.mxu0 %v3132
  %3171 = vmatprep.subr.bf16.mxu0 0
  %3172 = vmatpush1.bf16.msra.mxu0 %v3131
  %3173 = vmatprep.subr.bf16.mxu0 0
  %3174 = vmatpush1.bf16.msra.mxu0 %v3130
  %3175 = vmatprep.subr.bf16.mxu0 0
  %3176 = vmatpush1.bf16.msra.mxu0 %v3129
  %3177 = vmatprep.subr.bf16.mxu0 0
  %3178 = vmatpush2.bf16.msra.mxu0 %v3144
  %3179 = vmatprep.subr.bf16.mxu0 0
  %3180 = vmatpush2.bf16.msra.mxu0 %v3143
  %3181 = vmatprep.subr.bf16.mxu0 0
  %3182 = vmatpush2.bf16.msra.mxu0 %v3142
  %3183 = vmatprep.subr.bf16.mxu0 0
  %3184 = vmatpush2.bf16.msra.mxu0 %v3141
  %3185 = vmatprep.subr.bf16.mxu0 0
  %3186 = vmatpush2.bf16.msra.mxu0 %v3140
  %3187 = vmatprep.subr.bf16.mxu0 0
  %3188 = vmatpush2.bf16.msra.mxu0 %v3139
  %3189 = vmatprep.subr.bf16.mxu0 0
  %3190 = vmatpush2.bf16.msra.mxu0 %v3138
  %3191 = vmatprep.subr.bf16.mxu0 0
  %3192 = vmatpush2.bf16.msra.mxu0 %v3137
  %3193 = vmatprep.mubr.bf16.mxu0 %v3025
  %3194 = vmatmul.mubr.bf16.gmra.mxu0 %v3024
  %v3195 = vpop.f32.mrf.mxu0
  %v3196 = vadd.f32 %v3063, %v3195
  %v3197 = vpop.f32.mrf.mxu0
  %v3198 = vpop.f32.mrf.mxu0
  %v3199 = vpop.f32.mrf.mxu0
  %3200 = vdwg.mxu0
  %3201 = vst [vmem:[%s5] sm:$0xff] %v3196
  // Predicated region
  $region22: #{car_model_forward.5} parent=0 // pred_check
    _
  $region23: #{car_model_forward.5} parent=0 // pred_check_branch
    %3203 = sbr.rel (0) target = $region25
  $region24: #{car_model_forward.5} parent=0 // pred_region
    _
  $region25: #{car_model_forward.5} parent=0 // pred_fallthru
    _
  // Predicated region
  $region26: #{car_model_forward.5} parent=0 // pred_check
    _
  $region27: #{car_model_forward.5} parent=0 // pred_check_branch
    %3205 = sbr.rel (0) target = $region29
  $region28: #{car_model_forward.5} parent=0 // pred_region
    _
  $region29: #{car_model_forward.5} parent=0 // pred_fallthru
    _

</llo_original>
